<compile_context>
chip_gen: v6e
topology: v6e:2x2x1
jax: 0.10.0
libtpu: 0.0.40
codegen_flags: <defaults>
</compile_context>

<pallas_src>
import functools

import jax
import jax.numpy as jnp
from jax import lax
from jax.experimental import pallas as pl
from jax.experimental.pallas import tpu as pltpu

NUM_GROUPS = 32
GN_EPS = 1e-5
_NEG_BIG = -1e30          # finite "-inf" for masked logits (avoids inf-inf NaNs)
_LANE = 128


def _round_up(x, m):
    return (x + m - 1) // m * m


def _pick_tile(hw_pad, cap):
    """Largest lane tile <= cap dividing hw_pad (hw_pad is a multiple of 128)."""
    for t in (1024, 512, 256, 128):
        if t <= cap and hw_pad % t == 0:
            return t
    return hw_pad


def _vmem_limit(estimate_bytes):
    # generous headroom over the tile-derived estimate, bounded to sane values
    return min(max(int(1.5 * estimate_bytes) + (4 << 20), 24 << 20), 100 << 20)


# ---------------------------------------------------------------------------
# Kernel 1: flash-style affinity pooling + GroupNorm partial sums
# ---------------------------------------------------------------------------
def _flash_pool_kernel(hand_ref, u_ref, wh_ref, bh_ref, wu_ref, bu_ref,
                       o_ref, csum_ref, csqs_ref,
                       hh_sc, m_sc, l_sc, acc_sc,
                       *, hw, tq, tk, compute_dtype):
    q = pl.program_id(1)
    k = pl.program_id(2)
    nk = pl.num_programs(2)

    # ---- init per query tile: 1x1 conv of the query slab + softmax state ----
    @pl.when(k == 0)
    def _():
        hand_q = hand_ref[0].astype(compute_dtype)                  # (C, TQ)
        hh = jnp.dot(wh_ref[...], hand_q,
                     preferred_element_type=jnp.float32) + bh_ref[...]
        hh_sc[...] = hh.T.astype(compute_dtype)                     # (TQ, C)
        m_sc[...] = jnp.full_like(m_sc, _NEG_BIG)
        l_sc[...] = jnp.zeros_like(l_sc)
        acc_sc[...] = jnp.zeros_like(acc_sc)

    # ---- per key tile: 1x1 conv, affinity logits, online-softmax update ----
    u_k = u_ref[0].astype(compute_dtype)                            # (C, TK)
    uh = (jnp.dot(wu_ref[...], u_k, preferred_element_type=jnp.float32)
          + bu_ref[...]).astype(compute_dtype)                      # (C, TK)

    # s[i, j] = <W_H Hand[:, i], W_U U[:, j]>                       # (TQ, TK)
    s = jnp.dot(hh_sc[...], uh, preferred_element_type=jnp.float32)
    if hw % tk:                                                     # static guard
        key_idx = k * tk + lax.broadcasted_iota(jnp.int32, (1, tk), 1)
        s = jnp.where(key_idx < hw, s, _NEG_BIG)

    m_prev = m_sc[...]                                              # (TQ, 1)
    m_new = jnp.maximum(m_prev, jnp.max(s, axis=1, keepdims=True))
    alpha = jnp.exp(m_prev - m_new)                                 # (TQ, 1)
    p = jnp.exp(s - m_new)                                          # (TQ, TK)
    l_sc[...] = alpha * l_sc[...] + jnp.sum(p, axis=1, keepdims=True)
    pv = lax.dot_general(p.astype(compute_dtype), u_k,
                         (((1,), (1,)), ((), ())),
                         preferred_element_type=jnp.float32)        # (TQ, C)
    acc_sc[...] = alpha * acc_sc[...] + pv
    m_sc[...] = m_new

    # ---- finalize: normalize, mask padded queries, emit GN partial sums ----
    @pl.when(k == nk - 1)
    def _():
        o_t = acc_sc[...] * pl.reciprocal(l_sc[...], approx=True)   # (TQ, C)
        if hw % tq:                                                 # static guard
            q_idx = q * tq + lax.broadcasted_iota(jnp.int32, (tq, 1), 0)
            o_t = jnp.where(q_idx < hw, o_t, 0.0)
        csum_ref[0, 0] = jnp.sum(o_t, axis=0, keepdims=True)        # (1, C)
        csqs_ref[0, 0] = jnp.sum(o_t * o_t, axis=0, keepdims=True)  # (1, C)
        o_ref[0] = o_t.T.astype(o_ref.dtype)                        # (C, TQ)


# ---------------------------------------------------------------------------
# Kernel 2: GroupNorm affine + residual (elementwise, lane-dense stores)
# ---------------------------------------------------------------------------
def _gn_residual_kernel(o_ref, hand_ref, scale_ref, shift_ref, out_ref):
    out_ref[0] = (o_ref[0] * scale_ref[0] + shift_ref[0]
                  + hand_ref[0]).astype(out_ref.dtype)


# ---------------------------------------------------------------------------
# Wrapper
# ---------------------------------------------------------------------------
@functools.partial(jax.jit, static_argnames=("matmul_dtype",))
def cross_feature_affinity_pooling(hand, u, params, *, matmul_dtype=jnp.bfloat16):
    """hand, u: (B, C, H, W) float32.  Returns (B, C, H, W)."""
    B, C, H, W = hand.shape
    assert C % NUM_GROUPS == 0, "GroupNorm(32, C) requires C % 32 == 0"
    gs = C // NUM_GROUPS
    HW = H * W
    HWp = _round_up(HW, _LANE)

    # NCHW -> (B, C, HW): pure reshape, no transpose / extra HBM pass.
    hand2 = hand.reshape(B, C, HW)
    u2 = u.reshape(B, C, HW)
    if HWp != HW:
        pad = ((0, 0), (0, 0), (0, HWp - HW))
        hand2 = jnp.pad(hand2, pad)
        u2 = jnp.pad(u2, pad)

    tq = _pick_tile(HWp, 512)
    tk = _pick_tile(HWp, 512)
    nq = HWp // tq
    nk = HWp // tk

    wh = params["wh"].reshape(C, C).astype(matmul_dtype)
    wu = params["wu"].reshape(C, C).astype(matmul_dtype)
    bh = params["bh"].reshape(C, 1).astype(jnp.float32)
    bu = params["bu"].reshape(C, 1).astype(jnp.float32)

    cdb = jnp.dtype(matmul_dtype).itemsize
    f32b = 4
    est1 = (2 * C * tq * f32b            # hand tiles (double-buffered)
            + 2 * C * tk * f32b          # u tiles (double-buffered)
            + 2 * 2 * C * C * cdb        # W_H / W_U (constant blocks)
            + 2 * C * tq * f32b          # pooled-output tiles
            + C * tq * (cdb + f32b)      # hh / acc scratch
            + 4 * tq * tk * f32b         # logits / probs temporaries
            + 2 * C * tk * (f32b + cdb)  # uh temporaries
            + 4 * tq * _LANE * f32b)     # m / l scratch (lane-padded)

    kernel = functools.partial(_flash_pool_kernel, hw=HW, tq=tq, tk=tk,
                               compute_dtype=matmul_dtype)
    # Constant operands: their block index never changes, so the pipeline only
    # DMAs them once.  (pl.Buffered(1) would also drop the second buffer; kept
    # default-buffered for lowering safety and budgeted as such in est1.)
    const = lambda shape: pl.BlockSpec(shape, lambda b, q, k: (0,) * len(shape))

    o, csum, csqs = pl.pallas_call(
        kernel,
        out_shape=(
            jax.ShapeDtypeStruct((B, C, HWp), jnp.float32),
            jax.ShapeDtypeStruct((B, nq, 1, C), jnp.float32),
            jax.ShapeDtypeStruct((B, nq, 1, C), jnp.float32),
        ),
        grid=(B, nq, nk),
        in_specs=[
            pl.BlockSpec((1, C, tq), lambda b, q, k: (b, 0, q)),    # Hand (queries)
            pl.BlockSpec((1, C, tk), lambda b, q, k: (b, 0, k)),    # U (keys/values)
            const((C, C)),                                          # W_H
            const((C, 1)),                                          # b_H
            const((C, C)),                                          # W_U
            const((C, 1)),                                          # b_U
        ],
        out_specs=(
            pl.BlockSpec((1, C, tq), lambda b, q, k: (b, 0, q)),        # pooled
            pl.BlockSpec((1, 1, 1, C), lambda b, q, k: (b, q, 0, 0)),   # GN sum
            pl.BlockSpec((1, 1, 1, C), lambda b, q, k: (b, q, 0, 0)),   # GN sumsq
        ),
        scratch_shapes=[
            pltpu.VMEM((tq, C), matmul_dtype),   # W_H Hand for current q tile
            pltpu.VMEM((tq, 1), jnp.float32),    # running max
            pltpu.VMEM((tq, 1), jnp.float32),    # running denominator
            pltpu.VMEM((tq, C), jnp.float32),    # running numerator
        ],
        compiler_params=pltpu.CompilerParams(
            dimension_semantics=("parallel", "parallel", "arbitrary"),
            vmem_limit_bytes=_vmem_limit(est1)),
    )(hand2, u2, wh, bh, wu, bu)

    # ---- GroupNorm statistics: tiny O(B*C) finalization in plain JAX ----
    ch_sum = csum[:, :, 0, :].sum(axis=1)                          # (B, C)
    ch_sqs = csqs[:, :, 0, :].sum(axis=1)                          # (B, C)
    g_sum = ch_sum.reshape(B, NUM_GROUPS, gs).sum(-1)              # (B, G)
    g_sqs = ch_sqs.reshape(B, NUM_GROUPS, gs).sum(-1)              # (B, G)
    cnt = jnp.float32(HW * gs)
    mean = g_sum / cnt
    var = jnp.maximum(g_sqs / cnt - mean * mean, 0.0)
    inv = lax.rsqrt(var + GN_EPS)
    gamma = params["gn_weight"].reshape(1, C).astype(jnp.float32)
    beta = params["gn_bias"].reshape(1, C).astype(jnp.float32)
    inv_c = jnp.repeat(inv, gs, axis=1)                            # (B, C)
    mean_c = jnp.repeat(mean, gs, axis=1)                          # (B, C)
    scale = (gamma * inv_c)[:, :, None]                            # (B, C, 1)
    shift = (beta - gamma * inv_c * mean_c)[:, :, None]            # (B, C, 1)

    # ---- Kernel 2: apply GroupNorm affine + residual ----
    t2 = _pick_tile(HWp, 1024)
    nt = HWp // t2
    est2 = 6 * C * t2 * f32b + 8 * C * _LANE * f32b
    out_dtype = hand.dtype
    io_alias = {0: 0} if jnp.dtype(out_dtype) == jnp.dtype(jnp.float32) else {}
    out2 = pl.pallas_call(
        _gn_residual_kernel,
        out_shape=jax.ShapeDtypeStruct((B, C, HWp), out_dtype),
        grid=(B, nt),
        in_specs=[
            pl.BlockSpec((1, C, t2), lambda b, t: (b, 0, t)),      # pooled
            pl.BlockSpec((1, C, t2), lambda b, t: (b, 0, t)),      # residual (Hand)
            pl.BlockSpec((1, C, 1), lambda b, t: (b, 0, 0)),       # per-channel scale
            pl.BlockSpec((1, C, 1), lambda b, t: (b, 0, 0)),       # per-channel shift
        ],
        out_specs=pl.BlockSpec((1, C, t2), lambda b, t: (b, 0, t)),
        input_output_aliases=io_alias,        # write result over the pooled buffer
        compiler_params=pltpu.CompilerParams(
            dimension_semantics=("parallel", "parallel"),
            vmem_limit_bytes=_vmem_limit(est2)),
    )(o, hand2, scale, shift)

    if HWp != HW:
        out2 = out2[:, :, :HW]
    return out2.reshape(B, C, H, W)


# ---------------------------------------------------------------------------
# Pure-JAX reference (module-faithful, f32 / highest matmul precision)
# ---------------------------------------------------------------------------
def reference(hand, u, params):
    B, C, H, W = hand.shape
    HW = H * W
    hp = lax.Precision.HIGHEST
    wh = params["wh"].reshape(C, C)
    wu = params["wu"].reshape(C, C)
    hand_f = hand.reshape(B, C, HW)
    u_f = u.reshape(B, C, HW)
    hh = jnp.einsum("oc,bcn->bon", wh, hand_f, precision=hp) \
        + params["bh"].reshape(1, C, 1)
    uh = jnp.einsum("oc,bcn->bon", wu, u_f, precision=hp) \
        + params["bu"].reshape(1, C, 1)
    A = jnp.einsum("bci,bcj->bij", hh, uh, precision=hp)
    A = jax.nn.softmax(A, axis=-1)
    o = jnp.einsum("bij,bcj->bci", A, u_f, precision=hp)           # (B, C, HW)
    g = NUM_GROUPS
    x = o.reshape(B, g, (C // g) * HW)
    mean = x.mean(-1, keepdims=True)
    var = x.var(-1, keepdims=True)
    xn = ((x - mean) / jnp.sqrt(var + GN_EPS)).reshape(B, C, HW)
    out = (xn * params["gn_weight"].reshape(1, C, 1)
           + params["gn_bias"].reshape(1, C, 1) + hand_f)
    return out.reshape(B, C, H, W)


def make_params(key, C, zero_gn=True):
    k1, k2, k3, k4, k5, k6 = jax.random.split(key, 6)
    params = {
        "wh": 0.1 * jax.random.normal(k1, (C, C, 1, 1), jnp.float32),
        "bh": 0.1 * jax.random.normal(k2, (C,), jnp.float32),
        "wu": 0.1 * jax.random.normal(k3, (C, C, 1, 1), jnp.float32),
        "bu": 0.1 * jax.random.normal(k4, (C,), jnp.float32),
    }
    if zero_gn:
        # Matches nn.init.constant_(bn_layer.weight/bias, 0) in the module.
        params["gn_weight"] = jnp.zeros((C,), jnp.float32)
        params["gn_bias"] = jnp.zeros((C,), jnp.float32)
    else:
        params["gn_weight"] = 1.0 + 0.1 * jax.random.normal(k5, (C,), jnp.float32)
        params["gn_bias"] = 0.1 * jax.random.normal(k6, (C,), jnp.float32)
    return params


if __name__ == "__main__":
    key = jax.random.PRNGKey(0)
    kx, ky, kp = jax.random.split(key, 3)

    # HW = 576 -> padded to 640 -> 5 query x 5 key tiles of 128: exercises the
    # multi-tile online softmax and the padded-tail masking paths.
    B, C, H, W = 2, 64, 24, 24
    hand = jax.random.normal(kx, (B, C, H, W), jnp.float32)
    u = jax.random.normal(ky, (B, C, H, W), jnp.float32)

    # 1) Module-faithful params (GroupNorm affine zero-initialized), default
    #    bf16 matmul config: output must equal Hand (GN branch is zero).
    params0 = make_params(kp, C, zero_gn=True)
    out0 = jax.block_until_ready(cross_feature_affinity_pooling(hand, u, params0))
    assert out0.shape == (B, C, H, W) and out0.dtype == jnp.float32
    ref0 = reference(hand, u, params0)
    assert jnp.allclose(out0, ref0, atol=1e-5, rtol=1e-5), \
        float(jnp.max(jnp.abs(out0 - ref0)))

    # 2) Non-zero GN affine, f32 MXU operands: tight element-wise check of the
    #    flash tiling / masking / online softmax / GroupNorm math.
    params1 = make_params(kp, C, zero_gn=False)
    ref1 = reference(hand, u, params1)
    out_f32 = jax.block_until_ready(
        cross_feature_affinity_pooling(hand, u, params1,
                                       matmul_dtype=jnp.float32))
    assert jnp.allclose(out_f32, ref1, atol=2e-2, rtol=2e-2), \
        float(jnp.max(jnp.abs(out_f32 - ref1)))

    # 3) Default perf config (bf16 MXU operands, f32 accumulation): GroupNorm
    #    rescales the bf16 matmul noise to ~1e-2 per element, so validate with
    #    a norm-based check.
    out_bf16 = jax.block_until_ready(
        cross_feature_affinity_pooling(hand, u, params1))
    rel = jnp.linalg.norm(out_bf16 - ref1) / jnp.linalg.norm(ref1)
    assert float(rel) < 5e-2, float(rel)

    print("KERNEL_OK")
</pallas_src>

<mosaic_0001>
module attributes {stable_mosaic.version = 11 : i64} {
  func.func @_flash_pool_kernel(%arg0: i32, %arg1: i32, %arg2: i32, %arg3: memref<1x64x128xf32, #tpu.memory_space<vmem>>, %arg4: memref<1x64x128xf32, #tpu.memory_space<vmem>>, %arg5: memref<64x64xbf16, #tpu.memory_space<vmem>>, %arg6: memref<64x1xf32, #tpu.memory_space<vmem>>, %arg7: memref<64x64xbf16, #tpu.memory_space<vmem>>, %arg8: memref<64x1xf32, #tpu.memory_space<vmem>>, %arg9: memref<1x64x128xf32, #tpu.memory_space<vmem>>, %arg10: memref<1x1x1x64xf32, #tpu.memory_space<vmem>>, %arg11: memref<1x1x1x64xf32, #tpu.memory_space<vmem>>, %arg12: memref<128x64xbf16, #tpu.memory_space<vmem>>, %arg13: memref<128x1xf32, #tpu.memory_space<vmem>>, %arg14: memref<128x1xf32, #tpu.memory_space<vmem>>, %arg15: memref<128x64xf32, #tpu.memory_space<vmem>>) attributes {dimension_semantics = [#tpu.dimension_semantics<parallel>, #tpu.dimension_semantics<parallel>, #tpu.dimension_semantics<arbitrary>], iteration_bounds = array<i64: 2, 5, 5>, scalar_prefetch = 0 : i64, scratch_operands = 4 : i64, tpu.core_type = #tpu.core_type<tc>, window_params = [{transform_indices = @transform_0, window_bounds = array<i64: 1, 64, 128>}, {transform_indices = @transform_1, window_bounds = array<i64: 1, 64, 128>}, {pipeline_mode = #tpu.pipeline_mode<synchronous>, transform_indices = @transform_2, window_bounds = array<i64: 64, 64>}, {pipeline_mode = #tpu.pipeline_mode<synchronous>, transform_indices = @transform_3, window_bounds = array<i64: 64, 1>}, {pipeline_mode = #tpu.pipeline_mode<synchronous>, transform_indices = @transform_4, window_bounds = array<i64: 64, 64>}, {pipeline_mode = #tpu.pipeline_mode<synchronous>, transform_indices = @transform_5, window_bounds = array<i64: 64, 1>}, {transform_indices = @transform_6, window_bounds = array<i64: 1, 64, 128>}, {transform_indices = @transform_7, window_bounds = array<i64: 1, 1, 1, 64>}, {transform_indices = @transform_8, window_bounds = array<i64: 1, 1, 1, 64>}]} {
    %c0_i32 = arith.constant 0 : i32
    %0 = arith.cmpi eq, %arg2, %c0_i32 : i32
    %1 = arith.extui %0 : i1 to i32
    %c0_i32_0 = arith.constant 0 : i32
    %2 = arith.cmpi ne, %1, %c0_i32_0 : i32
    scf.if %2 {
      %c0_27 = arith.constant 0 : index
      %c0_28 = arith.constant 0 : index
      %c0_29 = arith.constant 0 : index
      %50 = vector.load %arg3[%c0_27, %c0_28, %c0_29] : memref<1x64x128xf32, #tpu.memory_space<vmem>>, vector<1x64x128xf32>
      %51 = vector.shape_cast %50 : vector<1x64x128xf32> to vector<64x128xf32>
      %52 = arith.truncf %51 : vector<64x128xf32> to vector<64x128xbf16>
      %c0_30 = arith.constant 0 : index
      %c0_31 = arith.constant 0 : index
      %53 = vector.load %arg5[%c0_30, %c0_31] : memref<64x64xbf16, #tpu.memory_space<vmem>>, vector<64x64xbf16>
      %cst_32 = arith.constant dense<0.000000e+00> : vector<64x128xf32>
      %54 = tpu.matmul %53, %52, %cst_32 {dimension_numbers = #tpu.dot_dimension_numbers<[1], [0], [0], [1], [0, 0, 1, 1], [], []>} : vector<64x64xbf16>, vector<64x128xbf16>, vector<64x128xf32> -> vector<64x128xf32>
      %c0_33 = arith.constant 0 : index
      %c0_34 = arith.constant 0 : index
      %55 = vector.load %arg6[%c0_33, %c0_34] : memref<64x1xf32, #tpu.memory_space<vmem>>, vector<64x1xf32>
      %56 = vector.broadcast %55 : vector<64x1xf32> to vector<64x128xf32>
      %57 = arith.addf %54, %56 : vector<64x128xf32>
      %58 = tpu.transpose %57, [1, 0] : vector<64x128xf32> -> vector<128x64xf32>
      %59 = arith.truncf %58 : vector<128x64xf32> to vector<128x64xbf16>
      %c0_35 = arith.constant 0 : index
      %c0_36 = arith.constant 0 : index
      %60 = vector.load %arg12[%c0_35, %c0_36] : memref<128x64xbf16, #tpu.memory_space<vmem>>, vector<128x64xbf16>
      tpu.vector_store %arg12[%c0_35, %c0_36], %59 {strides = array<i32>} : memref<128x64xbf16, #tpu.memory_space<vmem>>, vector<128x64xbf16>,
      %cst_37 = arith.constant -1.000000e+30 : f32
      %61 = vector.broadcast %cst_37 : f32 to vector<128x1xf32>
      %c0_38 = arith.constant 0 : index
      %c0_39 = arith.constant 0 : index
      %62 = vector.load %arg13[%c0_38, %c0_39] : memref<128x1xf32, #tpu.memory_space<vmem>>, vector<128x1xf32>
      tpu.vector_store %arg13[%c0_38, %c0_39], %61 {strides = array<i32>} : memref<128x1xf32, #tpu.memory_space<vmem>>, vector<128x1xf32>,
      %cst_40 = arith.constant 0.000000e+00 : f32
      %63 = vector.broadcast %cst_40 : f32 to vector<128x1xf32>
      %c0_41 = arith.constant 0 : index
      %c0_42 = arith.constant 0 : index
      %64 = vector.load %arg14[%c0_41, %c0_42] : memref<128x1xf32, #tpu.memory_space<vmem>>, vector<128x1xf32>
      tpu.vector_store %arg14[%c0_41, %c0_42], %63 {strides = array<i32>} : memref<128x1xf32, #tpu.memory_space<vmem>>, vector<128x1xf32>,
      %cst_43 = arith.constant 0.000000e+00 : f32
      %65 = vector.broadcast %cst_43 : f32 to vector<128x64xf32>
      %c0_44 = arith.constant 0 : index
      %c0_45 = arith.constant 0 : index
      %66 = vector.load %arg15[%c0_44, %c0_45] : memref<128x64xf32, #tpu.memory_space<vmem>>, vector<128x64xf32>
      tpu.vector_store %arg15[%c0_44, %c0_45], %65 {strides = array<i32>} : memref<128x64xf32, #tpu.memory_space<vmem>>, vector<128x64xf32>,
    } else {
    }
    %c0 = arith.constant 0 : index
    %c0_1 = arith.constant 0 : index
    %c0_2 = arith.constant 0 : index
    %3 = vector.load %arg4[%c0, %c0_1, %c0_2] : memref<1x64x128xf32, #tpu.memory_space<vmem>>, vector<1x64x128xf32>
    %4 = vector.shape_cast %3 : vector<1x64x128xf32> to vector<64x128xf32>
    %5 = arith.truncf %4 : vector<64x128xf32> to vector<64x128xbf16>
    %c0_3 = arith.constant 0 : index
    %c0_4 = arith.constant 0 : index
    %6 = vector.load %arg7[%c0_3, %c0_4] : memref<64x64xbf16, #tpu.memory_space<vmem>>, vector<64x64xbf16>
    %cst = arith.constant dense<0.000000e+00> : vector<64x128xf32>
    %7 = tpu.matmul %6, %5, %cst {dimension_numbers = #tpu.dot_dimension_numbers<[1], [0], [0], [1], [0, 0, 1, 1], [], []>} : vector<64x64xbf16>, vector<64x128xbf16>, vector<64x128xf32> -> vector<64x128xf32>
    %c0_5 = arith.constant 0 : index
    %c0_6 = arith.constant 0 : index
    %8 = vector.load %arg8[%c0_5, %c0_6] : memref<64x1xf32, #tpu.memory_space<vmem>>, vector<64x1xf32>
    %9 = vector.broadcast %8 : vector<64x1xf32> to vector<64x128xf32>
    %10 = arith.addf %7, %9 : vector<64x128xf32>
    %11 = arith.truncf %10 : vector<64x128xf32> to vector<64x128xbf16>
    %c0_7 = arith.constant 0 : index
    %c0_8 = arith.constant 0 : index
    %12 = vector.load %arg12[%c0_7, %c0_8] : memref<128x64xbf16, #tpu.memory_space<vmem>>, vector<128x64xbf16>
    %cst_9 = arith.constant dense<0.000000e+00> : vector<128x128xf32>
    %13 = tpu.matmul %12, %11, %cst_9 {dimension_numbers = #tpu.dot_dimension_numbers<[1], [0], [0], [1], [0, 0, 1, 1], [], []>} : vector<128x64xbf16>, vector<64x128xbf16>, vector<128x128xf32> -> vector<128x128xf32>
    %c128_i32 = arith.constant 128 : i32
    %14 = arith.muli %arg2, %c128_i32 : i32
    %15 = tpu.iota {dimensions = array<i32: 1>} : vector<1x128xi32>
    %16 = vector.broadcast %14 : i32 to vector<1x128xi32>
    %17 = arith.addi %16, %15 : vector<1x128xi32>
    %c576_i32 = arith.constant 576 : i32
    %18 = vector.broadcast %c576_i32 : i32 to vector<1x128xi32>
    %19 = arith.cmpi slt, %17, %18 : vector<1x128xi32>
    %cst_10 = arith.constant -1.000000e+30 : f32
    %20 = vector.shape_cast %19 : vector<1x128xi1> to vector<1x128xi1>
    %21 = vector.broadcast %20 : vector<1x128xi1> to vector<128x128xi1>
    %22 = vector.broadcast %cst_10 : f32 to vector<128x128xf32>
    %23 = arith.select %21, %13, %22 : vector<128x128xi1>, vector<128x128xf32>
    %c0_11 = arith.constant 0 : index
    %c0_12 = arith.constant 0 : index
    %24 = vector.load %arg13[%c0_11, %c0_12] : memref<128x1xf32, #tpu.memory_space<vmem>>, vector<128x1xf32>
    %cst_13 = arith.constant dense<0xFF800000> : vector<128xf32>
    %25 = vector.multi_reduction <maximumf>, %23, %cst_13 [1] : vector<128x128xf32> to vector<128xf32>
    %26 = vector.shape_cast %25 : vector<128xf32> to vector<128x1xf32>
    %27 = arith.maximumf %24, %26 : vector<128x1xf32>
    %28 = arith.subf %24, %27 : vector<128x1xf32>
    %29 = math.exp %28 : vector<128x1xf32>
    %30 = vector.broadcast %27 : vector<128x1xf32> to vector<128x128xf32>
    %31 = arith.subf %23, %30 : vector<128x128xf32>
    %32 = math.exp %31 : vector<128x128xf32>
    %c0_14 = arith.constant 0 : index
    %c0_15 = arith.constant 0 : index
    %33 = vector.load %arg14[%c0_14, %c0_15] : memref<128x1xf32, #tpu.memory_space<vmem>>, vector<128x1xf32>
    %34 = arith.mulf %29, %33 : vector<128x1xf32>
    %cst_16 = arith.constant dense<0.000000e+00> : vector<128xf32>
    %35 = vector.multi_reduction <add>, %32, %cst_16 [1] : vector<128x128xf32> to vector<128xf32>
    %36 = vector.shape_cast %35 : vector<128xf32> to vector<128x1xf32>
    %37 = arith.addf %34, %36 : vector<128x1xf32>
    %c0_17 = arith.constant 0 : index
    %c0_18 = arith.constant 0 : index
    %38 = vector.load %arg14[%c0_17, %c0_18] : memref<128x1xf32, #tpu.memory_space<vmem>>, vector<128x1xf32>
    tpu.vector_store %arg14[%c0_17, %c0_18], %37 {strides = array<i32>} : memref<128x1xf32, #tpu.memory_space<vmem>>, vector<128x1xf32>,
    %39 = arith.truncf %32 : vector<128x128xf32> to vector<128x128xbf16>
    %cst_19 = arith.constant dense<0.000000e+00> : vector<128x64xf32>
    %40 = tpu.matmul %39, %5, %cst_19 {dimension_numbers = #tpu.dot_dimension_numbers<[1], [1], [0], [0], [0, 0, 1, 0], [], []>} : vector<128x128xbf16>, vector<64x128xbf16>, vector<128x64xf32> -> vector<128x64xf32>
    %c0_20 = arith.constant 0 : index
    %c0_21 = arith.constant 0 : index
    %41 = vector.load %arg15[%c0_20, %c0_21] : memref<128x64xf32, #tpu.memory_space<vmem>>, vector<128x64xf32>
    %42 = vector.broadcast %29 : vector<128x1xf32> to vector<128x64xf32>
    %43 = arith.mulf %42, %41 : vector<128x64xf32>
    %44 = arith.addf %43, %40 : vector<128x64xf32>
    %c0_22 = arith.constant 0 : index
    %c0_23 = arith.constant 0 : index
    %45 = vector.load %arg15[%c0_22, %c0_23] : memref<128x64xf32, #tpu.memory_space<vmem>>, vector<128x64xf32>
    tpu.vector_store %arg15[%c0_22, %c0_23], %44 {strides = array<i32>} : memref<128x64xf32, #tpu.memory_space<vmem>>, vector<128x64xf32>,
    %c0_24 = arith.constant 0 : index
    %c0_25 = arith.constant 0 : index
    %46 = vector.load %arg13[%c0_24, %c0_25] : memref<128x1xf32, #tpu.memory_space<vmem>>, vector<128x1xf32>
    tpu.vector_store %arg13[%c0_24, %c0_25], %27 {strides = array<i32>} : memref<128x1xf32, #tpu.memory_space<vmem>>, vector<128x1xf32>,
    %c4_i32 = arith.constant 4 : i32
    %47 = arith.cmpi eq, %arg2, %c4_i32 : i32
    %48 = arith.extui %47 : i1 to i32
    %c0_i32_26 = arith.constant 0 : i32
    %49 = arith.cmpi ne, %48, %c0_i32_26 : i32
    scf.if %49 {
      %c0_27 = arith.constant 0 : index
      %c0_28 = arith.constant 0 : index
      %50 = vector.load %arg15[%c0_27, %c0_28] : memref<128x64xf32, #tpu.memory_space<vmem>>, vector<128x64xf32>
      %c0_29 = arith.constant 0 : index
      %c0_30 = arith.constant 0 : index
      %51 = vector.load %arg14[%c0_29, %c0_30] : memref<128x1xf32, #tpu.memory_space<vmem>>, vector<128x1xf32>
      %52 = tpu.reciprocal %51 {approx = true} : vector<128x1xf32> -> vector<128x1xf32>
      %53 = vector.broadcast %52 : vector<128x1xf32> to vector<128x64xf32>
      %54 = arith.mulf %50, %53 : vector<128x64xf32>
      %c128_i32_31 = arith.constant 128 : i32
      %55 = arith.muli %arg1, %c128_i32_31 : i32
      %56 = tpu.iota {dimensions = array<i32: 0>} : vector<128x1xi32>
      %57 = vector.broadcast %55 : i32 to vector<128x1xi32>
      %58 = arith.addi %57, %56 : vector<128x1xi32>
      %c576_i32_32 = arith.constant 576 : i32
      %59 = vector.broadcast %c576_i32_32 : i32 to vector<128x1xi32>
      %60 = arith.cmpi slt, %58, %59 : vector<128x1xi32>
      %cst_33 = arith.constant 0.000000e+00 : f32
      %61 = vector.shape_cast %60 : vector<128x1xi1> to vector<128x1xi1>
      %62 = vector.broadcast %61 : vector<128x1xi1> to vector<128x64xi1>
      %63 = vector.broadcast %cst_33 : f32 to vector<128x64xf32>
      %64 = arith.select %62, %54, %63 : vector<128x64xi1>, vector<128x64xf32>
      %cst_34 = arith.constant dense<0.000000e+00> : vector<64xf32>
      %65 = vector.multi_reduction <add>, %64, %cst_34 [0] : vector<128x64xf32> to vector<64xf32>
      %66 = vector.shape_cast %65 : vector<64xf32> to vector<1x64xf32>
      %c0_35 = arith.constant 0 : index
      %c0_36 = arith.constant 0 : index
      %c0_37 = arith.constant 0 : index
      %c0_38 = arith.constant 0 : index
      %67 = vector.load %arg10[%c0_35, %c0_36, %c0_37, %c0_38] : memref<1x1x1x64xf32, #tpu.memory_space<vmem>>, vector<1x1x1x64xf32>
      %68 = vector.shape_cast %67 : vector<1x1x1x64xf32> to vector<1x64xf32>
      %69 = vector.shape_cast %66 : vector<1x64xf32> to vector<1x1x1x64xf32>
      tpu.vector_store %arg10[%c0_35, %c0_36, %c0_37, %c0_38], %69 {strides = array<i32>} : memref<1x1x1x64xf32, #tpu.memory_space<vmem>>, vector<1x1x1x64xf32>,
      %70 = arith.mulf %64, %64 : vector<128x64xf32>
      %cst_39 = arith.constant dense<0.000000e+00> : vector<64xf32>
      %71 = vector.multi_reduction <add>, %70, %cst_39 [0] : vector<128x64xf32> to vector<64xf32>
      %72 = vector.shape_cast %71 : vector<64xf32> to vector<1x64xf32>
      %c0_40 = arith.constant 0 : index
      %c0_41 = arith.constant 0 : index
      %c0_42 = arith.constant 0 : index
      %c0_43 = arith.constant 0 : index
      %73 = vector.load %arg11[%c0_40, %c0_41, %c0_42, %c0_43] : memref<1x1x1x64xf32, #tpu.memory_space<vmem>>, vector<1x1x1x64xf32>
      %74 = vector.shape_cast %73 : vector<1x1x1x64xf32> to vector<1x64xf32>
      %75 = vector.shape_cast %72 : vector<1x64xf32> to vector<1x1x1x64xf32>
      tpu.vector_store %arg11[%c0_40, %c0_41, %c0_42, %c0_43], %75 {strides = array<i32>} : memref<1x1x1x64xf32, #tpu.memory_space<vmem>>, vector<1x1x1x64xf32>,
      %76 = tpu.transpose %64, [1, 0] : vector<128x64xf32> -> vector<64x128xf32>
      %c0_44 = arith.constant 0 : index
      %c0_45 = arith.constant 0 : index
      %c0_46 = arith.constant 0 : index
      %77 = vector.load %arg9[%c0_44, %c0_45, %c0_46] : memref<1x64x128xf32, #tpu.memory_space<vmem>>, vector<1x64x128xf32>
      %78 = vector.shape_cast %77 : vector<1x64x128xf32> to vector<64x128xf32>
      %79 = vector.shape_cast %76 : vector<64x128xf32> to vector<1x64x128xf32>
      tpu.vector_store %arg9[%c0_44, %c0_45, %c0_46], %79 {strides = array<i32>} : memref<1x64x128xf32, #tpu.memory_space<vmem>>, vector<1x64x128xf32>,
    } else {
    }
    return
  }
  func.func @transform_0(%arg0: i32, %arg1: i32, %arg2: i32) -> (i32, i32, i32) {
    %c0_i32 = arith.constant 0 : i32
    %c0_i32_0 = arith.constant 0 : i32
    return %arg0, %c0_i32, %arg1 : i32, i32, i32
  }
  func.func @transform_1(%arg0: i32, %arg1: i32, %arg2: i32) -> (i32, i32, i32) {
    %c0_i32 = arith.constant 0 : i32
    %c0_i32_0 = arith.constant 0 : i32
    return %arg0, %c0_i32, %arg2 : i32, i32, i32
  }
  func.func @transform_2(%arg0: i32, %arg1: i32, %arg2: i32) -> (i32, i32) {
    %c0_i32 = arith.constant 0 : i32
    %c0_i32_0 = arith.constant 0 : i32
    %c0_i32_1 = arith.constant 0 : i32
    return %c0_i32, %c0_i32_0 : i32, i32
  }
  func.func @transform_3(%arg0: i32, %arg1: i32, %arg2: i32) -> (i32, i32) {
    %c0_i32 = arith.constant 0 : i32
    %c0_i32_0 = arith.constant 0 : i32
    %c0_i32_1 = arith.constant 0 : i32
    return %c0_i32, %c0_i32_0 : i32, i32
  }
  func.func @transform_4(%arg0: i32, %arg1: i32, %arg2: i32) -> (i32, i32) {
    %c0_i32 = arith.constant 0 : i32
    %c0_i32_0 = arith.constant 0 : i32
    %c0_i32_1 = arith.constant 0 : i32
    return %c0_i32, %c0_i32_0 : i32, i32
  }
  func.func @transform_5(%arg0: i32, %arg1: i32, %arg2: i32) -> (i32, i32) {
    %c0_i32 = arith.constant 0 : i32
    %c0_i32_0 = arith.constant 0 : i32
    %c0_i32_1 = arith.constant 0 : i32
    return %c0_i32, %c0_i32_0 : i32, i32
  }
  func.func @transform_6(%arg0: i32, %arg1: i32, %arg2: i32) -> (i32, i32, i32) {
    %c0_i32 = arith.constant 0 : i32
    %c0_i32_0 = arith.constant 0 : i32
    return %arg0, %c0_i32, %arg1 : i32, i32, i32
  }
  func.func @transform_7(%arg0: i32, %arg1: i32, %arg2: i32) -> (i32, i32, i32, i32) {
    %c0_i32 = arith.constant 0 : i32
    %c0_i32_0 = arith.constant 0 : i32
    %c0_i32_1 = arith.constant 0 : i32
    return %arg0, %arg1, %c0_i32, %c0_i32_0 : i32, i32, i32, i32
  }
  func.func @transform_8(%arg0: i32, %arg1: i32, %arg2: i32) -> (i32, i32, i32, i32) {
    %c0_i32 = arith.constant 0 : i32
    %c0_i32_0 = arith.constant 0 : i32
    %c0_i32_1 = arith.constant 0 : i32
    return %arg0, %arg1, %c0_i32, %c0_i32_0 : i32, i32, i32, i32
  }
}

module attributes {stable_mosaic.version = 11 : i64} {
  func.func @_gn_residual_kernel(%arg0: i32, %arg1: i32, %arg2: memref<1x64x128xf32, #tpu.memory_space<vmem>>, %arg3: memref<1x64x128xf32, #tpu.memory_space<vmem>>, %arg4: memref<1x64x1xf32, #tpu.memory_space<vmem>>, %arg5: memref<1x64x1xf32, #tpu.memory_space<vmem>>, %arg6: memref<1x64x128xf32, #tpu.memory_space<vmem>>) attributes {dimension_semantics = [#tpu.dimension_semantics<parallel>, #tpu.dimension_semantics<parallel>], iteration_bounds = array<i64: 2, 5>, scalar_prefetch = 0 : i64, scratch_operands = 0 : i64, tpu.core_type = #tpu.core_type<tc>, window_params = [{transform_indices = @transform_0, window_bounds = array<i64: 1, 64, 128>}, {transform_indices = @transform_1, window_bounds = array<i64: 1, 64, 128>}, {transform_indices = @transform_2, window_bounds = array<i64: 1, 64, 1>}, {transform_indices = @transform_3, window_bounds = array<i64: 1, 64, 1>}, {transform_indices = @transform_4, window_bounds = array<i64: 1, 64, 128>}]} {
    %c0 = arith.constant 0 : index
    %c0_0 = arith.constant 0 : index
    %c0_1 = arith.constant 0 : index
    %0 = vector.load %arg2[%c0, %c0_0, %c0_1] : memref<1x64x128xf32, #tpu.memory_space<vmem>>, vector<1x64x128xf32>
    %1 = vector.shape_cast %0 : vector<1x64x128xf32> to vector<64x128xf32>
    %c0_2 = arith.constant 0 : index
    %c0_3 = arith.constant 0 : index
    %c0_4 = arith.constant 0 : index
    %2 = vector.load %arg4[%c0_2, %c0_3, %c0_4] : memref<1x64x1xf32, #tpu.memory_space<vmem>>, vector<1x64x1xf32>
    %3 = vector.shape_cast %2 : vector<1x64x1xf32> to vector<64x1xf32>
    %4 = vector.broadcast %3 : vector<64x1xf32> to vector<64x128xf32>
    %5 = arith.mulf %1, %4 : vector<64x128xf32>
    %c0_5 = arith.constant 0 : index
    %c0_6 = arith.constant 0 : index
    %c0_7 = arith.constant 0 : index
    %6 = vector.load %arg5[%c0_5, %c0_6, %c0_7] : memref<1x64x1xf32, #tpu.memory_space<vmem>>, vector<1x64x1xf32>
    %7 = vector.shape_cast %6 : vector<1x64x1xf32> to vector<64x1xf32>
    %8 = vector.broadcast %7 : vector<64x1xf32> to vector<64x128xf32>
    %9 = arith.addf %5, %8 : vector<64x128xf32>
    %c0_8 = arith.constant 0 : index
    %c0_9 = arith.constant 0 : index
    %c0_10 = arith.constant 0 : index
    %10 = vector.load %arg3[%c0_8, %c0_9, %c0_10] : memref<1x64x128xf32, #tpu.memory_space<vmem>>, vector<1x64x128xf32>
    %11 = vector.shape_cast %10 : vector<1x64x128xf32> to vector<64x128xf32>
    %12 = arith.addf %9, %11 : vector<64x128xf32>
    %c0_11 = arith.constant 0 : index
    %c0_12 = arith.constant 0 : index
    %c0_13 = arith.constant 0 : index
    %13 = vector.load %arg6[%c0_11, %c0_12, %c0_13] : memref<1x64x128xf32, #tpu.memory_space<vmem>>, vector<1x64x128xf32>
    %14 = vector.shape_cast %13 : vector<1x64x128xf32> to vector<64x128xf32>
    %15 = vector.shape_cast %12 : vector<64x128xf32> to vector<1x64x128xf32>
    tpu.vector_store %arg6[%c0_11, %c0_12, %c0_13], %15 {strides = array<i32>} : memref<1x64x128xf32, #tpu.memory_space<vmem>>, vector<1x64x128xf32>,
    return
  }
  func.func @transform_0(%arg0: i32, %arg1: i32) -> (i32, i32, i32) {
    %c0_i32 = arith.constant 0 : i32
    %c0_i32_0 = arith.constant 0 : i32
    return %arg0, %c0_i32, %arg1 : i32, i32, i32
  }
  func.func @transform_1(%arg0: i32, %arg1: i32) -> (i32, i32, i32) {
    %c0_i32 = arith.constant 0 : i32
    %c0_i32_0 = arith.constant 0 : i32
    return %arg0, %c0_i32, %arg1 : i32, i32, i32
  }
  func.func @transform_2(%arg0: i32, %arg1: i32) -> (i32, i32, i32) {
    %c0_i32 = arith.constant 0 : i32
    %c0_i32_0 = arith.constant 0 : i32
    %c0_i32_1 = arith.constant 0 : i32
    return %arg0, %c0_i32, %c0_i32_0 : i32, i32, i32
  }
  func.func @transform_3(%arg0: i32, %arg1: i32) -> (i32, i32, i32) {
    %c0_i32 = arith.constant 0 : i32
    %c0_i32_0 = arith.constant 0 : i32
    %c0_i32_1 = arith.constant 0 : i32
    return %arg0, %c0_i32, %c0_i32_0 : i32, i32, i32
  }
  func.func @transform_4(%arg0: i32, %arg1: i32) -> (i32, i32, i32) {
    %c0_i32 = arith.constant 0 : i32
    %c0_i32_0 = arith.constant 0 : i32
    return %arg0, %c0_i32, %arg1 : i32, i32, i32
  }
}

</mosaic_0001>

<llo_original>
// kernel: cross_feature_affinity_pooling.3
$region0: #{cross_feature_affinity_pooling.3}
  #allocation0 [shape = 'u32[]', space=smem, size = 0x4, offset = 0x4, fixed_abs, tag = 'smem constant byte address 0x4 - core index']
  #allocation1 [shape = 'u32[144,128]{1,0:T(1,128)}', space=vmem, size = 0x12000, scoped, tag = 'internal scratch']
  %s0 = inlined_call_operand.vmem [shape: f32[2,64,640], index: 0, kind: input, shape index: {}, may-alias: {0,4}]
  %s1 = inlined_call_operand.vmem [shape: f32[2,64,640], index: 1, kind: input, shape index: {}]
  %s2 = inlined_call_operand.vmem [shape: f32[2,64,1], index: 2, kind: input, shape index: {}]
  %s3 = inlined_call_operand.vmem [shape: f32[2,64,1], index: 3, kind: input, shape index: {}]
  %s4 = inlined_call_operand.vmem [shape: f32[2,64,640], index: 4, kind: output, shape index: {}, may-alias: {0,4}]
  %s5 = sld [smem:[#allocation0]]
  $region159: #{cross_feature_affinity_pooling.3} parent=0
    _
  %s7 = ssub.s32 1, %s5
  %s8 = scalar_select 0, %s7, %s5
  $region1: #{cross_feature_affinity_pooling.3} parent=0
    #allocation2 [shape = 'u8[65536]{0}', space=vmem, size = 0x10000, scoped, tag = 'input window, operand 0']
    #allocation3 [shape = 'u8[65536]{0}', space=vmem, size = 0x10000, scoped, tag = 'input window, operand 1']
    #allocation4 [shape = 'u8[65536]{0}', space=vmem, size = 0x10000, scoped, tag = 'output window, operand 0']
    loop: start=0, step=1, limit=12
    $region2: #{cross_feature_affinity_pooling.3} parent=1 // loop_pre_header
      _
    $region3: #{cross_feature_affinity_pooling.3} parent=1 // loop_header
      %s10 = sphi 0, %s14
      %p11 = scmp.ge.s32.totalorder %s10, 12
      %s17 = sphi 0, %s29
      %s18 = sphi 0, %s25
      %s19 = sphi 0, %s17
      %s20 = sphi 0, %s18
      %s21 = sphi 0, %s19
      %s22 = sphi 0, %s20
      %s34 = sphi 0, %s36
      %s37 = sphi 0, %s34
      %s38 = sphi 0, %s37
      %s54 = sphi 0, %s38
      %s62 = sphi 0, %s64
      %s65 = sphi 0, %s62
      %s66 = sphi 0, %s65
      %s82 = sphi 0, %s66
      %s88 = sphi 0, %s90
      %s91 = sphi 0, %s88
      %s92 = sphi 0, %s91
      %s108 = sphi 0, %s92
      %s114 = sphi 0, %s116
      %s117 = sphi 0, %s114
      %s118 = sphi 0, %s117
      %s134 = sphi 0, %s118
      %s142 = sphi 0, %s144
      %s145 = sphi 0, %s142
      %s146 = sphi 0, %s145
      %s162 = sphi 0, %s146
    $region4: #{cross_feature_affinity_pooling.3} parent=1 // loop_header_branch
      %13 = sbr.rel (%p11) target = $region8
    $region5: #{cross_feature_affinity_pooling.3} parent=1 // loop_body
      %s15 = ssub.s32 %s10, 1
      %s16 = ssub.s32 %s10, 2
      %s23 = sadd.s32 1, %s18
      %p24 = scmp.ge.s32.totalorder %s23, 5
      %s25 = scalar_select %p24, 0, %s23
      %s26 = sadd.s32 1, %s17
      %s27 = scalar_select %p24, %s26, %s17
      %p28 = scmp.ge.s32.totalorder %s27, 2
      %s29 = scalar_select %p28, 0, %s27
      %s30 = ssub.s32 %s17, %s29
      %s31 = ssub.s32 %s18, %s25
      %s32 = sor.u32 %s30, %s31
      %p33 = scmp.eq.s32.totalorder %s32, 0
      %s35 = sadd.s32 %s34, 1
      %s36 = scalar_select %p33, %s34, %s35
      %p39 = pneg %p33
      %p40 = scmp.eq.s32.totalorder %s10, 9
      %p41 = por %p39, %p40
      %p42 = scmp.ne.s32.totalorder %s34, %s37
      %p43 = scmp.eq.s32.totalorder %s10, 0
      %p44 = por %p42, %p43
      %p45 = scmp.ne.s32.totalorder %s34, %s37
      %p46 = scmp.eq.s32.totalorder %s15, 9
      %p47 = por %p45, %p46
      %p48 = scmp.ne.s32.totalorder %s37, %s38
      %p49 = scmp.eq.s32.totalorder %s15, 0
      %p50 = por %p48, %p49
      %p51 = scmp.ne.s32.totalorder %s37, %s38
      %p52 = scmp.eq.s32.totalorder %s16, 9
      %p53 = por %p51, %p52
      %p55 = scmp.ne.s32.totalorder %s38, %s54
      %p56 = scmp.eq.s32.totalorder %s16, 0
      %p57 = por %p55, %p56
      %s58 = ssub.s32 %s17, %s29
      %s59 = ssub.s32 %s18, %s25
      %s60 = sor.u32 %s58, %s59
      %p61 = scmp.eq.s32.totalorder %s60, 0
      %s63 = sadd.s32 %s62, 1
      %s64 = scalar_select %p61, %s62, %s63
      %p67 = pneg %p61
      %p68 = scmp.eq.s32.totalorder %s10, 9
      %p69 = por %p67, %p68
      %p70 = scmp.ne.s32.totalorder %s62, %s65
      %p71 = scmp.eq.s32.totalorder %s10, 0
      %p72 = por %p70, %p71
      %p73 = scmp.ne.s32.totalorder %s62, %s65
      %p74 = scmp.eq.s32.totalorder %s15, 9
      %p75 = por %p73, %p74
      %p76 = scmp.ne.s32.totalorder %s65, %s66
      %p77 = scmp.eq.s32.totalorder %s15, 0
      %p78 = por %p76, %p77
      %p79 = scmp.ne.s32.totalorder %s65, %s66
      %p80 = scmp.eq.s32.totalorder %s16, 9
      %p81 = por %p79, %p80
      %p83 = scmp.ne.s32.totalorder %s66, %s82
      %p84 = scmp.eq.s32.totalorder %s16, 0
      %p85 = por %p83, %p84
      %s86 = ssub.s32 %s17, %s29
      %p87 = scmp.eq.s32.totalorder %s86, 0
      %s89 = sadd.s32 %s88, 1
      %s90 = scalar_select %p87, %s88, %s89
      %p93 = pneg %p87
      %p94 = scmp.eq.s32.totalorder %s10, 9
      %p95 = por %p93, %p94
      %p96 = scmp.ne.s32.totalorder %s88, %s91
      %p97 = scmp.eq.s32.totalorder %s10, 0
      %p98 = por %p96, %p97
      %p99 = scmp.ne.s32.totalorder %s88, %s91
      %p100 = scmp.eq.s32.totalorder %s15, 9
      %p101 = por %p99, %p100
      %p102 = scmp.ne.s32.totalorder %s91, %s92
      %p103 = scmp.eq.s32.totalorder %s15, 0
      %p104 = por %p102, %p103
      %p105 = scmp.ne.s32.totalorder %s91, %s92
      %p106 = scmp.eq.s32.totalorder %s16, 9
      %p107 = por %p105, %p106
      %p109 = scmp.ne.s32.totalorder %s92, %s108
      %p110 = scmp.eq.s32.totalorder %s16, 0
      %p111 = por %p109, %p110
      %s112 = ssub.s32 %s17, %s29
      %p113 = scmp.eq.s32.totalorder %s112, 0
      %s115 = sadd.s32 %s114, 1
      %s116 = scalar_select %p113, %s114, %s115
      %p119 = pneg %p113
      %p120 = scmp.eq.s32.totalorder %s10, 9
      %p121 = por %p119, %p120
      %p122 = scmp.ne.s32.totalorder %s114, %s117
      %p123 = scmp.eq.s32.totalorder %s10, 0
      %p124 = por %p122, %p123
      %p125 = scmp.ne.s32.totalorder %s114, %s117
      %p126 = scmp.eq.s32.totalorder %s15, 9
      %p127 = por %p125, %p126
      %p128 = scmp.ne.s32.totalorder %s117, %s118
      %p129 = scmp.eq.s32.totalorder %s15, 0
      %p130 = por %p128, %p129
      %p131 = scmp.ne.s32.totalorder %s117, %s118
      %p132 = scmp.eq.s32.totalorder %s16, 9
      %p133 = por %p131, %p132
      %p135 = scmp.ne.s32.totalorder %s118, %s134
      %p136 = scmp.eq.s32.totalorder %s16, 0
      %p137 = por %p135, %p136
      %s138 = ssub.s32 %s17, %s29
      %s139 = ssub.s32 %s18, %s25
      %s140 = sor.u32 %s138, %s139
      %p141 = scmp.eq.s32.totalorder %s140, 0
      %s143 = sadd.s32 %s142, 1
      %s144 = scalar_select %p141, %s142, %s143
      %p147 = pneg %p141
      %p148 = scmp.eq.s32.totalorder %s10, 9
      %p149 = por %p147, %p148
      %p150 = scmp.ne.s32.totalorder %s142, %s145
      %p151 = scmp.eq.s32.totalorder %s10, 0
      %p152 = por %p150, %p151
      %p153 = scmp.ne.s32.totalorder %s142, %s145
      %p154 = scmp.eq.s32.totalorder %s15, 9
      %p155 = por %p153, %p154
      %p156 = scmp.ne.s32.totalorder %s145, %s146
      %p157 = scmp.eq.s32.totalorder %s15, 0
      %p158 = por %p156, %p157
      %p159 = scmp.ne.s32.totalorder %s145, %s146
      %p160 = scmp.eq.s32.totalorder %s16, 9
      %p161 = por %p159, %p160
      %p163 = scmp.ne.s32.totalorder %s146, %s162
      %p164 = scmp.eq.s32.totalorder %s16, 0
      %p165 = por %p163, %p164
      %p166 = scmp.le.s32.totalorder 1, %s10
      %p167 = scmp.lt.s32.totalorder %s10, 11
      %p168 = pnand %p166, %p167
      %p169 = pneg %p168
      // Predicated region
      $region9: #{cross_feature_affinity_pooling.3} parent=5 // pred_check
        _
      $region10: #{cross_feature_affinity_pooling.3} parent=5 // pred_check_branch
        %171 = sbr.rel (%p168) target = $region12
      $region11: #{cross_feature_affinity_pooling.3} parent=5 // pred_region
        %s172 = ssub.s32 %s10, 1
      $region12: #{cross_feature_affinity_pooling.3} parent=5 // pred_fallthru
        _
      %p173 = scmp.lt.s32.totalorder %s10, 10
      // Predicated region
      $region13: #{cross_feature_affinity_pooling.3} parent=5 // pred_check
        %p174 = pneg %p173
      $region14: #{cross_feature_affinity_pooling.3} parent=5 // pred_check_branch
        %176 = sbr.rel (%p174) target = $region16
      $region15: #{cross_feature_affinity_pooling.3} parent=5 // pred_region
        // Predicated region
        $region17: #{cross_feature_affinity_pooling.3} parent=15 // pred_check
          %p177 = pneg %p44
        $region18: #{cross_feature_affinity_pooling.3} parent=15 // pred_check_branch
          %179 = sbr.rel (%p177) target = $region20
        $region19: #{cross_feature_affinity_pooling.3} parent=15 // pred_region
          %s180 = sand.u32 %s34, 1
          %s181 = sand.u32 %s34, 1
          %s182 = smul.addr %s181, 64
          %s183 = scalar_lea.vmem [#allocation2], %s182
          %s184 = smul.addr %s17, 40
          %s185 = sadd.s32 %s18, %s184
          %s186 = smul.addr %s185, 8
          %s187 = scalar_lea.vmem %s0, %s186
          // Predicated region
          $region21: #{cross_feature_affinity_pooling.3} parent=19 // pred_check
            _
          $region22: #{cross_feature_affinity_pooling.3} parent=19 // pred_check_branch
            %189 = sbr.rel (0) target = $region24
          $region23: #{cross_feature_affinity_pooling.3} parent=19 // pred_region
            // Predicated region
            $region25: #{cross_feature_affinity_pooling.3} parent=23 // pred_check
              _
            $region26: #{cross_feature_affinity_pooling.3} parent=23 // pred_check_branch
              %191 = sbr.rel (0) target = $region28
            $region27: #{cross_feature_affinity_pooling.3} parent=23 // pred_region
              // Predicated region
              $region40: #{cross_feature_affinity_pooling.3} parent=27 // pred_check
                _
              $region41: #{cross_feature_affinity_pooling.3} parent=27 // pred_check_branch
                %221 = sbr.rel (0) target = $region43
              $region42: #{cross_feature_affinity_pooling.3} parent=27 // pred_region
                loop: start=0, step=1, limit=1
                $region44: #{cross_feature_affinity_pooling.3} parent=42 // loop_pre_header
                  _
                $region45: #{cross_feature_affinity_pooling.3} parent=42 // loop_header
                  %s223 = sphi 0, %s227
                  %p224 = scmp.ge.s32.totalorder %s223, 1
                  %s228 = sphi %s187, %s187
                  %s229 = sphi %s183, %s183
                $region46: #{cross_feature_affinity_pooling.3} parent=42 // loop_header_branch
                  %226 = sbr.rel (%p224) target = $region50
                $region47: #{cross_feature_affinity_pooling.3} parent=42 // loop_body
                  %v230 = vld [vmem:[%s228] sm:$0xff]
                  %231 = vst [vmem:[%s229] sm:$0xff] %v230
                  %v232 = vld [vmem:[%s228 + $0x28] sm:$0xff]
                  %233 = vst [vmem:[%s229 + $0x8] sm:$0xff] %v232
                  %v234 = vld [vmem:[%s228 + $0x50] sm:$0xff]
                  %235 = vst [vmem:[%s229 + $0x10] sm:$0xff] %v234
                  %v236 = vld [vmem:[%s228 + $0x78] sm:$0xff]
                  %237 = vst [vmem:[%s229 + $0x18] sm:$0xff] %v236
                  %v238 = vld [vmem:[%s228 + $0xa0] sm:$0xff]
                  %239 = vst [vmem:[%s229 + $0x20] sm:$0xff] %v238
                  %v240 = vld [vmem:[%s228 + $0xc8] sm:$0xff]
                  %241 = vst [vmem:[%s229 + $0x28] sm:$0xff] %v240
                  %v242 = vld [vmem:[%s228 + $0xf0] sm:$0xff]
                  %243 = vst [vmem:[%s229 + $0x30] sm:$0xff] %v242
                  %v244 = vld [vmem:[%s228 + $0x118] sm:$0xff]
                  %245 = vst [vmem:[%s229 + $0x38] sm:$0xff] %v244
                $region48: #{cross_feature_affinity_pooling.3} parent=42 // loop_footer
                  %s227 = sadd.s32 1, %s223
                $region49: #{cross_feature_affinity_pooling.3} parent=42 // loop_footer_branch
                  %222 = sbr.rel target = $region45
                $region50: #{cross_feature_affinity_pooling.3} parent=42 // loop_exit
                  _
              $region43: #{cross_feature_affinity_pooling.3} parent=27 // pred_fallthru
                _
              // Predicated region
              $region51: #{cross_feature_affinity_pooling.3} parent=27 // pred_check
                _
              $region52: #{cross_feature_affinity_pooling.3} parent=27 // pred_check_branch
                %247 = sbr.rel target = $region54
              $region53: #{cross_feature_affinity_pooling.3} parent=27 // pred_region
                _
              $region54: #{cross_feature_affinity_pooling.3} parent=27 // pred_fallthru
                _
            $region28: #{cross_feature_affinity_pooling.3} parent=23 // pred_fallthru
              _
            // Predicated region
            $region29: #{cross_feature_affinity_pooling.3} parent=23 // pred_check
              _
            $region30: #{cross_feature_affinity_pooling.3} parent=23 // pred_check_branch
              %193 = sbr.rel target = $region32
            $region31: #{cross_feature_affinity_pooling.3} parent=23 // pred_region
              %s195 = ssub.s32 256, 1
              loop: start=0, step=1, limit=1
              $region33: #{cross_feature_affinity_pooling.3} parent=31 // loop_pre_header
                _
              $region34: #{cross_feature_affinity_pooling.3} parent=31 // loop_header
                %s197 = sphi 0, %s201
                %p198 = scmp.ge.s32.totalorder %s197, 1
                %s202 = sphi %s187, %s187
                %s203 = sphi %s183, %s183
              $region35: #{cross_feature_affinity_pooling.3} parent=31 // loop_header_branch
                %200 = sbr.rel (%p198) target = $region39
              $region36: #{cross_feature_affinity_pooling.3} parent=31 // loop_body
                %v204 = vld [vmem:[%s202] sm:%s195]
                %205 = vst [vmem:[%s203] sm:%s195] %v204
                %v206 = vld [vmem:[%s202 + $0x28] sm:%s195]
                %207 = vst [vmem:[%s203 + $0x8] sm:%s195] %v206
                %v208 = vld [vmem:[%s202 + $0x50] sm:%s195]
                %209 = vst [vmem:[%s203 + $0x10] sm:%s195] %v208
                %v210 = vld [vmem:[%s202 + $0x78] sm:%s195]
                %211 = vst [vmem:[%s203 + $0x18] sm:%s195] %v210
                %v212 = vld [vmem:[%s202 + $0xa0] sm:%s195]
                %213 = vst [vmem:[%s203 + $0x20] sm:%s195] %v212
                %v214 = vld [vmem:[%s202 + $0xc8] sm:%s195]
                %215 = vst [vmem:[%s203 + $0x28] sm:%s195] %v214
                %v216 = vld [vmem:[%s202 + $0xf0] sm:%s195]
                %217 = vst [vmem:[%s203 + $0x30] sm:%s195] %v216
                %v218 = vld [vmem:[%s202 + $0x118] sm:%s195]
                %219 = vst [vmem:[%s203 + $0x38] sm:%s195] %v218
              $region37: #{cross_feature_affinity_pooling.3} parent=31 // loop_footer
                %s201 = sadd.s32 1, %s197
              $region38: #{cross_feature_affinity_pooling.3} parent=31 // loop_footer_branch
                %196 = sbr.rel target = $region34
              $region39: #{cross_feature_affinity_pooling.3} parent=31 // loop_exit
                _
            $region32: #{cross_feature_affinity_pooling.3} parent=23 // pred_fallthru
              _
          $region24: #{cross_feature_affinity_pooling.3} parent=19 // pred_fallthru
            _
          %248 = vnop
        $region20: #{cross_feature_affinity_pooling.3} parent=15 // pred_fallthru
          _
        // Predicated region
        $region55: #{cross_feature_affinity_pooling.3} parent=15 // pred_check
          %p249 = pneg %p72
        $region56: #{cross_feature_affinity_pooling.3} parent=15 // pred_check_branch
          %251 = sbr.rel (%p249) target = $region58
        $region57: #{cross_feature_affinity_pooling.3} parent=15 // pred_region
          %s252 = sand.u32 %s62, 1
          %s253 = sand.u32 %s62, 1
          %s254 = smul.addr %s253, 64
          %s255 = scalar_lea.vmem [#allocation3], %s254
          %s256 = smul.addr %s17, 40
          %s257 = sadd.s32 %s18, %s256
          %s258 = smul.addr %s257, 8
          %s259 = scalar_lea.vmem %s1, %s258
          // Predicated region
          $region59: #{cross_feature_affinity_pooling.3} parent=57 // pred_check
            _
          $region60: #{cross_feature_affinity_pooling.3} parent=57 // pred_check_branch
            %261 = sbr.rel (0) target = $region62
          $region61: #{cross_feature_affinity_pooling.3} parent=57 // pred_region
            // Predicated region
            $region63: #{cross_feature_affinity_pooling.3} parent=61 // pred_check
              _
            $region64: #{cross_feature_affinity_pooling.3} parent=61 // pred_check_branch
              %263 = sbr.rel (0) target = $region66
            $region65: #{cross_feature_affinity_pooling.3} parent=61 // pred_region
              // Predicated region
              $region78: #{cross_feature_affinity_pooling.3} parent=65 // pred_check
                _
              $region79: #{cross_feature_affinity_pooling.3} parent=65 // pred_check_branch
                %293 = sbr.rel (0) target = $region81
              $region80: #{cross_feature_affinity_pooling.3} parent=65 // pred_region
                loop: start=0, step=1, limit=1
                $region82: #{cross_feature_affinity_pooling.3} parent=80 // loop_pre_header
                  _
                $region83: #{cross_feature_affinity_pooling.3} parent=80 // loop_header
                  %s295 = sphi 0, %s299
                  %p296 = scmp.ge.s32.totalorder %s295, 1
                  %s300 = sphi %s259, %s259
                  %s301 = sphi %s255, %s255
                $region84: #{cross_feature_affinity_pooling.3} parent=80 // loop_header_branch
                  %298 = sbr.rel (%p296) target = $region88
                $region85: #{cross_feature_affinity_pooling.3} parent=80 // loop_body
                  %v302 = vld [vmem:[%s300] sm:$0xff]
                  %303 = vst [vmem:[%s301] sm:$0xff] %v302
                  %v304 = vld [vmem:[%s300 + $0x28] sm:$0xff]
                  %305 = vst [vmem:[%s301 + $0x8] sm:$0xff] %v304
                  %v306 = vld [vmem:[%s300 + $0x50] sm:$0xff]
                  %307 = vst [vmem:[%s301 + $0x10] sm:$0xff] %v306
                  %v308 = vld [vmem:[%s300 + $0x78] sm:$0xff]
                  %309 = vst [vmem:[%s301 + $0x18] sm:$0xff] %v308
                  %v310 = vld [vmem:[%s300 + $0xa0] sm:$0xff]
                  %311 = vst [vmem:[%s301 + $0x20] sm:$0xff] %v310
                  %v312 = vld [vmem:[%s300 + $0xc8] sm:$0xff]
                  %313 = vst [vmem:[%s301 + $0x28] sm:$0xff] %v312
                  %v314 = vld [vmem:[%s300 + $0xf0] sm:$0xff]
                  %315 = vst [vmem:[%s301 + $0x30] sm:$0xff] %v314
                  %v316 = vld [vmem:[%s300 + $0x118] sm:$0xff]
                  %317 = vst [vmem:[%s301 + $0x38] sm:$0xff] %v316
                $region86: #{cross_feature_affinity_pooling.3} parent=80 // loop_footer
                  %s299 = sadd.s32 1, %s295
                $region87: #{cross_feature_affinity_pooling.3} parent=80 // loop_footer_branch
                  %294 = sbr.rel target = $region83
                $region88: #{cross_feature_affinity_pooling.3} parent=80 // loop_exit
                  _
              $region81: #{cross_feature_affinity_pooling.3} parent=65 // pred_fallthru
                _
              // Predicated region
              $region89: #{cross_feature_affinity_pooling.3} parent=65 // pred_check
                _
              $region90: #{cross_feature_affinity_pooling.3} parent=65 // pred_check_branch
                %319 = sbr.rel target = $region92
              $region91: #{cross_feature_affinity_pooling.3} parent=65 // pred_region
                _
              $region92: #{cross_feature_affinity_pooling.3} parent=65 // pred_fallthru
                _
            $region66: #{cross_feature_affinity_pooling.3} parent=61 // pred_fallthru
              _
            // Predicated region
            $region67: #{cross_feature_affinity_pooling.3} parent=61 // pred_check
              _
            $region68: #{cross_feature_affinity_pooling.3} parent=61 // pred_check_branch
              %265 = sbr.rel target = $region70
            $region69: #{cross_feature_affinity_pooling.3} parent=61 // pred_region
              %s267 = ssub.s32 256, 1
              loop: start=0, step=1, limit=1
              $region71: #{cross_feature_affinity_pooling.3} parent=69 // loop_pre_header
                _
              $region72: #{cross_feature_affinity_pooling.3} parent=69 // loop_header
                %s269 = sphi 0, %s273
                %p270 = scmp.ge.s32.totalorder %s269, 1
                %s274 = sphi %s259, %s259
                %s275 = sphi %s255, %s255
              $region73: #{cross_feature_affinity_pooling.3} parent=69 // loop_header_branch
                %272 = sbr.rel (%p270) target = $region77
              $region74: #{cross_feature_affinity_pooling.3} parent=69 // loop_body
                %v276 = vld [vmem:[%s274] sm:%s267]
                %277 = vst [vmem:[%s275] sm:%s267] %v276
                %v278 = vld [vmem:[%s274 + $0x28] sm:%s267]
                %279 = vst [vmem:[%s275 + $0x8] sm:%s267] %v278
                %v280 = vld [vmem:[%s274 + $0x50] sm:%s267]
                %281 = vst [vmem:[%s275 + $0x10] sm:%s267] %v280
                %v282 = vld [vmem:[%s274 + $0x78] sm:%s267]
                %283 = vst [vmem:[%s275 + $0x18] sm:%s267] %v282
                %v284 = vld [vmem:[%s274 + $0xa0] sm:%s267]
                %285 = vst [vmem:[%s275 + $0x20] sm:%s267] %v284
                %v286 = vld [vmem:[%s274 + $0xc8] sm:%s267]
                %287 = vst [vmem:[%s275 + $0x28] sm:%s267] %v286
                %v288 = vld [vmem:[%s274 + $0xf0] sm:%s267]
                %289 = vst [vmem:[%s275 + $0x30] sm:%s267] %v288
                %v290 = vld [vmem:[%s274 + $0x118] sm:%s267]
                %291 = vst [vmem:[%s275 + $0x38] sm:%s267] %v290
              $region75: #{cross_feature_affinity_pooling.3} parent=69 // loop_footer
                %s273 = sadd.s32 1, %s269
              $region76: #{cross_feature_affinity_pooling.3} parent=69 // loop_footer_branch
                %268 = sbr.rel target = $region72
              $region77: #{cross_feature_affinity_pooling.3} parent=69 // loop_exit
                _
            $region70: #{cross_feature_affinity_pooling.3} parent=61 // pred_fallthru
              _
          $region62: #{cross_feature_affinity_pooling.3} parent=57 // pred_fallthru
            _
          %320 = vnop
        $region58: #{cross_feature_affinity_pooling.3} parent=15 // pred_fallthru
          _
        // Predicated region
        $region93: #{cross_feature_affinity_pooling.3} parent=15 // pred_check
          %p321 = pneg %p98
        $region94: #{cross_feature_affinity_pooling.3} parent=15 // pred_check_branch
          %323 = sbr.rel (%p321) target = $region96
        $region95: #{cross_feature_affinity_pooling.3} parent=15 // pred_region
          %p324 = scmp.lt.s32.totalorder %s17, 1
          %s325 = scalar_select %p324, %s17, 1
          %s326 = smul.addr %s325, 8
          %s327 = smul.addr %s326, 8
          %s328 = scalar_lea.vmem %s2, %s327
        $region96: #{cross_feature_affinity_pooling.3} parent=15 // pred_fallthru
          _
        // Predicated region
        $region97: #{cross_feature_affinity_pooling.3} parent=15 // pred_check
          %p329 = pneg %p124
        $region98: #{cross_feature_affinity_pooling.3} parent=15 // pred_check_branch
          %331 = sbr.rel (%p329) target = $region100
        $region99: #{cross_feature_affinity_pooling.3} parent=15 // pred_region
          %p332 = scmp.lt.s32.totalorder %s17, 1
          %s333 = scalar_select %p332, %s17, 1
          %s334 = smul.addr %s333, 8
          %s335 = smul.addr %s334, 8
          %s336 = scalar_lea.vmem %s3, %s335
        $region100: #{cross_feature_affinity_pooling.3} parent=15 // pred_fallthru
          _
      $region16: #{cross_feature_affinity_pooling.3} parent=5 // pred_fallthru
        _
      %p337 = scmp.le.s32.totalorder 1, %s10
      %p338 = scmp.lt.s32.totalorder %s10, 11
      %p339 = pnand %p337, %p338
      %p340 = pneg %p339
      // Predicated region
      $region101: #{cross_feature_affinity_pooling.3} parent=5 // pred_check
        _
      $region102: #{cross_feature_affinity_pooling.3} parent=5 // pred_check_branch
        %342 = sbr.rel (%p339) target = $region104
      $region103: #{cross_feature_affinity_pooling.3} parent=5 // pred_region
        %s343 = ssub.s32 %s10, 1
        %s344 = sand.u32 %s37, 1
        %s345 = sand.u32 %s37, 1
        %s346 = smul.addr %s345, 64
        %s347 = scalar_lea.vmem [#allocation2], %s346
        // Predicated region
        $region105: #{cross_feature_affinity_pooling.3} parent=103 // pred_check
          %p348 = pneg %p50
        $region106: #{cross_feature_affinity_pooling.3} parent=103 // pred_check_branch
          %350 = sbr.rel (%p348) target = $region108
        $region107: #{cross_feature_affinity_pooling.3} parent=103 // pred_region
          _
        $region108: #{cross_feature_affinity_pooling.3} parent=103 // pred_fallthru
          _
        %s351 = sand.u32 %s65, 1
        %s352 = sand.u32 %s65, 1
        %s353 = smul.addr %s352, 64
        %s354 = scalar_lea.vmem [#allocation3], %s353
        // Predicated region
        $region109: #{cross_feature_affinity_pooling.3} parent=103 // pred_check
          %p355 = pneg %p78
        $region110: #{cross_feature_affinity_pooling.3} parent=103 // pred_check_branch
          %357 = sbr.rel (%p355) target = $region112
        $region111: #{cross_feature_affinity_pooling.3} parent=103 // pred_region
          _
        $region112: #{cross_feature_affinity_pooling.3} parent=103 // pred_fallthru
          _
        %s358 = sand.u32 %s37, 1
        %s359 = sand.u32 %s37, 1
        %s360 = smul.addr %s359, 64
        %s361 = scalar_lea.vmem [#allocation2], %s360
        %p362 = pneg %p50
        %p363 = pneg %p47
        %s364 = sand.u32 %s65, 1
        %s365 = sand.u32 %s65, 1
        %s366 = smul.addr %s365, 64
        %s367 = scalar_lea.vmem [#allocation3], %s366
        %p368 = pneg %p78
        %p369 = pneg %p75
        %p370 = scmp.lt.s32.totalorder %s19, 1
        %s371 = scalar_select %p370, %s19, 1
        %s372 = smul.addr %s371, 8
        %s373 = smul.addr %s372, 8
        %s374 = scalar_lea.vmem %s2, %s373
        %p375 = pneg %p104
        %p376 = pneg %p101
        %p377 = scmp.lt.s32.totalorder %s19, 1
        %s378 = scalar_select %p377, %s19, 1
        %s379 = smul.addr %s378, 8
        %s380 = smul.addr %s379, 8
        %s381 = scalar_lea.vmem %s3, %s380
        %p382 = pneg %p130
        %p383 = pneg %p127
        %p384 = pneg %p158
        %p385 = pneg %p155
        %s386 = sand.u32 %s145, 1
        %s387 = sand.u32 %s145, 1
        %s388 = smul.addr %s387, 64
        %s389 = scalar_lea.vmem [#allocation4], %s388
        %p390 = scmp.lt.s32.totalorder %s19, 1
        %s391 = scalar_select %p390, %s19, 1
        %s392 = smul.addr %s391, 8
        %s393 = smul.addr %s392, 8
        %s394 = scalar_lea.vmem %s2, %s393
        %p395 = scmp.lt.s32.totalorder %s19, 1
        %s396 = scalar_select %p395, %s19, 1
        %s397 = smul.addr %s396, 8
        %s398 = smul.addr %s397, 8
        %s399 = scalar_lea.vmem %s3, %s398
        %v400 = vld [vmem:[%s347] sm:$0xff]
        %v401 = vld [vmem:[%s347 + $0x8] sm:$0xff]
        %v402 = vld [vmem:[%s347 + $0x10] sm:$0xff]
        %v403 = vld [vmem:[%s347 + $0x18] sm:$0xff]
        %v404 = vld [vmem:[%s347 + $0x20] sm:$0xff]
        %v405 = vld [vmem:[%s347 + $0x28] sm:$0xff]
        %v406 = vld [vmem:[%s347 + $0x30] sm:$0xff]
        %v407 = vld [vmem:[%s347 + $0x38] sm:$0xff]
        %v408 = vld [vmem:[%s394] sm:$0xff]
        %v409 = vld [vmem:[%s394 + $0x8] sm:$0xff]
        %v410 = vld [vmem:[%s394 + $0x10] sm:$0xff]
        %v411 = vld [vmem:[%s394 + $0x18] sm:$0xff]
        %v412 = vld [vmem:[%s394 + $0x20] sm:$0xff]
        %v413 = vld [vmem:[%s394 + $0x28] sm:$0xff]
        %v414 = vld [vmem:[%s394 + $0x30] sm:$0xff]
        %v415 = vld [vmem:[%s394 + $0x38] sm:$0xff]
        %417 = vset.pattern.permute.xlu0 0
        %418 = vperm.xlu0 %417, %v408
        %v419 = vpop.permute.xlu0 %418
        %422 = vset.pattern.permute.xlu0 0
        %423 = vperm.xlu0 %422, %v409
        %v424 = vpop.permute.xlu0 %423
        %427 = vset.pattern.permute.xlu0 0
        %428 = vperm.xlu0 %427, %v410
        %v429 = vpop.permute.xlu0 %428
        %432 = vset.pattern.permute.xlu0 0
        %433 = vperm.xlu0 %432, %v411
        %v434 = vpop.permute.xlu0 %433
        %437 = vset.pattern.permute.xlu0 0
        %438 = vperm.xlu0 %437, %v412
        %v439 = vpop.permute.xlu0 %438
        %442 = vset.pattern.permute.xlu0 0
        %443 = vperm.xlu0 %442, %v413
        %v444 = vpop.permute.xlu0 %443
        %447 = vset.pattern.permute.xlu0 0
        %448 = vperm.xlu0 %447, %v414
        %v449 = vpop.permute.xlu0 %448
        %452 = vset.pattern.permute.xlu0 0
        %453 = vperm.xlu0 %452, %v415
        %v454 = vpop.permute.xlu0 %453
        %v456 = vmul.f32 %v400, %v419
        %v457 = vmul.f32 %v401, %v424
        %v458 = vmul.f32 %v402, %v429
        %v459 = vmul.f32 %v403, %v434
        %v460 = vmul.f32 %v404, %v439
        %v461 = vmul.f32 %v405, %v444
        %v462 = vmul.f32 %v406, %v449
        %v463 = vmul.f32 %v407, %v454
        %v464 = vld [vmem:[%s399] sm:$0xff]
        %v465 = vld [vmem:[%s399 + $0x8] sm:$0xff]
        %v466 = vld [vmem:[%s399 + $0x10] sm:$0xff]
        %v467 = vld [vmem:[%s399 + $0x18] sm:$0xff]
        %v468 = vld [vmem:[%s399 + $0x20] sm:$0xff]
        %v469 = vld [vmem:[%s399 + $0x28] sm:$0xff]
        %v470 = vld [vmem:[%s399 + $0x30] sm:$0xff]
        %v471 = vld [vmem:[%s399 + $0x38] sm:$0xff]
        %473 = vset.pattern.permute.xlu0 0
        %474 = vperm.xlu0 %473, %v464
        %v475 = vpop.permute.xlu0 %474
        %478 = vset.pattern.permute.xlu0 0
        %479 = vperm.xlu0 %478, %v465
        %v480 = vpop.permute.xlu0 %479
        %483 = vset.pattern.permute.xlu0 0
        %484 = vperm.xlu0 %483, %v466
        %v485 = vpop.permute.xlu0 %484
        %488 = vset.pattern.permute.xlu0 0
        %489 = vperm.xlu0 %488, %v467
        %v490 = vpop.permute.xlu0 %489
        %493 = vset.pattern.permute.xlu0 0
        %494 = vperm.xlu0 %493, %v468
        %v495 = vpop.permute.xlu0 %494
        %498 = vset.pattern.permute.xlu0 0
        %499 = vperm.xlu0 %498, %v469
        %v500 = vpop.permute.xlu0 %499
        %503 = vset.pattern.permute.xlu0 0
        %504 = vperm.xlu0 %503, %v470
        %v505 = vpop.permute.xlu0 %504
        %508 = vset.pattern.permute.xlu0 0
        %509 = vperm.xlu0 %508, %v471
        %v510 = vpop.permute.xlu0 %509
        %v512 = vadd.f32 %v456, %v475
        %v513 = vadd.f32 %v457, %v480
        %v514 = vadd.f32 %v458, %v485
        %v515 = vadd.f32 %v459, %v490
        %v516 = vadd.f32 %v460, %v495
        %v517 = vadd.f32 %v461, %v500
        %v518 = vadd.f32 %v462, %v505
        %v519 = vadd.f32 %v463, %v510
        %v520 = vld [vmem:[%s354] sm:$0xff]
        %v521 = vld [vmem:[%s354 + $0x8] sm:$0xff]
        %v522 = vld [vmem:[%s354 + $0x10] sm:$0xff]
        %v523 = vld [vmem:[%s354 + $0x18] sm:$0xff]
        %v524 = vld [vmem:[%s354 + $0x20] sm:$0xff]
        %v525 = vld [vmem:[%s354 + $0x28] sm:$0xff]
        %v526 = vld [vmem:[%s354 + $0x30] sm:$0xff]
        %v527 = vld [vmem:[%s354 + $0x38] sm:$0xff]
        %v528 = vadd.f32 %v512, %v520
        %v529 = vadd.f32 %v513, %v521
        %v530 = vadd.f32 %v514, %v522
        %v531 = vadd.f32 %v515, %v523
        %v532 = vadd.f32 %v516, %v524
        %v533 = vadd.f32 %v517, %v525
        %v534 = vadd.f32 %v518, %v526
        %v535 = vadd.f32 %v519, %v527
        %536 = vst [vmem:[%s389] sm:$0xff] %v528
        %537 = vst [vmem:[%s389 + $0x8] sm:$0xff] %v529
        %538 = vst [vmem:[%s389 + $0x10] sm:$0xff] %v530
        %539 = vst [vmem:[%s389 + $0x18] sm:$0xff] %v531
        %540 = vst [vmem:[%s389 + $0x20] sm:$0xff] %v532
        %541 = vst [vmem:[%s389 + $0x28] sm:$0xff] %v533
        %542 = vst [vmem:[%s389 + $0x30] sm:$0xff] %v534
        %543 = vst [vmem:[%s389 + $0x38] sm:$0xff] %v535
        %s544 = sand.u32 %s145, 1
        %s545 = sand.u32 %s145, 1
        %s546 = smul.addr %s545, 64
        %s547 = scalar_lea.vmem [#allocation4], %s546
        // Predicated region
        $region113: #{cross_feature_affinity_pooling.3} parent=103 // pred_check
          %p548 = pneg %p155
        $region114: #{cross_feature_affinity_pooling.3} parent=103 // pred_check_branch
          %550 = sbr.rel (%p548) target = $region116
        $region115: #{cross_feature_affinity_pooling.3} parent=103 // pred_region
          %s551 = smul.addr %s19, 40
          %s552 = sadd.s32 %s20, %s551
          %s553 = smul.addr %s552, 8
          %s554 = scalar_lea.vmem %s4, %s553
          // Predicated region
          $region117: #{cross_feature_affinity_pooling.3} parent=115 // pred_check
            _
          $region118: #{cross_feature_affinity_pooling.3} parent=115 // pred_check_branch
            %556 = sbr.rel (0) target = $region120
          $region119: #{cross_feature_affinity_pooling.3} parent=115 // pred_region
            // Predicated region
            $region121: #{cross_feature_affinity_pooling.3} parent=119 // pred_check
              _
            $region122: #{cross_feature_affinity_pooling.3} parent=119 // pred_check_branch
              %558 = sbr.rel (0) target = $region124
            $region123: #{cross_feature_affinity_pooling.3} parent=119 // pred_region
              // Predicated region
              $region136: #{cross_feature_affinity_pooling.3} parent=123 // pred_check
                _
              $region137: #{cross_feature_affinity_pooling.3} parent=123 // pred_check_branch
                %588 = sbr.rel (0) target = $region139
              $region138: #{cross_feature_affinity_pooling.3} parent=123 // pred_region
                loop: start=0, step=1, limit=1
                $region140: #{cross_feature_affinity_pooling.3} parent=138 // loop_pre_header
                  _
                $region141: #{cross_feature_affinity_pooling.3} parent=138 // loop_header
                  %s590 = sphi 0, %s594
                  %p591 = scmp.ge.s32.totalorder %s590, 1
                  %s595 = sphi %s547, %s547
                  %s596 = sphi %s554, %s554
                $region142: #{cross_feature_affinity_pooling.3} parent=138 // loop_header_branch
                  %593 = sbr.rel (%p591) target = $region146
                $region143: #{cross_feature_affinity_pooling.3} parent=138 // loop_body
                  %v597 = vld [vmem:[%s595] sm:$0xff]
                  %598 = vst [vmem:[%s596] sm:$0xff] %v597
                  %v599 = vld [vmem:[%s595 + $0x8] sm:$0xff]
                  %600 = vst [vmem:[%s596 + $0x28] sm:$0xff] %v599
                  %v601 = vld [vmem:[%s595 + $0x10] sm:$0xff]
                  %602 = vst [vmem:[%s596 + $0x50] sm:$0xff] %v601
                  %v603 = vld [vmem:[%s595 + $0x18] sm:$0xff]
                  %604 = vst [vmem:[%s596 + $0x78] sm:$0xff] %v603
                  %v605 = vld [vmem:[%s595 + $0x20] sm:$0xff]
                  %606 = vst [vmem:[%s596 + $0xa0] sm:$0xff] %v605
                  %v607 = vld [vmem:[%s595 + $0x28] sm:$0xff]
                  %608 = vst [vmem:[%s596 + $0xc8] sm:$0xff] %v607
                  %v609 = vld [vmem:[%s595 + $0x30] sm:$0xff]
                  %610 = vst [vmem:[%s596 + $0xf0] sm:$0xff] %v609
                  %v611 = vld [vmem:[%s595 + $0x38] sm:$0xff]
                  %612 = vst [vmem:[%s596 + $0x118] sm:$0xff] %v611
                $region144: #{cross_feature_affinity_pooling.3} parent=138 // loop_footer
                  %s594 = sadd.s32 1, %s590
                $region145: #{cross_feature_affinity_pooling.3} parent=138 // loop_footer_branch
                  %589 = sbr.rel target = $region141
                $region146: #{cross_feature_affinity_pooling.3} parent=138 // loop_exit
                  _
              $region139: #{cross_feature_affinity_pooling.3} parent=123 // pred_fallthru
                _
              // Predicated region
              $region147: #{cross_feature_affinity_pooling.3} parent=123 // pred_check
                _
              $region148: #{cross_feature_affinity_pooling.3} parent=123 // pred_check_branch
                %614 = sbr.rel target = $region150
              $region149: #{cross_feature_affinity_pooling.3} parent=123 // pred_region
                _
              $region150: #{cross_feature_affinity_pooling.3} parent=123 // pred_fallthru
                _
            $region124: #{cross_feature_affinity_pooling.3} parent=119 // pred_fallthru
              _
            // Predicated region
            $region125: #{cross_feature_affinity_pooling.3} parent=119 // pred_check
              _
            $region126: #{cross_feature_affinity_pooling.3} parent=119 // pred_check_branch
              %560 = sbr.rel target = $region128
            $region127: #{cross_feature_affinity_pooling.3} parent=119 // pred_region
              %s562 = ssub.s32 256, 1
              loop: start=0, step=1, limit=1
              $region129: #{cross_feature_affinity_pooling.3} parent=127 // loop_pre_header
                _
              $region130: #{cross_feature_affinity_pooling.3} parent=127 // loop_header
                %s564 = sphi 0, %s568
                %p565 = scmp.ge.s32.totalorder %s564, 1
                %s569 = sphi %s547, %s547
                %s570 = sphi %s554, %s554
              $region131: #{cross_feature_affinity_pooling.3} parent=127 // loop_header_branch
                %567 = sbr.rel (%p565) target = $region135
              $region132: #{cross_feature_affinity_pooling.3} parent=127 // loop_body
                %v571 = vld [vmem:[%s569] sm:%s562]
                %572 = vst [vmem:[%s570] sm:%s562] %v571
                %v573 = vld [vmem:[%s569 + $0x8] sm:%s562]
                %574 = vst [vmem:[%s570 + $0x28] sm:%s562] %v573
                %v575 = vld [vmem:[%s569 + $0x10] sm:%s562]
                %576 = vst [vmem:[%s570 + $0x50] sm:%s562] %v575
                %v577 = vld [vmem:[%s569 + $0x18] sm:%s562]
                %578 = vst [vmem:[%s570 + $0x78] sm:%s562] %v577
                %v579 = vld [vmem:[%s569 + $0x20] sm:%s562]
                %580 = vst [vmem:[%s570 + $0xa0] sm:%s562] %v579
                %v581 = vld [vmem:[%s569 + $0x28] sm:%s562]
                %582 = vst [vmem:[%s570 + $0xc8] sm:%s562] %v581
                %v583 = vld [vmem:[%s569 + $0x30] sm:%s562]
                %584 = vst [vmem:[%s570 + $0xf0] sm:%s562] %v583
                %v585 = vld [vmem:[%s569 + $0x38] sm:%s562]
                %586 = vst [vmem:[%s570 + $0x118] sm:%s562] %v585
              $region133: #{cross_feature_affinity_pooling.3} parent=127 // loop_footer
                %s568 = sadd.s32 1, %s564
              $region134: #{cross_feature_affinity_pooling.3} parent=127 // loop_footer_branch
                %563 = sbr.rel target = $region130
              $region135: #{cross_feature_affinity_pooling.3} parent=127 // loop_exit
                _
            $region128: #{cross_feature_affinity_pooling.3} parent=119 // pred_fallthru
              _
          $region120: #{cross_feature_affinity_pooling.3} parent=115 // pred_fallthru
            _
          %615 = vnop
        $region116: #{cross_feature_affinity_pooling.3} parent=103 // pred_fallthru
          _
      $region104: #{cross_feature_affinity_pooling.3} parent=5 // pred_fallthru
        _
      %p616 = scmp.le.s32.totalorder 2, %s10
      // Predicated region
      $region151: #{cross_feature_affinity_pooling.3} parent=5 // pred_check
        %p617 = pneg %p616
      $region152: #{cross_feature_affinity_pooling.3} parent=5 // pred_check_branch
        %619 = sbr.rel (%p617) target = $region154
      $region153: #{cross_feature_affinity_pooling.3} parent=5 // pred_region
        %s620 = ssub.s32 %s10, 2
        // Predicated region
        $region155: #{cross_feature_affinity_pooling.3} parent=153 // pred_check
          %p621 = pneg %p161
        $region156: #{cross_feature_affinity_pooling.3} parent=153 // pred_check_branch
          %623 = sbr.rel (%p621) target = $region158
        $region157: #{cross_feature_affinity_pooling.3} parent=153 // pred_region
          %s624 = sand.u32 %s146, 1
          %s625 = sand.u32 %s146, 1
          %s626 = smul.addr %s625, 64
          %s627 = scalar_lea.vmem [#allocation4], %s626
        $region158: #{cross_feature_affinity_pooling.3} parent=153 // pred_fallthru
          _
      $region154: #{cross_feature_affinity_pooling.3} parent=5 // pred_fallthru
        _
    $region6: #{cross_feature_affinity_pooling.3} parent=1 // loop_footer
      %s14 = sadd.s32 1, %s10
    $region7: #{cross_feature_affinity_pooling.3} parent=1 // loop_footer_branch
      %9 = sbr.rel target = $region3
    $region8: #{cross_feature_affinity_pooling.3} parent=1 // loop_exit
      _

// kernel: cross_feature_affinity_pooling.2
$region0: #{cross_feature_affinity_pooling.2}
  #allocation0 [shape = 'u32[]', space=smem, size = 0x4, offset = 0x4, fixed_abs, tag = 'smem constant byte address 0x4 - core index']
  #allocation1 [shape = 'u32[144,128]{1,0:T(1,128)}', space=vmem, size = 0x12000, scoped, tag = 'internal scratch']
  #allocation2 [shape = 'bf16[128,64]{1,0:T(8,128)(2,1)}', space=vmem, size = 0x8000, scoped, tag = 'scratch operand']
  #allocation3 [shape = 'f32[128,1]{1,0:T(8,128)}', space=vmem, size = 0x10000, scoped, tag = 'scratch operand']
  #allocation4 [shape = 'f32[128,1]{1,0:T(8,128)}', space=vmem, size = 0x10000, scoped, tag = 'scratch operand']
  #allocation5 [shape = 'f32[128,64]{1,0:T(8,128)}', space=vmem, size = 0x10000, scoped, tag = 'scratch operand']
  %s0 = inlined_call_operand.vmem [shape: f32[2,64,640], index: 0, kind: input, shape index: {}]
  %s1 = inlined_call_operand.vmem [shape: f32[2,64,640], index: 1, kind: input, shape index: {}]
  %s2 = inlined_call_operand.vmem [shape: bf16[64,64], index: 2, kind: input, shape index: {}]
  %s3 = inlined_call_operand.vmem [shape: f32[64,1], index: 3, kind: input, shape index: {}]
  %s4 = inlined_call_operand.vmem [shape: bf16[64,64], index: 4, kind: input, shape index: {}]
  %s5 = inlined_call_operand.vmem [shape: f32[64,1], index: 5, kind: input, shape index: {}]
  %s6 = inlined_call_operand.vmem [shape: f32[2,64,640], index: 6, kind: output, shape index: {0}]
  %s7 = inlined_call_operand.vmem [shape: f32[2,5,1,64], index: 7, kind: output, shape index: {1}]
  %s8 = inlined_call_operand.vmem [shape: f32[2,5,1,64], index: 8, kind: output, shape index: {2}]
  %9 = xla_tuple %s6, %s7, %s8
  %s10 = sld [smem:[#allocation0]]
  $region191: #{cross_feature_affinity_pooling.2} parent=0
    _
  %s12 = ssub.s32 1, %s10
  %s13 = scalar_select 0, %s12, %s10
  $region1: #{cross_feature_affinity_pooling.2} parent=0
    #allocation6 [shape = 'u8[65536]{0}', space=vmem, size = 0x10000, scoped, tag = 'input window, operand 0']
    #allocation7 [shape = 'u8[65536]{0}', space=vmem, size = 0x10000, scoped, tag = 'input window, operand 1']
    #allocation8 [shape = 'u8[65536]{0}', space=vmem, size = 0x10000, scoped, tag = 'output window, operand 0']
    loop: start=0, step=1, limit=52
    $region2: #{cross_feature_affinity_pooling.2} parent=1 // loop_pre_header
      _
    $region3: #{cross_feature_affinity_pooling.2} parent=1 // loop_header
      %s15 = sphi 0, %s19
      %p16 = scmp.ge.s32.totalorder %s15, 52
      %s22 = sphi 0, %s41
      %s23 = sphi 0, %s37
      %s24 = sphi 0, %s33
      %s25 = sphi 0, %s22
      %s26 = sphi 0, %s23
      %s27 = sphi 0, %s24
      %s28 = sphi 0, %s25
      %s29 = sphi 0, %s26
      %s30 = sphi 0, %s27
      %s46 = sphi 0, %s48
      %s49 = sphi 0, %s46
      %s50 = sphi 0, %s49
      %s66 = sphi 0, %s50
      %s74 = sphi 0, %s76
      %s77 = sphi 0, %s74
      %s78 = sphi 0, %s77
      %s94 = sphi 0, %s78
      %s98 = sphi 0, %s98
      %s100 = sphi 0, %s98
      %s101 = sphi 0, %s100
      %s115 = sphi 0, %s101
      %s119 = sphi 0, %s119
      %s121 = sphi 0, %s119
      %s122 = sphi 0, %s121
      %s136 = sphi 0, %s122
      %s140 = sphi 0, %s140
      %s142 = sphi 0, %s140
      %s143 = sphi 0, %s142
      %s157 = sphi 0, %s143
      %s161 = sphi 0, %s161
      %s163 = sphi 0, %s161
      %s164 = sphi 0, %s163
      %s178 = sphi 0, %s164
      %s186 = sphi 0, %s188
      %s189 = sphi 0, %s186
      %s190 = sphi 0, %s189
      %s206 = sphi 0, %s190
      %s214 = sphi 0, %s216
      %s217 = sphi 0, %s214
      %s218 = sphi 0, %s217
      %s234 = sphi 0, %s218
      %s242 = sphi 0, %s244
      %s245 = sphi 0, %s242
      %s246 = sphi 0, %s245
      %s262 = sphi 0, %s246
    $region4: #{cross_feature_affinity_pooling.2} parent=1 // loop_header_branch
      %18 = sbr.rel (%p16) target = $region8
    $region5: #{cross_feature_affinity_pooling.2} parent=1 // loop_body
      %s20 = ssub.s32 %s15, 1
      %s21 = ssub.s32 %s15, 2
      %s31 = sadd.s32 1, %s24
      %p32 = scmp.ge.s32.totalorder %s31, 5
      %s33 = scalar_select %p32, 0, %s31
      %s34 = sadd.s32 1, %s23
      %s35 = scalar_select %p32, %s34, %s23
      %p36 = scmp.ge.s32.totalorder %s35, 5
      %s37 = scalar_select %p36, 0, %s35
      %s38 = sadd.s32 1, %s22
      %s39 = scalar_select %p36, %s38, %s22
      %p40 = scmp.ge.s32.totalorder %s39, 2
      %s41 = scalar_select %p40, 0, %s39
      %s42 = ssub.s32 %s22, %s41
      %s43 = ssub.s32 %s23, %s37
      %s44 = sor.u32 %s42, %s43
      %p45 = scmp.eq.s32.totalorder %s44, 0
      %s47 = sadd.s32 %s46, 1
      %s48 = scalar_select %p45, %s46, %s47
      %p51 = pneg %p45
      %p52 = scmp.eq.s32.totalorder %s15, 49
      %p53 = por %p51, %p52
      %p54 = scmp.ne.s32.totalorder %s46, %s49
      %p55 = scmp.eq.s32.totalorder %s15, 0
      %p56 = por %p54, %p55
      %p57 = scmp.ne.s32.totalorder %s46, %s49
      %p58 = scmp.eq.s32.totalorder %s20, 49
      %p59 = por %p57, %p58
      %p60 = scmp.ne.s32.totalorder %s49, %s50
      %p61 = scmp.eq.s32.totalorder %s20, 0
      %p62 = por %p60, %p61
      %p63 = scmp.ne.s32.totalorder %s49, %s50
      %p64 = scmp.eq.s32.totalorder %s21, 49
      %p65 = por %p63, %p64
      %p67 = scmp.ne.s32.totalorder %s50, %s66
      %p68 = scmp.eq.s32.totalorder %s21, 0
      %p69 = por %p67, %p68
      %s70 = ssub.s32 %s22, %s41
      %s71 = ssub.s32 %s24, %s33
      %s72 = sor.u32 %s70, %s71
      %p73 = scmp.eq.s32.totalorder %s72, 0
      %s75 = sadd.s32 %s74, 1
      %s76 = scalar_select %p73, %s74, %s75
      %p79 = pneg %p73
      %p80 = scmp.eq.s32.totalorder %s15, 49
      %p81 = por %p79, %p80
      %p82 = scmp.ne.s32.totalorder %s74, %s77
      %p83 = scmp.eq.s32.totalorder %s15, 0
      %p84 = por %p82, %p83
      %p85 = scmp.ne.s32.totalorder %s74, %s77
      %p86 = scmp.eq.s32.totalorder %s20, 49
      %p87 = por %p85, %p86
      %p88 = scmp.ne.s32.totalorder %s77, %s78
      %p89 = scmp.eq.s32.totalorder %s20, 0
      %p90 = por %p88, %p89
      %p91 = scmp.ne.s32.totalorder %s77, %s78
      %p92 = scmp.eq.s32.totalorder %s21, 49
      %p93 = por %p91, %p92
      %p95 = scmp.ne.s32.totalorder %s78, %s94
      %p96 = scmp.eq.s32.totalorder %s21, 0
      %p97 = por %p95, %p96
      %s99 = sadd.s32 %s98, 1
      %p102 = scmp.eq.s32.totalorder %s15, 49
      %p103 = scmp.ne.s32.totalorder %s98, %s100
      %p104 = scmp.eq.s32.totalorder %s15, 0
      %p105 = por %p103, %p104
      %p106 = scmp.ne.s32.totalorder %s98, %s100
      %p107 = scmp.eq.s32.totalorder %s20, 49
      %p108 = por %p106, %p107
      %p109 = scmp.ne.s32.totalorder %s100, %s101
      %p110 = scmp.eq.s32.totalorder %s20, 0
      %p111 = por %p109, %p110
      %p112 = scmp.ne.s32.totalorder %s100, %s101
      %p113 = scmp.eq.s32.totalorder %s21, 49
      %p114 = por %p112, %p113
      %p116 = scmp.ne.s32.totalorder %s101, %s115
      %p117 = scmp.eq.s32.totalorder %s21, 0
      %p118 = por %p116, %p117
      %s120 = sadd.s32 %s119, 1
      %p123 = scmp.eq.s32.totalorder %s15, 49
      %p124 = scmp.ne.s32.totalorder %s119, %s121
      %p125 = scmp.eq.s32.totalorder %s15, 0
      %p126 = por %p124, %p125
      %p127 = scmp.ne.s32.totalorder %s119, %s121
      %p128 = scmp.eq.s32.totalorder %s20, 49
      %p129 = por %p127, %p128
      %p130 = scmp.ne.s32.totalorder %s121, %s122
      %p131 = scmp.eq.s32.totalorder %s20, 0
      %p132 = por %p130, %p131
      %p133 = scmp.ne.s32.totalorder %s121, %s122
      %p134 = scmp.eq.s32.totalorder %s21, 49
      %p135 = por %p133, %p134
      %p137 = scmp.ne.s32.totalorder %s122, %s136
      %p138 = scmp.eq.s32.totalorder %s21, 0
      %p139 = por %p137, %p138
      %s141 = sadd.s32 %s140, 1
      %p144 = scmp.eq.s32.totalorder %s15, 49
      %p145 = scmp.ne.s32.totalorder %s140, %s142
      %p146 = scmp.eq.s32.totalorder %s15, 0
      %p147 = por %p145, %p146
      %p148 = scmp.ne.s32.totalorder %s140, %s142
      %p149 = scmp.eq.s32.totalorder %s20, 49
      %p150 = por %p148, %p149
      %p151 = scmp.ne.s32.totalorder %s142, %s143
      %p152 = scmp.eq.s32.totalorder %s20, 0
      %p153 = por %p151, %p152
      %p154 = scmp.ne.s32.totalorder %s142, %s143
      %p155 = scmp.eq.s32.totalorder %s21, 49
      %p156 = por %p154, %p155
      %p158 = scmp.ne.s32.totalorder %s143, %s157
      %p159 = scmp.eq.s32.totalorder %s21, 0
      %p160 = por %p158, %p159
      %s162 = sadd.s32 %s161, 1
      %p165 = scmp.eq.s32.totalorder %s15, 49
      %p166 = scmp.ne.s32.totalorder %s161, %s163
      %p167 = scmp.eq.s32.totalorder %s15, 0
      %p168 = por %p166, %p167
      %p169 = scmp.ne.s32.totalorder %s161, %s163
      %p170 = scmp.eq.s32.totalorder %s20, 49
      %p171 = por %p169, %p170
      %p172 = scmp.ne.s32.totalorder %s163, %s164
      %p173 = scmp.eq.s32.totalorder %s20, 0
      %p174 = por %p172, %p173
      %p175 = scmp.ne.s32.totalorder %s163, %s164
      %p176 = scmp.eq.s32.totalorder %s21, 49
      %p177 = por %p175, %p176
      %p179 = scmp.ne.s32.totalorder %s164, %s178
      %p180 = scmp.eq.s32.totalorder %s21, 0
      %p181 = por %p179, %p180
      %s182 = ssub.s32 %s22, %s41
      %s183 = ssub.s32 %s23, %s37
      %s184 = sor.u32 %s182, %s183
      %p185 = scmp.eq.s32.totalorder %s184, 0
      %s187 = sadd.s32 %s186, 1
      %s188 = scalar_select %p185, %s186, %s187
      %p191 = pneg %p185
      %p192 = scmp.eq.s32.totalorder %s15, 49
      %p193 = por %p191, %p192
      %p194 = scmp.ne.s32.totalorder %s186, %s189
      %p195 = scmp.eq.s32.totalorder %s15, 0
      %p196 = por %p194, %p195
      %p197 = scmp.ne.s32.totalorder %s186, %s189
      %p198 = scmp.eq.s32.totalorder %s20, 49
      %p199 = por %p197, %p198
      %p200 = scmp.ne.s32.totalorder %s189, %s190
      %p201 = scmp.eq.s32.totalorder %s20, 0
      %p202 = por %p200, %p201
      %p203 = scmp.ne.s32.totalorder %s189, %s190
      %p204 = scmp.eq.s32.totalorder %s21, 49
      %p205 = por %p203, %p204
      %p207 = scmp.ne.s32.totalorder %s190, %s206
      %p208 = scmp.eq.s32.totalorder %s21, 0
      %p209 = por %p207, %p208
      %s210 = ssub.s32 %s22, %s41
      %s211 = ssub.s32 %s23, %s37
      %s212 = sor.u32 %s210, %s211
      %p213 = scmp.eq.s32.totalorder %s212, 0
      %s215 = sadd.s32 %s214, 1
      %s216 = scalar_select %p213, %s214, %s215
      %p219 = pneg %p213
      %p220 = scmp.eq.s32.totalorder %s15, 49
      %p221 = por %p219, %p220
      %p222 = scmp.ne.s32.totalorder %s214, %s217
      %p223 = scmp.eq.s32.totalorder %s15, 0
      %p224 = por %p222, %p223
      %p225 = scmp.ne.s32.totalorder %s214, %s217
      %p226 = scmp.eq.s32.totalorder %s20, 49
      %p227 = por %p225, %p226
      %p228 = scmp.ne.s32.totalorder %s217, %s218
      %p229 = scmp.eq.s32.totalorder %s20, 0
      %p230 = por %p228, %p229
      %p231 = scmp.ne.s32.totalorder %s217, %s218
      %p232 = scmp.eq.s32.totalorder %s21, 49
      %p233 = por %p231, %p232
      %p235 = scmp.ne.s32.totalorder %s218, %s234
      %p236 = scmp.eq.s32.totalorder %s21, 0
      %p237 = por %p235, %p236
      %s238 = ssub.s32 %s22, %s41
      %s239 = ssub.s32 %s23, %s37
      %s240 = sor.u32 %s238, %s239
      %p241 = scmp.eq.s32.totalorder %s240, 0
      %s243 = sadd.s32 %s242, 1
      %s244 = scalar_select %p241, %s242, %s243
      %p247 = pneg %p241
      %p248 = scmp.eq.s32.totalorder %s15, 49
      %p249 = por %p247, %p248
      %p250 = scmp.ne.s32.totalorder %s242, %s245
      %p251 = scmp.eq.s32.totalorder %s15, 0
      %p252 = por %p250, %p251
      %p253 = scmp.ne.s32.totalorder %s242, %s245
      %p254 = scmp.eq.s32.totalorder %s20, 49
      %p255 = por %p253, %p254
      %p256 = scmp.ne.s32.totalorder %s245, %s246
      %p257 = scmp.eq.s32.totalorder %s20, 0
      %p258 = por %p256, %p257
      %p259 = scmp.ne.s32.totalorder %s245, %s246
      %p260 = scmp.eq.s32.totalorder %s21, 49
      %p261 = por %p259, %p260
      %p263 = scmp.ne.s32.totalorder %s246, %s262
      %p264 = scmp.eq.s32.totalorder %s21, 0
      %p265 = por %p263, %p264
      %p266 = scmp.le.s32.totalorder 1, %s15
      %p267 = scmp.lt.s32.totalorder %s15, 51
      %p268 = pnand %p266, %p267
      %p269 = pneg %p268
      // Predicated region
      $region9: #{cross_feature_affinity_pooling.2} parent=5 // pred_check
        _
      $region10: #{cross_feature_affinity_pooling.2} parent=5 // pred_check_branch
        %271 = sbr.rel (%p268) target = $region12
      $region11: #{cross_feature_affinity_pooling.2} parent=5 // pred_region
        %s272 = ssub.s32 %s15, 1
        // Predicated region
        $region13: #{cross_feature_affinity_pooling.2} parent=11 // pred_check
          %p273 = pneg %p111
        $region14: #{cross_feature_affinity_pooling.2} parent=11 // pred_check_branch
          %275 = sbr.rel (%p273) target = $region16
        $region15: #{cross_feature_affinity_pooling.2} parent=11 // pred_region
          _
        $region16: #{cross_feature_affinity_pooling.2} parent=11 // pred_fallthru
          _
        // Predicated region
        $region17: #{cross_feature_affinity_pooling.2} parent=11 // pred_check
          %p276 = pneg %p132
        $region18: #{cross_feature_affinity_pooling.2} parent=11 // pred_check_branch
          %278 = sbr.rel (%p276) target = $region20
        $region19: #{cross_feature_affinity_pooling.2} parent=11 // pred_region
          _
        $region20: #{cross_feature_affinity_pooling.2} parent=11 // pred_fallthru
          _
        // Predicated region
        $region21: #{cross_feature_affinity_pooling.2} parent=11 // pred_check
          %p279 = pneg %p153
        $region22: #{cross_feature_affinity_pooling.2} parent=11 // pred_check_branch
          %281 = sbr.rel (%p279) target = $region24
        $region23: #{cross_feature_affinity_pooling.2} parent=11 // pred_region
          _
        $region24: #{cross_feature_affinity_pooling.2} parent=11 // pred_fallthru
          _
        // Predicated region
        $region25: #{cross_feature_affinity_pooling.2} parent=11 // pred_check
          %p282 = pneg %p174
        $region26: #{cross_feature_affinity_pooling.2} parent=11 // pred_check_branch
          %284 = sbr.rel (%p282) target = $region28
        $region27: #{cross_feature_affinity_pooling.2} parent=11 // pred_region
          _
        $region28: #{cross_feature_affinity_pooling.2} parent=11 // pred_fallthru
          _
      $region12: #{cross_feature_affinity_pooling.2} parent=5 // pred_fallthru
        _
      %p285 = scmp.lt.s32.totalorder %s15, 50
      // Predicated region
      $region29: #{cross_feature_affinity_pooling.2} parent=5 // pred_check
        %p286 = pneg %p285
      $region30: #{cross_feature_affinity_pooling.2} parent=5 // pred_check_branch
        %288 = sbr.rel (%p286) target = $region32
      $region31: #{cross_feature_affinity_pooling.2} parent=5 // pred_region
        // Predicated region
        $region33: #{cross_feature_affinity_pooling.2} parent=31 // pred_check
          %p289 = pneg %p56
        $region34: #{cross_feature_affinity_pooling.2} parent=31 // pred_check_branch
          %291 = sbr.rel (%p289) target = $region36
        $region35: #{cross_feature_affinity_pooling.2} parent=31 // pred_region
          %s292 = sand.u32 %s46, 1
          %s293 = sand.u32 %s46, 1
          %s294 = smul.addr %s293, 64
          %s295 = scalar_lea.vmem [#allocation6], %s294
          %s296 = smul.addr %s22, 40
          %s297 = sadd.s32 %s23, %s296
          %s298 = smul.addr %s297, 8
          %s299 = scalar_lea.vmem %s0, %s298
          // Predicated region
          $region37: #{cross_feature_affinity_pooling.2} parent=35 // pred_check
            _
          $region38: #{cross_feature_affinity_pooling.2} parent=35 // pred_check_branch
            %301 = sbr.rel (0) target = $region40
          $region39: #{cross_feature_affinity_pooling.2} parent=35 // pred_region
            // Predicated region
            $region41: #{cross_feature_affinity_pooling.2} parent=39 // pred_check
              _
            $region42: #{cross_feature_affinity_pooling.2} parent=39 // pred_check_branch
              %303 = sbr.rel (0) target = $region44
            $region43: #{cross_feature_affinity_pooling.2} parent=39 // pred_region
              // Predicated region
              $region56: #{cross_feature_affinity_pooling.2} parent=43 // pred_check
                _
              $region57: #{cross_feature_affinity_pooling.2} parent=43 // pred_check_branch
                %333 = sbr.rel (0) target = $region59
              $region58: #{cross_feature_affinity_pooling.2} parent=43 // pred_region
                loop: start=0, step=1, limit=1
                $region60: #{cross_feature_affinity_pooling.2} parent=58 // loop_pre_header
                  _
                $region61: #{cross_feature_affinity_pooling.2} parent=58 // loop_header
                  %s335 = sphi 0, %s339
                  %p336 = scmp.ge.s32.totalorder %s335, 1
                  %s340 = sphi %s299, %s299
                  %s341 = sphi %s295, %s295
                $region62: #{cross_feature_affinity_pooling.2} parent=58 // loop_header_branch
                  %338 = sbr.rel (%p336) target = $region66
                $region63: #{cross_feature_affinity_pooling.2} parent=58 // loop_body
                  %v342 = vld [vmem:[%s340] sm:$0xff]
                  %343 = vst [vmem:[%s341] sm:$0xff] %v342
                  %v344 = vld [vmem:[%s340 + $0x28] sm:$0xff]
                  %345 = vst [vmem:[%s341 + $0x8] sm:$0xff] %v344
                  %v346 = vld [vmem:[%s340 + $0x50] sm:$0xff]
                  %347 = vst [vmem:[%s341 + $0x10] sm:$0xff] %v346
                  %v348 = vld [vmem:[%s340 + $0x78] sm:$0xff]
                  %349 = vst [vmem:[%s341 + $0x18] sm:$0xff] %v348
                  %v350 = vld [vmem:[%s340 + $0xa0] sm:$0xff]
                  %351 = vst [vmem:[%s341 + $0x20] sm:$0xff] %v350
                  %v352 = vld [vmem:[%s340 + $0xc8] sm:$0xff]
                  %353 = vst [vmem:[%s341 + $0x28] sm:$0xff] %v352
                  %v354 = vld [vmem:[%s340 + $0xf0] sm:$0xff]
                  %355 = vst [vmem:[%s341 + $0x30] sm:$0xff] %v354
                  %v356 = vld [vmem:[%s340 + $0x118] sm:$0xff]
                  %357 = vst [vmem:[%s341 + $0x38] sm:$0xff] %v356
                $region64: #{cross_feature_affinity_pooling.2} parent=58 // loop_footer
                  %s339 = sadd.s32 1, %s335
                $region65: #{cross_feature_affinity_pooling.2} parent=58 // loop_footer_branch
                  %334 = sbr.rel target = $region61
                $region66: #{cross_feature_affinity_pooling.2} parent=58 // loop_exit
                  _
              $region59: #{cross_feature_affinity_pooling.2} parent=43 // pred_fallthru
                _
              // Predicated region
              $region67: #{cross_feature_affinity_pooling.2} parent=43 // pred_check
                _
              $region68: #{cross_feature_affinity_pooling.2} parent=43 // pred_check_branch
                %359 = sbr.rel target = $region70
              $region69: #{cross_feature_affinity_pooling.2} parent=43 // pred_region
                _
              $region70: #{cross_feature_affinity_pooling.2} parent=43 // pred_fallthru
                _
            $region44: #{cross_feature_affinity_pooling.2} parent=39 // pred_fallthru
              _
            // Predicated region
            $region45: #{cross_feature_affinity_pooling.2} parent=39 // pred_check
              _
            $region46: #{cross_feature_affinity_pooling.2} parent=39 // pred_check_branch
              %305 = sbr.rel target = $region48
            $region47: #{cross_feature_affinity_pooling.2} parent=39 // pred_region
              %s307 = ssub.s32 256, 1
              loop: start=0, step=1, limit=1
              $region49: #{cross_feature_affinity_pooling.2} parent=47 // loop_pre_header
                _
              $region50: #{cross_feature_affinity_pooling.2} parent=47 // loop_header
                %s309 = sphi 0, %s313
                %p310 = scmp.ge.s32.totalorder %s309, 1
                %s314 = sphi %s299, %s299
                %s315 = sphi %s295, %s295
              $region51: #{cross_feature_affinity_pooling.2} parent=47 // loop_header_branch
                %312 = sbr.rel (%p310) target = $region55
              $region52: #{cross_feature_affinity_pooling.2} parent=47 // loop_body
                %v316 = vld [vmem:[%s314] sm:%s307]
                %317 = vst [vmem:[%s315] sm:%s307] %v316
                %v318 = vld [vmem:[%s314 + $0x28] sm:%s307]
                %319 = vst [vmem:[%s315 + $0x8] sm:%s307] %v318
                %v320 = vld [vmem:[%s314 + $0x50] sm:%s307]
                %321 = vst [vmem:[%s315 + $0x10] sm:%s307] %v320
                %v322 = vld [vmem:[%s314 + $0x78] sm:%s307]
                %323 = vst [vmem:[%s315 + $0x18] sm:%s307] %v322
                %v324 = vld [vmem:[%s314 + $0xa0] sm:%s307]
                %325 = vst [vmem:[%s315 + $0x20] sm:%s307] %v324
                %v326 = vld [vmem:[%s314 + $0xc8] sm:%s307]
                %327 = vst [vmem:[%s315 + $0x28] sm:%s307] %v326
                %v328 = vld [vmem:[%s314 + $0xf0] sm:%s307]
                %329 = vst [vmem:[%s315 + $0x30] sm:%s307] %v328
                %v330 = vld [vmem:[%s314 + $0x118] sm:%s307]
                %331 = vst [vmem:[%s315 + $0x38] sm:%s307] %v330
              $region53: #{cross_feature_affinity_pooling.2} parent=47 // loop_footer
                %s313 = sadd.s32 1, %s309
              $region54: #{cross_feature_affinity_pooling.2} parent=47 // loop_footer_branch
                %308 = sbr.rel target = $region50
              $region55: #{cross_feature_affinity_pooling.2} parent=47 // loop_exit
                _
            $region48: #{cross_feature_affinity_pooling.2} parent=39 // pred_fallthru
              _
          $region40: #{cross_feature_affinity_pooling.2} parent=35 // pred_fallthru
            _
          %360 = vnop
        $region36: #{cross_feature_affinity_pooling.2} parent=31 // pred_fallthru
          _
        // Predicated region
        $region71: #{cross_feature_affinity_pooling.2} parent=31 // pred_check
          %p361 = pneg %p84
        $region72: #{cross_feature_affinity_pooling.2} parent=31 // pred_check_branch
          %363 = sbr.rel (%p361) target = $region74
        $region73: #{cross_feature_affinity_pooling.2} parent=31 // pred_region
          %s364 = sand.u32 %s74, 1
          %s365 = sand.u32 %s74, 1
          %s366 = smul.addr %s365, 64
          %s367 = scalar_lea.vmem [#allocation7], %s366
          %s368 = smul.addr %s22, 40
          %s369 = sadd.s32 %s24, %s368
          %s370 = smul.addr %s369, 8
          %s371 = scalar_lea.vmem %s1, %s370
          // Predicated region
          $region75: #{cross_feature_affinity_pooling.2} parent=73 // pred_check
            _
          $region76: #{cross_feature_affinity_pooling.2} parent=73 // pred_check_branch
            %373 = sbr.rel (0) target = $region78
          $region77: #{cross_feature_affinity_pooling.2} parent=73 // pred_region
            // Predicated region
            $region79: #{cross_feature_affinity_pooling.2} parent=77 // pred_check
              _
            $region80: #{cross_feature_affinity_pooling.2} parent=77 // pred_check_branch
              %375 = sbr.rel (0) target = $region82
            $region81: #{cross_feature_affinity_pooling.2} parent=77 // pred_region
              // Predicated region
              $region94: #{cross_feature_affinity_pooling.2} parent=81 // pred_check
                _
              $region95: #{cross_feature_affinity_pooling.2} parent=81 // pred_check_branch
                %405 = sbr.rel (0) target = $region97
              $region96: #{cross_feature_affinity_pooling.2} parent=81 // pred_region
                loop: start=0, step=1, limit=1
                $region98: #{cross_feature_affinity_pooling.2} parent=96 // loop_pre_header
                  _
                $region99: #{cross_feature_affinity_pooling.2} parent=96 // loop_header
                  %s407 = sphi 0, %s411
                  %p408 = scmp.ge.s32.totalorder %s407, 1
                  %s412 = sphi %s371, %s371
                  %s413 = sphi %s367, %s367
                $region100: #{cross_feature_affinity_pooling.2} parent=96 // loop_header_branch
                  %410 = sbr.rel (%p408) target = $region104
                $region101: #{cross_feature_affinity_pooling.2} parent=96 // loop_body
                  %v414 = vld [vmem:[%s412] sm:$0xff]
                  %415 = vst [vmem:[%s413] sm:$0xff] %v414
                  %v416 = vld [vmem:[%s412 + $0x28] sm:$0xff]
                  %417 = vst [vmem:[%s413 + $0x8] sm:$0xff] %v416
                  %v418 = vld [vmem:[%s412 + $0x50] sm:$0xff]
                  %419 = vst [vmem:[%s413 + $0x10] sm:$0xff] %v418
                  %v420 = vld [vmem:[%s412 + $0x78] sm:$0xff]
                  %421 = vst [vmem:[%s413 + $0x18] sm:$0xff] %v420
                  %v422 = vld [vmem:[%s412 + $0xa0] sm:$0xff]
                  %423 = vst [vmem:[%s413 + $0x20] sm:$0xff] %v422
                  %v424 = vld [vmem:[%s412 + $0xc8] sm:$0xff]
                  %425 = vst [vmem:[%s413 + $0x28] sm:$0xff] %v424
                  %v426 = vld [vmem:[%s412 + $0xf0] sm:$0xff]
                  %427 = vst [vmem:[%s413 + $0x30] sm:$0xff] %v426
                  %v428 = vld [vmem:[%s412 + $0x118] sm:$0xff]
                  %429 = vst [vmem:[%s413 + $0x38] sm:$0xff] %v428
                $region102: #{cross_feature_affinity_pooling.2} parent=96 // loop_footer
                  %s411 = sadd.s32 1, %s407
                $region103: #{cross_feature_affinity_pooling.2} parent=96 // loop_footer_branch
                  %406 = sbr.rel target = $region99
                $region104: #{cross_feature_affinity_pooling.2} parent=96 // loop_exit
                  _
              $region97: #{cross_feature_affinity_pooling.2} parent=81 // pred_fallthru
                _
              // Predicated region
              $region105: #{cross_feature_affinity_pooling.2} parent=81 // pred_check
                _
              $region106: #{cross_feature_affinity_pooling.2} parent=81 // pred_check_branch
                %431 = sbr.rel target = $region108
              $region107: #{cross_feature_affinity_pooling.2} parent=81 // pred_region
                _
              $region108: #{cross_feature_affinity_pooling.2} parent=81 // pred_fallthru
                _
            $region82: #{cross_feature_affinity_pooling.2} parent=77 // pred_fallthru
              _
            // Predicated region
            $region83: #{cross_feature_affinity_pooling.2} parent=77 // pred_check
              _
            $region84: #{cross_feature_affinity_pooling.2} parent=77 // pred_check_branch
              %377 = sbr.rel target = $region86
            $region85: #{cross_feature_affinity_pooling.2} parent=77 // pred_region
              %s379 = ssub.s32 256, 1
              loop: start=0, step=1, limit=1
              $region87: #{cross_feature_affinity_pooling.2} parent=85 // loop_pre_header
                _
              $region88: #{cross_feature_affinity_pooling.2} parent=85 // loop_header
                %s381 = sphi 0, %s385
                %p382 = scmp.ge.s32.totalorder %s381, 1
                %s386 = sphi %s371, %s371
                %s387 = sphi %s367, %s367
              $region89: #{cross_feature_affinity_pooling.2} parent=85 // loop_header_branch
                %384 = sbr.rel (%p382) target = $region93
              $region90: #{cross_feature_affinity_pooling.2} parent=85 // loop_body
                %v388 = vld [vmem:[%s386] sm:%s379]
                %389 = vst [vmem:[%s387] sm:%s379] %v388
                %v390 = vld [vmem:[%s386 + $0x28] sm:%s379]
                %391 = vst [vmem:[%s387 + $0x8] sm:%s379] %v390
                %v392 = vld [vmem:[%s386 + $0x50] sm:%s379]
                %393 = vst [vmem:[%s387 + $0x10] sm:%s379] %v392
                %v394 = vld [vmem:[%s386 + $0x78] sm:%s379]
                %395 = vst [vmem:[%s387 + $0x18] sm:%s379] %v394
                %v396 = vld [vmem:[%s386 + $0xa0] sm:%s379]
                %397 = vst [vmem:[%s387 + $0x20] sm:%s379] %v396
                %v398 = vld [vmem:[%s386 + $0xc8] sm:%s379]
                %399 = vst [vmem:[%s387 + $0x28] sm:%s379] %v398
                %v400 = vld [vmem:[%s386 + $0xf0] sm:%s379]
                %401 = vst [vmem:[%s387 + $0x30] sm:%s379] %v400
                %v402 = vld [vmem:[%s386 + $0x118] sm:%s379]
                %403 = vst [vmem:[%s387 + $0x38] sm:%s379] %v402
              $region91: #{cross_feature_affinity_pooling.2} parent=85 // loop_footer
                %s385 = sadd.s32 1, %s381
              $region92: #{cross_feature_affinity_pooling.2} parent=85 // loop_footer_branch
                %380 = sbr.rel target = $region88
              $region93: #{cross_feature_affinity_pooling.2} parent=85 // loop_exit
                _
            $region86: #{cross_feature_affinity_pooling.2} parent=77 // pred_fallthru
              _
          $region78: #{cross_feature_affinity_pooling.2} parent=73 // pred_fallthru
            _
          %432 = vnop
        $region74: #{cross_feature_affinity_pooling.2} parent=31 // pred_fallthru
          _
      $region32: #{cross_feature_affinity_pooling.2} parent=5 // pred_fallthru
        _
      %p433 = scmp.le.s32.totalorder 1, %s15
      %p434 = scmp.lt.s32.totalorder %s15, 51
      %p435 = pnand %p433, %p434
      %p436 = pneg %p435
      // Predicated region
      $region109: #{cross_feature_affinity_pooling.2} parent=5 // pred_check
        _
      $region110: #{cross_feature_affinity_pooling.2} parent=5 // pred_check_branch
        %438 = sbr.rel (%p435) target = $region112
      $region111: #{cross_feature_affinity_pooling.2} parent=5 // pred_region
        %s439 = ssub.s32 %s15, 1
        %s440 = sand.u32 %s49, 1
        %s441 = sand.u32 %s49, 1
        %s442 = smul.addr %s441, 64
        %s443 = scalar_lea.vmem [#allocation6], %s442
        // Predicated region
        $region113: #{cross_feature_affinity_pooling.2} parent=111 // pred_check
          %p444 = pneg %p62
        $region114: #{cross_feature_affinity_pooling.2} parent=111 // pred_check_branch
          %446 = sbr.rel (%p444) target = $region116
        $region115: #{cross_feature_affinity_pooling.2} parent=111 // pred_region
          _
        $region116: #{cross_feature_affinity_pooling.2} parent=111 // pred_fallthru
          _
        %s447 = sand.u32 %s77, 1
        %s448 = sand.u32 %s77, 1
        %s449 = smul.addr %s448, 64
        %s450 = scalar_lea.vmem [#allocation7], %s449
        // Predicated region
        $region117: #{cross_feature_affinity_pooling.2} parent=111 // pred_check
          %p451 = pneg %p90
        $region118: #{cross_feature_affinity_pooling.2} parent=111 // pred_check_branch
          %453 = sbr.rel (%p451) target = $region120
        $region119: #{cross_feature_affinity_pooling.2} parent=111 // pred_region
          _
        $region120: #{cross_feature_affinity_pooling.2} parent=111 // pred_fallthru
          _
        %s454 = sand.u32 %s49, 1
        %s455 = sand.u32 %s49, 1
        %s456 = smul.addr %s455, 64
        %s457 = scalar_lea.vmem [#allocation6], %s456
        %p458 = pneg %p62
        %p459 = pneg %p59
        %s460 = sand.u32 %s77, 1
        %s461 = sand.u32 %s77, 1
        %s462 = smul.addr %s461, 64
        %s463 = scalar_lea.vmem [#allocation7], %s462
        %p464 = pneg %p90
        %p465 = pneg %p87
        %p466 = pneg %p111
        %p467 = pneg %p108
        %p468 = pneg %p132
        %p469 = pneg %p129
        %p470 = pneg %p153
        %p471 = pneg %p150
        %p472 = pneg %p174
        %p473 = pneg %p171
        %p474 = pneg %p202
        %p475 = pneg %p199
        %s476 = sand.u32 %s189, 1
        %s477 = sand.u32 %s189, 1
        %s478 = smul.addr %s477, 64
        %s479 = scalar_lea.vmem [#allocation8], %s478
        %p480 = pneg %p230
        %p481 = pneg %p227
        %p482 = scmp.lt.s32.totalorder %s25, 1
        %s483 = scalar_select %p482, %s25, 1
        %p484 = scmp.lt.s32.totalorder %s26, 4
        %s485 = scalar_select %p484, %s26, 4
        %s486 = smul.addr %s483, 5
        %s487 = sadd.s32 %s485, %s486
        %s488 = scalar_lea.vmem %s7, %s487
        %p489 = pneg %p258
        %p490 = pneg %p255
        %p491 = scmp.lt.s32.totalorder %s25, 1
        %s492 = scalar_select %p491, %s25, 1
        %p493 = scmp.lt.s32.totalorder %s26, 4
        %s494 = scalar_select %p493, %s26, 4
        %s495 = smul.addr %s492, 5
        %s496 = sadd.s32 %s494, %s495
        %s497 = scalar_lea.vmem %s8, %s496
        %p498 = scmp.lt.s32.totalorder %s25, 1
        %s499 = scalar_select %p498, %s25, 1
        %p500 = scmp.lt.s32.totalorder %s26, 4
        %s501 = scalar_select %p500, %s26, 4
        %s502 = smul.addr %s499, 5
        %s503 = sadd.s32 %s501, %s502
        %s504 = scalar_lea.vmem %s7, %s503
        %p505 = scmp.lt.s32.totalorder %s25, 1
        %s506 = scalar_select %p505, %s25, 1
        %p507 = scmp.lt.s32.totalorder %s26, 4
        %s508 = scalar_select %p507, %s26, 4
        %s509 = smul.addr %s506, 5
        %s510 = sadd.s32 %s508, %s509
        %s511 = scalar_lea.vmem %s8, %s510
        %p513 = scmp.eq.s32.totalorder %s27, 0
        // Predicated region
        $region121: #{cross_feature_affinity_pooling.2} parent=111 // pred_check
          %p514 = pneg %p513
        $region122: #{cross_feature_affinity_pooling.2} parent=111 // pred_check_branch
          %516 = sbr.rel (%p514) target = $region124
        $region123: #{cross_feature_affinity_pooling.2} parent=111 // pred_region
          %v517 = vld [vmem:[%s443] sm:$0xff]
          %v518 = vld [vmem:[%s443 + $0x8] sm:$0xff]
          %v519 = vld [vmem:[%s443 + $0x10] sm:$0xff]
          %v520 = vld [vmem:[%s443 + $0x18] sm:$0xff]
          %v521 = vld [vmem:[%s443 + $0x20] sm:$0xff]
          %v522 = vld [vmem:[%s443 + $0x28] sm:$0xff]
          %v523 = vld [vmem:[%s443 + $0x30] sm:$0xff]
          %v524 = vld [vmem:[%s443 + $0x38] sm:$0xff]
          %v525 = vpack.c.bf16 %v518, %v517
          %v526 = vpack.c.bf16 %v520, %v519
          %v527 = vpack.c.bf16 %v522, %v521
          %v528 = vpack.c.bf16 %v524, %v523
          %v529 = vld [vmem:[%s2] sm:$0xf]
          %v530 = vld [vmem:[%s2 + $0x4] sm:$0xf]
          %v531 = vld [vmem:[%s2 + $0x8] sm:$0xf]
          %v532 = vld [vmem:[%s2 + $0xc] sm:$0xf]
          %v533 = vld [vmem:[%s2 + $0x10] sm:$0xf]
          %v534 = vld [vmem:[%s2 + $0x14] sm:$0xf]
          %v535 = vld [vmem:[%s2 + $0x18] sm:$0xf]
          %v536 = vld [vmem:[%s2 + $0x1c] sm:$0xf]
          %v537 = vld [vmem:[%s3] sm:$0xff]
          %v538 = vld [vmem:[%s3 + $0x8] sm:$0xff]
          %v539 = vld [vmem:[%s3 + $0x10] sm:$0xff]
          %v540 = vld [vmem:[%s3 + $0x18] sm:$0xff]
          %v541 = vld [vmem:[%s3 + $0x20] sm:$0xff]
          %v542 = vld [vmem:[%s3 + $0x28] sm:$0xff]
          %v543 = vld [vmem:[%s3 + $0x30] sm:$0xff]
          %v544 = vld [vmem:[%s3 + $0x38] sm:$0xff]
          %546 = vset.pattern.permute.xlu0 0
          %547 = vperm.xlu0 %546, %v537
          %v548 = vpop.permute.xlu0 %547
          %551 = vset.pattern.permute.xlu0 0
          %552 = vperm.xlu0 %551, %v538
          %v553 = vpop.permute.xlu0 %552
          %556 = vset.pattern.permute.xlu0 0
          %557 = vperm.xlu0 %556, %v539
          %v558 = vpop.permute.xlu0 %557
          %561 = vset.pattern.permute.xlu0 0
          %562 = vperm.xlu0 %561, %v540
          %v563 = vpop.permute.xlu0 %562
          %566 = vset.pattern.permute.xlu0 0
          %567 = vperm.xlu0 %566, %v541
          %v568 = vpop.permute.xlu0 %567
          %571 = vset.pattern.permute.xlu0 0
          %572 = vperm.xlu0 %571, %v542
          %v573 = vpop.permute.xlu0 %572
          %576 = vset.pattern.permute.xlu0 0
          %577 = vperm.xlu0 %576, %v543
          %v578 = vpop.permute.xlu0 %577
          %581 = vset.pattern.permute.xlu0 0
          %582 = vperm.xlu0 %581, %v544
          %v583 = vpop.permute.xlu0 %582
          %v593 = vunpack.c.l.b16 %v529
          %v594 = vunpack.c.l.b16 %v530
          %v595 = vunpack.c.l.b16 %v531
          %v596 = vunpack.c.l.b16 %v532
          %v597 = vunpack.c.l.b16 %v533
          %v598 = vunpack.c.l.b16 %v534
          %v599 = vunpack.c.l.b16 %v535
          %v600 = vunpack.c.l.b16 %v536
          %v601 = vpack.c.b16 %v594, %v593
          %v602 = vpack.c.b16 %v596, %v595
          %v603 = vpack.c.b16 %v598, %v597
          %v604 = vpack.c.b16 %v600, %v599
          %vm605 = vcmask 523264
          %v607 = vsel %vm605, %v601, 0
          %v610 = vsel %vm605, %v602, 0
          %v613 = vsel %vm605, %v603, 0
          %v616 = vsel %vm605, %v604, 0
          %618 = vmatprep.subr.bf16.mxu0 0
          %619 = vmatpush1.bf16.msra.mxu0 0
          %620 = vmatprep.subr.bf16.mxu0 0
          %621 = vmatpush1.bf16.msra.mxu0 0
          %622 = vmatprep.subr.bf16.mxu0 0
          %623 = vmatpush1.bf16.msra.mxu0 0
          %624 = vmatprep.subr.bf16.mxu0 0
          %625 = vmatpush1.bf16.msra.mxu0 0
          %626 = vmatprep.subr.bf16.mxu0 0
          %627 = vmatpush1.bf16.msra.mxu0 %v528
          %628 = vmatprep.subr.bf16.mxu0 0
          %629 = vmatpush1.bf16.msra.mxu0 %v527
          %630 = vmatprep.subr.bf16.mxu0 0
          %631 = vmatpush1.bf16.msra.mxu0 %v526
          %632 = vmatprep.subr.bf16.mxu0 0
          %633 = vmatpush1.bf16.msra.mxu0 %v525
          %634 = vmatprep.subr.bf16.mxu0 0
          %635 = vmatpush2.bf16.msra.mxu0 0
          %636 = vmatprep.subr.bf16.mxu0 0
          %637 = vmatpush2.bf16.msra.mxu0 0
          %638 = vmatprep.subr.bf16.mxu0 0
          %639 = vmatpush2.bf16.msra.mxu0 0
          %640 = vmatprep.subr.bf16.mxu0 0
          %641 = vmatpush2.bf16.msra.mxu0 0
          %642 = vmatprep.subr.bf16.mxu0 0
          %643 = vmatpush2.bf16.msra.mxu0 0
          %644 = vmatprep.subr.bf16.mxu0 0
          %645 = vmatpush2.bf16.msra.mxu0 0
          %646 = vmatprep.subr.bf16.mxu0 0
          %647 = vmatpush2.bf16.msra.mxu0 0
          %648 = vmatprep.subr.bf16.mxu0 0
          %649 = vmatpush2.bf16.msra.mxu0 0
          %650 = vmatprep.mubr.bf16.mxu0 0
          %651 = vmatmul.mubr.bf16.gmra.mxu0 %v607
          %v652 = vpop.f32.mrf.mxu0
          %v653 = vadd.f32 %v548, %v652
          %v654 = vpop.f32.mrf.mxu0
          %v655 = vpop.f32.mrf.mxu0
          %v656 = vadd.f32 %v553, %v655
          %v657 = vpop.f32.mrf.mxu0
          %658 = vmatprep.mubr.bf16.mxu0 0
          %659 = vmatmul.mubr.bf16.gmra.mxu0 %v610
          %v660 = vpop.f32.mrf.mxu0
          %v661 = vadd.f32 %v558, %v660
          %v662 = vpop.f32.mrf.mxu0
          %v663 = vpop.f32.mrf.mxu0
          %v664 = vadd.f32 %v563, %v663
          %v665 = vpop.f32.mrf.mxu0
          %666 = vmatprep.mubr.bf16.mxu0 0
          %667 = vmatmul.mubr.bf16.gmra.mxu0 %v613
          %v668 = vpop.f32.mrf.mxu0
          %v669 = vadd.f32 %v568, %v668
          %v670 = vpop.f32.mrf.mxu0
          %v671 = vpop.f32.mrf.mxu0
          %v672 = vadd.f32 %v573, %v671
          %v673 = vpop.f32.mrf.mxu0
          %674 = vmatprep.mubr.bf16.mxu0 0
          %675 = vmatmul.mubr.bf16.gmra.mxu0 %v616
          %v676 = vpop.f32.mrf.mxu0
          %v677 = vadd.f32 %v578, %v676
          %v678 = vpop.f32.mrf.mxu0
          %v679 = vpop.f32.mrf.mxu0
          %v680 = vadd.f32 %v583, %v679
          %v681 = vpop.f32.mrf.mxu0
          %682 = vdwg.mxu0
          %683 = vxpose.xlu0.b32.start [1/16] %v653, 128
          %684 = vxpose.xlu0.b32.cont [2/16] %v656, 128
          %685 = vxpose.xlu0.b32.cont [3/16] %v661, 128
          %686 = vxpose.xlu0.b32.cont [4/16] %v664, 128
          %687 = vxpose.xlu0.b32.cont [5/16] %v669, 128
          %688 = vxpose.xlu0.b32.cont [6/16] %v672, 128
          %689 = vxpose.xlu0.b32.cont [7/16] %v677, 128
          %690 = vxpose.xlu0.b32.cont [8/16] %v680, 128
          %691 = vxpose.xlu0.b32.cont [9/16] 0.0, 128
          %692 = vxpose.xlu0.b32.cont [10/16] 0.0, 128
          %693 = vxpose.xlu0.b32.cont [11/16] 0.0, 128
          %694 = vxpose.xlu0.b32.cont [12/16] 0.0, 128
          %695 = vxpose.xlu0.b32.cont [13/16] 0.0, 128
          %696 = vxpose.xlu0.b32.cont [14/16] 0.0, 128
          %697 = vxpose.xlu0.b32.cont [15/16] 0.0, 128
          %698 = vxpose.xlu0.b32.end [16/16] 0.0, 128
          %v699 = vpop.trf.xlu0
          %v700 = vpop.trf.xlu0
          %v701 = vpop.trf.xlu0
          %v702 = vpop.trf.xlu0
          %v703 = vpop.trf.xlu0
          %v704 = vpop.trf.xlu0
          %v705 = vpop.trf.xlu0
          %v706 = vpop.trf.xlu0
          %v707 = vpop.trf.xlu0
          %v708 = vpop.trf.xlu0
          %v709 = vpop.trf.xlu0
          %v710 = vpop.trf.xlu0
          %v711 = vpop.trf.xlu0
          %v712 = vpop.trf.xlu0
          %v713 = vpop.trf.xlu0
          %v714 = vpop.trf.xlu0
          %v715 = vpack.c.bf16 %v700, %v699
          %v716 = vpack.c.bf16 %v702, %v701
          %v717 = vpack.c.bf16 %v704, %v703
          %v718 = vpack.c.bf16 %v706, %v705
          %v719 = vpack.c.bf16 %v708, %v707
          %v720 = vpack.c.bf16 %v710, %v709
          %v721 = vpack.c.bf16 %v712, %v711
          %v722 = vpack.c.bf16 %v714, %v713
          %v731 = vunpack.c.l.b16 %v715
          %v732 = vunpack.c.h.b16 %v715
          %v733 = vunpack.c.l.b16 %v716
          %v734 = vunpack.c.h.b16 %v716
          %v735 = vunpack.c.l.b16 %v717
          %v736 = vunpack.c.h.b16 %v717
          %v737 = vunpack.c.l.b16 %v718
          %v738 = vunpack.c.h.b16 %v718
          %v739 = vunpack.c.l.b16 %v719
          %v740 = vunpack.c.h.b16 %v719
          %v741 = vunpack.c.l.b16 %v720
          %v742 = vunpack.c.h.b16 %v720
          %v743 = vunpack.c.l.b16 %v721
          %v744 = vunpack.c.h.b16 %v721
          %v745 = vunpack.c.l.b16 %v722
          %v746 = vunpack.c.h.b16 %v722
          %v747 = vpack.c.b16 %v731, %v731
          %v748 = vpack.c.b16 %v732, %v732
          %v749 = vpack.c.b16 %v733, %v733
          %v750 = vpack.c.b16 %v734, %v734
          %v751 = vpack.c.b16 %v735, %v735
          %v752 = vpack.c.b16 %v736, %v736
          %v753 = vpack.c.b16 %v737, %v737
          %v754 = vpack.c.b16 %v738, %v738
          %v755 = vpack.c.b16 %v739, %v739
          %v756 = vpack.c.b16 %v740, %v740
          %v757 = vpack.c.b16 %v741, %v741
          %v758 = vpack.c.b16 %v742, %v742
          %v759 = vpack.c.b16 %v743, %v743
          %v760 = vpack.c.b16 %v744, %v744
          %v761 = vpack.c.b16 %v745, %v745
          %v762 = vpack.c.b16 %v746, %v746
          %vm779 = vcmask 519168
          %780 = vst.msk [vmem:[#allocation2] sm:$0xf] %vm779, %v747
          %781 = vst.msk [vmem:[#allocation2 + $0x4] sm:$0xf] %vm779, %v748
          %782 = vst.msk [vmem:[#allocation2 + $0x8] sm:$0xf] %vm779, %v749
          %783 = vst.msk [vmem:[#allocation2 + $0xc] sm:$0xf] %vm779, %v750
          %784 = vst.msk [vmem:[#allocation2 + $0x10] sm:$0xf] %vm779, %v751
          %785 = vst.msk [vmem:[#allocation2 + $0x14] sm:$0xf] %vm779, %v752
          %786 = vst.msk [vmem:[#allocation2 + $0x18] sm:$0xf] %vm779, %v753
          %787 = vst.msk [vmem:[#allocation2 + $0x1c] sm:$0xf] %vm779, %v754
          %788 = vst.msk [vmem:[#allocation2 + $0x20] sm:$0xf] %vm779, %v755
          %789 = vst.msk [vmem:[#allocation2 + $0x24] sm:$0xf] %vm779, %v756
          %790 = vst.msk [vmem:[#allocation2 + $0x28] sm:$0xf] %vm779, %v757
          %791 = vst.msk [vmem:[#allocation2 + $0x2c] sm:$0xf] %vm779, %v758
          %792 = vst.msk [vmem:[#allocation2 + $0x30] sm:$0xf] %vm779, %v759
          %793 = vst.msk [vmem:[#allocation2 + $0x34] sm:$0xf] %vm779, %v760
          %794 = vst.msk [vmem:[#allocation2 + $0x38] sm:$0xf] %vm779, %v761
          %795 = vst.msk [vmem:[#allocation2 + $0x3c] sm:$0xf] %vm779, %v762
          %vm796 = vcmask 7168
          %797 = vst.msk [vmem:[#allocation3] sm:$0xff] %vm796, -1e+30
          %798 = vst.msk [vmem:[#allocation3 + $0x8] sm:$0xff] %vm796, -1e+30
          %799 = vst.msk [vmem:[#allocation3 + $0x10] sm:$0xff] %vm796, -1e+30
          %800 = vst.msk [vmem:[#allocation3 + $0x18] sm:$0xff] %vm796, -1e+30
          %801 = vst.msk [vmem:[#allocation3 + $0x20] sm:$0xff] %vm796, -1e+30
          %802 = vst.msk [vmem:[#allocation3 + $0x28] sm:$0xff] %vm796, -1e+30
          %803 = vst.msk [vmem:[#allocation3 + $0x30] sm:$0xff] %vm796, -1e+30
          %804 = vst.msk [vmem:[#allocation3 + $0x38] sm:$0xff] %vm796, -1e+30
          %805 = vst.msk [vmem:[#allocation3 + $0x40] sm:$0xff] %vm796, -1e+30
          %806 = vst.msk [vmem:[#allocation3 + $0x48] sm:$0xff] %vm796, -1e+30
          %807 = vst.msk [vmem:[#allocation3 + $0x50] sm:$0xff] %vm796, -1e+30
          %808 = vst.msk [vmem:[#allocation3 + $0x58] sm:$0xff] %vm796, -1e+30
          %809 = vst.msk [vmem:[#allocation3 + $0x60] sm:$0xff] %vm796, -1e+30
          %810 = vst.msk [vmem:[#allocation3 + $0x68] sm:$0xff] %vm796, -1e+30
          %811 = vst.msk [vmem:[#allocation3 + $0x70] sm:$0xff] %vm796, -1e+30
          %812 = vst.msk [vmem:[#allocation3 + $0x78] sm:$0xff] %vm796, -1e+30
          %813 = vst.msk [vmem:[#allocation4] sm:$0xff] %vm796, 0.0
          %814 = vst.msk [vmem:[#allocation4 + $0x8] sm:$0xff] %vm796, 0.0
          %815 = vst.msk [vmem:[#allocation4 + $0x10] sm:$0xff] %vm796, 0.0
          %816 = vst.msk [vmem:[#allocation4 + $0x18] sm:$0xff] %vm796, 0.0
          %817 = vst.msk [vmem:[#allocation4 + $0x20] sm:$0xff] %vm796, 0.0
          %818 = vst.msk [vmem:[#allocation4 + $0x28] sm:$0xff] %vm796, 0.0
          %819 = vst.msk [vmem:[#allocation4 + $0x30] sm:$0xff] %vm796, 0.0
          %820 = vst.msk [vmem:[#allocation4 + $0x38] sm:$0xff] %vm796, 0.0
          %821 = vst.msk [vmem:[#allocation4 + $0x40] sm:$0xff] %vm796, 0.0
          %822 = vst.msk [vmem:[#allocation4 + $0x48] sm:$0xff] %vm796, 0.0
          %823 = vst.msk [vmem:[#allocation4 + $0x50] sm:$0xff] %vm796, 0.0
          %824 = vst.msk [vmem:[#allocation4 + $0x58] sm:$0xff] %vm796, 0.0
          %825 = vst.msk [vmem:[#allocation4 + $0x60] sm:$0xff] %vm796, 0.0
          %826 = vst.msk [vmem:[#allocation4 + $0x68] sm:$0xff] %vm796, 0.0
          %827 = vst.msk [vmem:[#allocation4 + $0x70] sm:$0xff] %vm796, 0.0
          %828 = vst.msk [vmem:[#allocation4 + $0x78] sm:$0xff] %vm796, 0.0
          %829 = vst.msk [vmem:[#allocation5] sm:$0xff] %vm605, 0.0
          %830 = vst.msk [vmem:[#allocation5 + $0x8] sm:$0xff] %vm605, 0.0
          %831 = vst.msk [vmem:[#allocation5 + $0x10] sm:$0xff] %vm605, 0.0
          %832 = vst.msk [vmem:[#allocation5 + $0x18] sm:$0xff] %vm605, 0.0
          %833 = vst.msk [vmem:[#allocation5 + $0x20] sm:$0xff] %vm605, 0.0
          %834 = vst.msk [vmem:[#allocation5 + $0x28] sm:$0xff] %vm605, 0.0
          %835 = vst.msk [vmem:[#allocation5 + $0x30] sm:$0xff] %vm605, 0.0
          %836 = vst.msk [vmem:[#allocation5 + $0x38] sm:$0xff] %vm605, 0.0
          %837 = vst.msk [vmem:[#allocation5 + $0x40] sm:$0xff] %vm605, 0.0
          %838 = vst.msk [vmem:[#allocation5 + $0x48] sm:$0xff] %vm605, 0.0
          %839 = vst.msk [vmem:[#allocation5 + $0x50] sm:$0xff] %vm605, 0.0
          %840 = vst.msk [vmem:[#allocation5 + $0x58] sm:$0xff] %vm605, 0.0
          %841 = vst.msk [vmem:[#allocation5 + $0x60] sm:$0xff] %vm605, 0.0
          %842 = vst.msk [vmem:[#allocation5 + $0x68] sm:$0xff] %vm605, 0.0
          %843 = vst.msk [vmem:[#allocation5 + $0x70] sm:$0xff] %vm605, 0.0
          %844 = vst.msk [vmem:[#allocation5 + $0x78] sm:$0xff] %vm605, 0.0
        $region124: #{cross_feature_affinity_pooling.2} parent=111 // pred_fallthru
          _
        %v845 = vld [vmem:[%s450] sm:$0xff]
        %v846 = vld [vmem:[%s450 + $0x8] sm:$0xff]
        %v847 = vld [vmem:[%s450 + $0x10] sm:$0xff]
        %v848 = vld [vmem:[%s450 + $0x18] sm:$0xff]
        %v849 = vld [vmem:[%s450 + $0x20] sm:$0xff]
        %v850 = vld [vmem:[%s450 + $0x28] sm:$0xff]
        %v851 = vld [vmem:[%s450 + $0x30] sm:$0xff]
        %v852 = vld [vmem:[%s450 + $0x38] sm:$0xff]
        %v853 = vpack.c.bf16 %v846, %v845
        %v854 = vpack.c.bf16 %v848, %v847
        %v855 = vpack.c.bf16 %v850, %v849
        %v856 = vpack.c.bf16 %v852, %v851
        %v857 = vld [vmem:[%s4] sm:$0xf]
        %v858 = vld [vmem:[%s4 + $0x4] sm:$0xf]
        %v859 = vld [vmem:[%s4 + $0x8] sm:$0xf]
        %v860 = vld [vmem:[%s4 + $0xc] sm:$0xf]
        %v861 = vld [vmem:[%s4 + $0x10] sm:$0xf]
        %v862 = vld [vmem:[%s4 + $0x14] sm:$0xf]
        %v863 = vld [vmem:[%s4 + $0x18] sm:$0xf]
        %v864 = vld [vmem:[%s4 + $0x1c] sm:$0xf]
        %v865 = vld [vmem:[%s5] sm:$0xff]
        %v866 = vld [vmem:[%s5 + $0x8] sm:$0xff]
        %v867 = vld [vmem:[%s5 + $0x10] sm:$0xff]
        %v868 = vld [vmem:[%s5 + $0x18] sm:$0xff]
        %v869 = vld [vmem:[%s5 + $0x20] sm:$0xff]
        %v870 = vld [vmem:[%s5 + $0x28] sm:$0xff]
        %v871 = vld [vmem:[%s5 + $0x30] sm:$0xff]
        %v872 = vld [vmem:[%s5 + $0x38] sm:$0xff]
        %874 = vset.pattern.permute.xlu0 0
        %875 = vperm.xlu0 %874, %v865
        %v876 = vpop.permute.xlu0 %875
        %879 = vset.pattern.permute.xlu0 0
        %880 = vperm.xlu0 %879, %v866
        %v881 = vpop.permute.xlu0 %880
        %884 = vset.pattern.permute.xlu0 0
        %885 = vperm.xlu0 %884, %v867
        %v886 = vpop.permute.xlu0 %885
        %889 = vset.pattern.permute.xlu0 0
        %890 = vperm.xlu0 %889, %v868
        %v891 = vpop.permute.xlu0 %890
        %894 = vset.pattern.permute.xlu0 0
        %895 = vperm.xlu0 %894, %v869
        %v896 = vpop.permute.xlu0 %895
        %899 = vset.pattern.permute.xlu0 0
        %900 = vperm.xlu0 %899, %v870
        %v901 = vpop.permute.xlu0 %900
        %904 = vset.pattern.permute.xlu0 0
        %905 = vperm.xlu0 %904, %v871
        %v906 = vpop.permute.xlu0 %905
        %909 = vset.pattern.permute.xlu0 0
        %910 = vperm.xlu0 %909, %v872
        %v911 = vpop.permute.xlu0 %910
        %v921 = vunpack.c.l.b16 %v857
        %v922 = vunpack.c.l.b16 %v858
        %v923 = vunpack.c.l.b16 %v859
        %v924 = vunpack.c.l.b16 %v860
        %v925 = vunpack.c.l.b16 %v861
        %v926 = vunpack.c.l.b16 %v862
        %v927 = vunpack.c.l.b16 %v863
        %v928 = vunpack.c.l.b16 %v864
        %v929 = vpack.c.b16 %v922, %v921
        %v930 = vpack.c.b16 %v924, %v923
        %v931 = vpack.c.b16 %v926, %v925
        %v932 = vpack.c.b16 %v928, %v927
        %vm933 = vcmask 523264
        %v935 = vsel %vm933, %v929, 0
        %v938 = vsel %vm933, %v930, 0
        %v941 = vsel %vm933, %v931, 0
        %v944 = vsel %vm933, %v932, 0
        %946 = vmatprep.subr.bf16.mxu0 0
        %947 = vmatpush1.bf16.msra.mxu0 0
        %948 = vmatprep.subr.bf16.mxu0 0
        %949 = vmatpush1.bf16.msra.mxu0 0
        %950 = vmatprep.subr.bf16.mxu0 0
        %951 = vmatpush1.bf16.msra.mxu0 0
        %952 = vmatprep.subr.bf16.mxu0 0
        %953 = vmatpush1.bf16.msra.mxu0 0
        %954 = vmatprep.subr.bf16.mxu0 0
        %955 = vmatpush1.bf16.msra.mxu0 %v856
        %956 = vmatprep.subr.bf16.mxu0 0
        %957 = vmatpush1.bf16.msra.mxu0 %v855
        %958 = vmatprep.subr.bf16.mxu0 0
        %959 = vmatpush1.bf16.msra.mxu0 %v854
        %960 = vmatprep.subr.bf16.mxu0 0
        %961 = vmatpush1.bf16.msra.mxu0 %v853
        %962 = vmatprep.subr.bf16.mxu0 0
        %963 = vmatpush2.bf16.msra.mxu0 0
        %964 = vmatprep.subr.bf16.mxu0 0
        %965 = vmatpush2.bf16.msra.mxu0 0
        %966 = vmatprep.subr.bf16.mxu0 0
        %967 = vmatpush2.bf16.msra.mxu0 0
        %968 = vmatprep.subr.bf16.mxu0 0
        %969 = vmatpush2.bf16.msra.mxu0 0
        %970 = vmatprep.subr.bf16.mxu0 0
        %971 = vmatpush2.bf16.msra.mxu0 0
        %972 = vmatprep.subr.bf16.mxu0 0
        %973 = vmatpush2.bf16.msra.mxu0 0
        %974 = vmatprep.subr.bf16.mxu0 0
        %975 = vmatpush2.bf16.msra.mxu0 0
        %976 = vmatprep.subr.bf16.mxu0 0
        %977 = vmatpush2.bf16.msra.mxu0 0
        %978 = vmatprep.mubr.bf16.mxu0 0
        %979 = vmatmul.mubr.bf16.gmra.mxu0 %v935
        %v980 = vpop.f32.mrf.mxu0
        %v981 = vadd.f32 %v876, %v980
        %v982 = vpop.f32.mrf.mxu0
        %v983 = vpop.f32.mrf.mxu0
        %v984 = vadd.f32 %v881, %v983
        %v985 = vpop.f32.mrf.mxu0
        %986 = vmatprep.mubr.bf16.mxu0 0
        %987 = vmatmul.mubr.bf16.gmra.mxu0 %v938
        %v988 = vpop.f32.mrf.mxu0
        %v989 = vadd.f32 %v886, %v988
        %v990 = vpop.f32.mrf.mxu0
        %v991 = vpop.f32.mrf.mxu0
        %v992 = vadd.f32 %v891, %v991
        %v993 = vpop.f32.mrf.mxu0
        %994 = vmatprep.mubr.bf16.mxu0 0
        %995 = vmatmul.mubr.bf16.gmra.mxu0 %v941
        %v996 = vpop.f32.mrf.mxu0
        %v997 = vadd.f32 %v896, %v996
        %v998 = vpop.f32.mrf.mxu0
        %v999 = vpop.f32.mrf.mxu0
        %v1000 = vadd.f32 %v901, %v999
        %v1001 = vpop.f32.mrf.mxu0
        %1002 = vmatprep.mubr.bf16.mxu0 0
        %1003 = vmatmul.mubr.bf16.gmra.mxu0 %v944
        %v1004 = vpop.f32.mrf.mxu0
        %v1005 = vadd.f32 %v906, %v1004
        %v1006 = vpop.f32.mrf.mxu0
        %v1007 = vpop.f32.mrf.mxu0
        %v1008 = vadd.f32 %v911, %v1007
        %v1009 = vpop.f32.mrf.mxu0
        %1010 = vdwg.mxu0
        %v1011 = vpack.c.bf16 %v984, %v981
        %v1012 = vpack.c.bf16 %v992, %v989
        %v1013 = vpack.c.bf16 %v1000, %v997
        %v1014 = vpack.c.bf16 %v1008, %v1005
        %v1015 = vld [vmem:[#allocation2] sm:$0xf]
        %v1016 = vld [vmem:[#allocation2 + $0x4] sm:$0xf]
        %v1017 = vld [vmem:[#allocation2 + $0x8] sm:$0xf]
        %v1018 = vld [vmem:[#allocation2 + $0xc] sm:$0xf]
        %v1019 = vld [vmem:[#allocation2 + $0x10] sm:$0xf]
        %v1020 = vld [vmem:[#allocation2 + $0x14] sm:$0xf]
        %v1021 = vld [vmem:[#allocation2 + $0x18] sm:$0xf]
        %v1022 = vld [vmem:[#allocation2 + $0x1c] sm:$0xf]
        %v1023 = vld [vmem:[#allocation2 + $0x20] sm:$0xf]
        %v1024 = vld [vmem:[#allocation2 + $0x24] sm:$0xf]
        %v1025 = vld [vmem:[#allocation2 + $0x28] sm:$0xf]
        %v1026 = vld [vmem:[#allocation2 + $0x2c] sm:$0xf]
        %v1027 = vld [vmem:[#allocation2 + $0x30] sm:$0xf]
        %v1028 = vld [vmem:[#allocation2 + $0x34] sm:$0xf]
        %v1029 = vld [vmem:[#allocation2 + $0x38] sm:$0xf]
        %v1030 = vld [vmem:[#allocation2 + $0x3c] sm:$0xf]
        %v1047 = vunpack.c.l.b16 %v1015
        %v1048 = vunpack.c.l.b16 %v1016
        %v1049 = vunpack.c.l.b16 %v1017
        %v1050 = vunpack.c.l.b16 %v1018
        %v1051 = vunpack.c.l.b16 %v1019
        %v1052 = vunpack.c.l.b16 %v1020
        %v1053 = vunpack.c.l.b16 %v1021
        %v1054 = vunpack.c.l.b16 %v1022
        %v1055 = vunpack.c.l.b16 %v1023
        %v1056 = vunpack.c.l.b16 %v1024
        %v1057 = vunpack.c.l.b16 %v1025
        %v1058 = vunpack.c.l.b16 %v1026
        %v1059 = vunpack.c.l.b16 %v1027
        %v1060 = vunpack.c.l.b16 %v1028
        %v1061 = vunpack.c.l.b16 %v1029
        %v1062 = vunpack.c.l.b16 %v1030
        %v1063 = vpack.c.b16 %v1048, %v1047
        %v1064 = vpack.c.b16 %v1050, %v1049
        %v1065 = vpack.c.b16 %v1052, %v1051
        %v1066 = vpack.c.b16 %v1054, %v1053
        %v1067 = vpack.c.b16 %v1056, %v1055
        %v1068 = vpack.c.b16 %v1058, %v1057
        %v1069 = vpack.c.b16 %v1060, %v1059
        %v1070 = vpack.c.b16 %v1062, %v1061
        %v1072 = vsel %vm933, %v1063, 0
        %v1075 = vsel %vm933, %v1064, 0
        %v1078 = vsel %vm933, %v1065, 0
        %v1081 = vsel %vm933, %v1066, 0
        %v1084 = vsel %vm933, %v1067, 0
        %v1087 = vsel %vm933, %v1068, 0
        %v1090 = vsel %vm933, %v1069, 0
        %v1093 = vsel %vm933, %v1070, 0
        %1095 = vmatprep.subr.bf16.mxu0 0
        %1096 = vmatpush1.bf16.msra.mxu0 0
        %1097 = vmatprep.subr.bf16.mxu0 0
        %1098 = vmatpush1.bf16.msra.mxu0 0
        %1099 = vmatprep.subr.bf16.mxu0 0
        %1100 = vmatpush1.bf16.msra.mxu0 0
        %1101 = vmatprep.subr.bf16.mxu0 0
        %1102 = vmatpush1.bf16.msra.mxu0 0
        %1103 = vmatprep.subr.bf16.mxu0 0
        %1104 = vmatpush1.bf16.msra.mxu0 %v1014
        %1105 = vmatprep.subr.bf16.mxu0 0
        %1106 = vmatpush1.bf16.msra.mxu0 %v1013
        %1107 = vmatprep.subr.bf16.mxu0 0
        %1108 = vmatpush1.bf16.msra.mxu0 %v1012
        %1109 = vmatprep.subr.bf16.mxu0 0
        %1110 = vmatpush1.bf16.msra.mxu0 %v1011
        %1111 = vmatprep.subr.bf16.mxu0 0
        %1112 = vmatpush2.bf16.msra.mxu0 0
        %1113 = vmatprep.subr.bf16.mxu0 0
        %1114 = vmatpush2.bf16.msra.mxu0 0
        %1115 = vmatprep.subr.bf16.mxu0 0
        %1116 = vmatpush2.bf16.msra.mxu0 0
        %1117 = vmatprep.subr.bf16.mxu0 0
        %1118 = vmatpush2.bf16.msra.mxu0 0
        %1119 = vmatprep.subr.bf16.mxu0 0
        %1120 = vmatpush2.bf16.msra.mxu0 0
        %1121 = vmatprep.subr.bf16.mxu0 0
        %1122 = vmatpush2.bf16.msra.mxu0 0
        %1123 = vmatprep.subr.bf16.mxu0 0
        %1124 = vmatpush2.bf16.msra.mxu0 0
        %1125 = vmatprep.subr.bf16.mxu0 0
        %1126 = vmatpush2.bf16.msra.mxu0 0
        %1127 = vmatprep.mubr.bf16.mxu0 0
        %1128 = vmatmul.mubr.bf16.gmra.mxu0 %v1072
        %v1129 = vpop.f32.mrf.mxu0
        %v1130 = vadd.f32 0.0, %v1129
        %v1131 = vpop.f32.mrf.mxu0
        %v1132 = vpop.f32.mrf.mxu0
        %v1133 = vadd.f32 0.0, %v1132
        %v1134 = vpop.f32.mrf.mxu0
        %1135 = vmatprep.mubr.bf16.mxu0 0
        %1136 = vmatmul.mubr.bf16.gmra.mxu0 %v1075
        %v1137 = vpop.f32.mrf.mxu0
        %v1138 = vadd.f32 0.0, %v1137
        %v1139 = vpop.f32.mrf.mxu0
        %v1140 = vpop.f32.mrf.mxu0
        %v1141 = vadd.f32 0.0, %v1140
        %v1142 = vpop.f32.mrf.mxu0
        %1143 = vmatprep.mubr.bf16.mxu0 0
        %1144 = vmatmul.mubr.bf16.gmra.mxu0 %v1078
        %v1145 = vpop.f32.mrf.mxu0
        %v1146 = vadd.f32 0.0, %v1145
        %v1147 = vpop.f32.mrf.mxu0
        %v1148 = vpop.f32.mrf.mxu0
        %v1149 = vadd.f32 0.0, %v1148
        %v1150 = vpop.f32.mrf.mxu0
        %1151 = vmatprep.mubr.bf16.mxu0 0
        %1152 = vmatmul.mubr.bf16.gmra.mxu0 %v1081
        %v1153 = vpop.f32.mrf.mxu0
        %v1154 = vadd.f32 0.0, %v1153
        %v1155 = vpop.f32.mrf.mxu0
        %v1156 = vpop.f32.mrf.mxu0
        %v1157 = vadd.f32 0.0, %v1156
        %v1158 = vpop.f32.mrf.mxu0
        %1159 = vmatprep.mubr.bf16.mxu0 0
        %1160 = vmatmul.mubr.bf16.gmra.mxu0 %v1084
        %v1161 = vpop.f32.mrf.mxu0
        %v1162 = vadd.f32 0.0, %v1161
        %v1163 = vpop.f32.mrf.mxu0
        %v1164 = vpop.f32.mrf.mxu0
        %v1165 = vadd.f32 0.0, %v1164
        %v1166 = vpop.f32.mrf.mxu0
        %1167 = vmatprep.mubr.bf16.mxu0 0
        %1168 = vmatmul.mubr.bf16.gmra.mxu0 %v1087
        %v1169 = vpop.f32.mrf.mxu0
        %v1170 = vadd.f32 0.0, %v1169
        %v1171 = vpop.f32.mrf.mxu0
        %v1172 = vpop.f32.mrf.mxu0
        %v1173 = vadd.f32 0.0, %v1172
        %v1174 = vpop.f32.mrf.mxu0
        %1175 = vmatprep.mubr.bf16.mxu0 0
        %1176 = vmatmul.mubr.bf16.gmra.mxu0 %v1090
        %v1177 = vpop.f32.mrf.mxu0
        %v1178 = vadd.f32 0.0, %v1177
        %v1179 = vpop.f32.mrf.mxu0
        %v1180 = vpop.f32.mrf.mxu0
        %v1181 = vadd.f32 0.0, %v1180
        %v1182 = vpop.f32.mrf.mxu0
        %1183 = vmatprep.mubr.bf16.mxu0 0
        %1184 = vmatmul.mubr.bf16.gmra.mxu0 %v1093
        %v1185 = vpop.f32.mrf.mxu0
        %v1186 = vadd.f32 0.0, %v1185
        %v1187 = vpop.f32.mrf.mxu0
        %v1188 = vpop.f32.mrf.mxu0
        %v1189 = vadd.f32 0.0, %v1188
        %v1190 = vpop.f32.mrf.mxu0
        %1191 = vdwg.mxu0
        %s1192 = smul.u32 %s27, 128
        %v1193 = vlaneseq
        %v1194 = vand.u32 %v1193, 127
        %v1195 = vstv %s1192
        %v1196 = vadd.s32 %v1195, %v1194
        %vm1197 = vcmp.lt.s32.totalorder %v1196, 576
        %v1198 = vsel %vm1197, 1, 0
        %vm1199 = vcmp.eq.s32.totalorder %v1198, 1
        %v1200 = vsel %vm1199, %v1130, -1e+30
        %v1201 = vsel %vm1199, %v1133, -1e+30
        %v1202 = vsel %vm1199, %v1138, -1e+30
        %v1203 = vsel %vm1199, %v1141, -1e+30
        %v1204 = vsel %vm1199, %v1146, -1e+30
        %v1205 = vsel %vm1199, %v1149, -1e+30
        %v1206 = vsel %vm1199, %v1154, -1e+30
        %v1207 = vsel %vm1199, %v1157, -1e+30
        %v1208 = vsel %vm1199, %v1162, -1e+30
        %v1209 = vsel %vm1199, %v1165, -1e+30
        %v1210 = vsel %vm1199, %v1170, -1e+30
        %v1211 = vsel %vm1199, %v1173, -1e+30
        %v1212 = vsel %vm1199, %v1178, -1e+30
        %v1213 = vsel %vm1199, %v1181, -1e+30
        %v1214 = vsel %vm1199, %v1186, -1e+30
        %v1215 = vsel %vm1199, %v1189, -1e+30
        %v1216 = vld [vmem:[#allocation3] sm:$0xff]
        %v1217 = vld [vmem:[#allocation3 + $0x8] sm:$0xff]
        %v1218 = vld [vmem:[#allocation3 + $0x10] sm:$0xff]
        %v1219 = vld [vmem:[#allocation3 + $0x18] sm:$0xff]
        %v1220 = vld [vmem:[#allocation3 + $0x20] sm:$0xff]
        %v1221 = vld [vmem:[#allocation3 + $0x28] sm:$0xff]
        %v1222 = vld [vmem:[#allocation3 + $0x30] sm:$0xff]
        %v1223 = vld [vmem:[#allocation3 + $0x38] sm:$0xff]
        %v1224 = vld [vmem:[#allocation3 + $0x40] sm:$0xff]
        %v1225 = vld [vmem:[#allocation3 + $0x48] sm:$0xff]
        %v1226 = vld [vmem:[#allocation3 + $0x50] sm:$0xff]
        %v1227 = vld [vmem:[#allocation3 + $0x58] sm:$0xff]
        %v1228 = vld [vmem:[#allocation3 + $0x60] sm:$0xff]
        %v1229 = vld [vmem:[#allocation3 + $0x68] sm:$0xff]
        %v1230 = vld [vmem:[#allocation3 + $0x70] sm:$0xff]
        %v1231 = vld [vmem:[#allocation3 + $0x78] sm:$0xff]
        %1232 = vmax.xlane.f32.xlu0 %v1200
        %v1233 = vpop.xlane.xlu0 %1232
        %1234 = vmax.xlane.f32.xlu0 %v1201
        %v1235 = vpop.xlane.xlu0 %1234
        %1236 = vmax.xlane.f32.xlu0 %v1202
        %v1237 = vpop.xlane.xlu0 %1236
        %1238 = vmax.xlane.f32.xlu0 %v1203
        %v1239 = vpop.xlane.xlu0 %1238
        %1240 = vmax.xlane.f32.xlu0 %v1204
        %v1241 = vpop.xlane.xlu0 %1240
        %1242 = vmax.xlane.f32.xlu0 %v1205
        %v1243 = vpop.xlane.xlu0 %1242
        %1244 = vmax.xlane.f32.xlu0 %v1206
        %v1245 = vpop.xlane.xlu0 %1244
        %1246 = vmax.xlane.f32.xlu0 %v1207
        %v1247 = vpop.xlane.xlu0 %1246
        %1248 = vmax.xlane.f32.xlu0 %v1208
        %v1249 = vpop.xlane.xlu0 %1248
        %1250 = vmax.xlane.f32.xlu0 %v1209
        %v1251 = vpop.xlane.xlu0 %1250
        %1252 = vmax.xlane.f32.xlu0 %v1210
        %v1253 = vpop.xlane.xlu0 %1252
        %1254 = vmax.xlane.f32.xlu0 %v1211
        %v1255 = vpop.xlane.xlu0 %1254
        %1256 = vmax.xlane.f32.xlu0 %v1212
        %v1257 = vpop.xlane.xlu0 %1256
        %1258 = vmax.xlane.f32.xlu0 %v1213
        %v1259 = vpop.xlane.xlu0 %1258
        %1260 = vmax.xlane.f32.xlu0 %v1214
        %v1261 = vpop.xlane.xlu0 %1260
        %1262 = vmax.xlane.f32.xlu0 %v1215
        %v1263 = vpop.xlane.xlu0 %1262
        %v1264 = vmax.f32 %v1216, %v1233
        %v1265 = vmax.f32 %v1217, %v1235
        %v1266 = vmax.f32 %v1218, %v1237
        %v1267 = vmax.f32 %v1219, %v1239
        %v1268 = vmax.f32 %v1220, %v1241
        %v1269 = vmax.f32 %v1221, %v1243
        %v1270 = vmax.f32 %v1222, %v1245
        %v1271 = vmax.f32 %v1223, %v1247
        %v1272 = vmax.f32 %v1224, %v1249
        %v1273 = vmax.f32 %v1225, %v1251
        %v1274 = vmax.f32 %v1226, %v1253
        %v1275 = vmax.f32 %v1227, %v1255
        %v1276 = vmax.f32 %v1228, %v1257
        %v1277 = vmax.f32 %v1229, %v1259
        %v1278 = vmax.f32 %v1230, %v1261
        %v1279 = vmax.f32 %v1231, %v1263
        %v1280 = vsub.f32 %v1216, %v1264
        %v1281 = vsub.f32 %v1217, %v1265
        %v1282 = vsub.f32 %v1218, %v1266
        %v1283 = vsub.f32 %v1219, %v1267
        %v1284 = vsub.f32 %v1220, %v1268
        %v1285 = vsub.f32 %v1221, %v1269
        %v1286 = vsub.f32 %v1222, %v1270
        %v1287 = vsub.f32 %v1223, %v1271
        %v1288 = vsub.f32 %v1224, %v1272
        %v1289 = vsub.f32 %v1225, %v1273
        %v1290 = vsub.f32 %v1226, %v1274
        %v1291 = vsub.f32 %v1227, %v1275
        %v1292 = vsub.f32 %v1228, %v1276
        %v1293 = vsub.f32 %v1229, %v1277
        %v1294 = vsub.f32 %v1230, %v1278
        %v1295 = vsub.f32 %v1231, %v1279
        %v1296 = vmul.f32 %v1280, 1.442695
        %v1297 = vpow.pop %v1296
        %v1298 = vmul.f32 %v1281, 1.442695
        %v1299 = vpow.pop %v1298
        %v1300 = vmul.f32 %v1282, 1.442695
        %v1301 = vpow.pop %v1300
        %v1302 = vmul.f32 %v1283, 1.442695
        %v1303 = vpow.pop %v1302
        %v1304 = vmul.f32 %v1284, 1.442695
        %v1305 = vpow.pop %v1304
        %v1306 = vmul.f32 %v1285, 1.442695
        %v1307 = vpow.pop %v1306
        %v1308 = vmul.f32 %v1286, 1.442695
        %v1309 = vpow.pop %v1308
        %v1310 = vmul.f32 %v1287, 1.442695
        %v1311 = vpow.pop %v1310
        %v1312 = vmul.f32 %v1288, 1.442695
        %v1313 = vpow.pop %v1312
        %v1314 = vmul.f32 %v1289, 1.442695
        %v1315 = vpow.pop %v1314
        %v1316 = vmul.f32 %v1290, 1.442695
        %v1317 = vpow.pop %v1316
        %v1318 = vmul.f32 %v1291, 1.442695
        %v1319 = vpow.pop %v1318
        %v1320 = vmul.f32 %v1292, 1.442695
        %v1321 = vpow.pop %v1320
        %v1322 = vmul.f32 %v1293, 1.442695
        %v1323 = vpow.pop %v1322
        %v1324 = vmul.f32 %v1294, 1.442695
        %v1325 = vpow.pop %v1324
        %v1326 = vmul.f32 %v1295, 1.442695
        %v1327 = vpow.pop %v1326
        %1329 = vset.pattern.permute.xlu0 0
        %1330 = vperm.xlu0 %1329, %v1264
        %v1331 = vpop.permute.xlu0 %1330
        %1334 = vset.pattern.permute.xlu0 0
        %1335 = vperm.xlu0 %1334, %v1265
        %v1336 = vpop.permute.xlu0 %1335
        %1339 = vset.pattern.permute.xlu0 0
        %1340 = vperm.xlu0 %1339, %v1266
        %v1341 = vpop.permute.xlu0 %1340
        %1344 = vset.pattern.permute.xlu0 0
        %1345 = vperm.xlu0 %1344, %v1267
        %v1346 = vpop.permute.xlu0 %1345
        %1349 = vset.pattern.permute.xlu0 0
        %1350 = vperm.xlu0 %1349, %v1268
        %v1351 = vpop.permute.xlu0 %1350
        %1354 = vset.pattern.permute.xlu0 0
        %1355 = vperm.xlu0 %1354, %v1269
        %v1356 = vpop.permute.xlu0 %1355
        %1359 = vset.pattern.permute.xlu0 0
        %1360 = vperm.xlu0 %1359, %v1270
        %v1361 = vpop.permute.xlu0 %1360
        %1364 = vset.pattern.permute.xlu0 0
        %1365 = vperm.xlu0 %1364, %v1271
        %v1366 = vpop.permute.xlu0 %1365
        %1369 = vset.pattern.permute.xlu0 0
        %1370 = vperm.xlu0 %1369, %v1272
        %v1371 = vpop.permute.xlu0 %1370
        %1374 = vset.pattern.permute.xlu0 0
        %1375 = vperm.xlu0 %1374, %v1273
        %v1376 = vpop.permute.xlu0 %1375
        %1379 = vset.pattern.permute.xlu0 0
        %1380 = vperm.xlu0 %1379, %v1274
        %v1381 = vpop.permute.xlu0 %1380
        %1384 = vset.pattern.permute.xlu0 0
        %1385 = vperm.xlu0 %1384, %v1275
        %v1386 = vpop.permute.xlu0 %1385
        %1389 = vset.pattern.permute.xlu0 0
        %1390 = vperm.xlu0 %1389, %v1276
        %v1391 = vpop.permute.xlu0 %1390
        %1394 = vset.pattern.permute.xlu0 0
        %1395 = vperm.xlu0 %1394, %v1277
        %v1396 = vpop.permute.xlu0 %1395
        %1399 = vset.pattern.permute.xlu0 0
        %1400 = vperm.xlu0 %1399, %v1278
        %v1401 = vpop.permute.xlu0 %1400
        %1404 = vset.pattern.permute.xlu0 0
        %1405 = vperm.xlu0 %1404, %v1279
        %v1406 = vpop.permute.xlu0 %1405
        %v1408 = vsub.f32 %v1200, %v1331
        %v1409 = vsub.f32 %v1201, %v1336
        %v1410 = vsub.f32 %v1202, %v1341
        %v1411 = vsub.f32 %v1203, %v1346
        %v1412 = vsub.f32 %v1204, %v1351
        %v1413 = vsub.f32 %v1205, %v1356
        %v1414 = vsub.f32 %v1206, %v1361
        %v1415 = vsub.f32 %v1207, %v1366
        %v1416 = vsub.f32 %v1208, %v1371
        %v1417 = vsub.f32 %v1209, %v1376
        %v1418 = vsub.f32 %v1210, %v1381
        %v1419 = vsub.f32 %v1211, %v1386
        %v1420 = vsub.f32 %v1212, %v1391
        %v1421 = vsub.f32 %v1213, %v1396
        %v1422 = vsub.f32 %v1214, %v1401
        %v1423 = vsub.f32 %v1215, %v1406
        %v1424 = vmul.f32 %v1408, 1.442695
        %v1425 = vpow.pop %v1424
        %v1426 = vmul.f32 %v1409, 1.442695
        %v1427 = vpow.pop %v1426
        %v1428 = vmul.f32 %v1410, 1.442695
        %v1429 = vpow.pop %v1428
        %v1430 = vmul.f32 %v1411, 1.442695
        %v1431 = vpow.pop %v1430
        %v1432 = vmul.f32 %v1412, 1.442695
        %v1433 = vpow.pop %v1432
        %v1434 = vmul.f32 %v1413, 1.442695
        %v1435 = vpow.pop %v1434
        %v1436 = vmul.f32 %v1414, 1.442695
        %v1437 = vpow.pop %v1436
        %v1438 = vmul.f32 %v1415, 1.442695
        %v1439 = vpow.pop %v1438
        %v1440 = vmul.f32 %v1416, 1.442695
        %v1441 = vpow.pop %v1440
        %v1442 = vmul.f32 %v1417, 1.442695
        %v1443 = vpow.pop %v1442
        %v1444 = vmul.f32 %v1418, 1.442695
        %v1445 = vpow.pop %v1444
        %v1446 = vmul.f32 %v1419, 1.442695
        %v1447 = vpow.pop %v1446
        %v1448 = vmul.f32 %v1420, 1.442695
        %v1449 = vpow.pop %v1448
        %v1450 = vmul.f32 %v1421, 1.442695
        %v1451 = vpow.pop %v1450
        %v1452 = vmul.f32 %v1422, 1.442695
        %v1453 = vpow.pop %v1452
        %v1454 = vmul.f32 %v1423, 1.442695
        %v1455 = vpow.pop %v1454
        %v1456 = vld [vmem:[#allocation4] sm:$0xff]
        %v1457 = vld [vmem:[#allocation4 + $0x8] sm:$0xff]
        %v1458 = vld [vmem:[#allocation4 + $0x10] sm:$0xff]
        %v1459 = vld [vmem:[#allocation4 + $0x18] sm:$0xff]
        %v1460 = vld [vmem:[#allocation4 + $0x20] sm:$0xff]
        %v1461 = vld [vmem:[#allocation4 + $0x28] sm:$0xff]
        %v1462 = vld [vmem:[#allocation4 + $0x30] sm:$0xff]
        %v1463 = vld [vmem:[#allocation4 + $0x38] sm:$0xff]
        %v1464 = vld [vmem:[#allocation4 + $0x40] sm:$0xff]
        %v1465 = vld [vmem:[#allocation4 + $0x48] sm:$0xff]
        %v1466 = vld [vmem:[#allocation4 + $0x50] sm:$0xff]
        %v1467 = vld [vmem:[#allocation4 + $0x58] sm:$0xff]
        %v1468 = vld [vmem:[#allocation4 + $0x60] sm:$0xff]
        %v1469 = vld [vmem:[#allocation4 + $0x68] sm:$0xff]
        %v1470 = vld [vmem:[#allocation4 + $0x70] sm:$0xff]
        %v1471 = vld [vmem:[#allocation4 + $0x78] sm:$0xff]
        %v1472 = vmul.f32 %v1297, %v1456
        %v1473 = vmul.f32 %v1299, %v1457
        %v1474 = vmul.f32 %v1301, %v1458
        %v1475 = vmul.f32 %v1303, %v1459
        %v1476 = vmul.f32 %v1305, %v1460
        %v1477 = vmul.f32 %v1307, %v1461
        %v1478 = vmul.f32 %v1309, %v1462
        %v1479 = vmul.f32 %v1311, %v1463
        %v1480 = vmul.f32 %v1313, %v1464
        %v1481 = vmul.f32 %v1315, %v1465
        %v1482 = vmul.f32 %v1317, %v1466
        %v1483 = vmul.f32 %v1319, %v1467
        %v1484 = vmul.f32 %v1321, %v1468
        %v1485 = vmul.f32 %v1323, %v1469
        %v1486 = vmul.f32 %v1325, %v1470
        %v1487 = vmul.f32 %v1327, %v1471
        %1488 = vadd.xlane.f32.xlu0 %v1425
        %v1489 = vpop.xlane.xlu0 %1488
        %1490 = vadd.xlane.f32.xlu0 %v1427
        %v1491 = vpop.xlane.xlu0 %1490
        %1492 = vadd.xlane.f32.xlu0 %v1429
        %v1493 = vpop.xlane.xlu0 %1492
        %1494 = vadd.xlane.f32.xlu0 %v1431
        %v1495 = vpop.xlane.xlu0 %1494
        %1496 = vadd.xlane.f32.xlu0 %v1433
        %v1497 = vpop.xlane.xlu0 %1496
        %1498 = vadd.xlane.f32.xlu0 %v1435
        %v1499 = vpop.xlane.xlu0 %1498
        %1500 = vadd.xlane.f32.xlu0 %v1437
        %v1501 = vpop.xlane.xlu0 %1500
        %1502 = vadd.xlane.f32.xlu0 %v1439
        %v1503 = vpop.xlane.xlu0 %1502
        %1504 = vadd.xlane.f32.xlu0 %v1441
        %v1505 = vpop.xlane.xlu0 %1504
        %1506 = vadd.xlane.f32.xlu0 %v1443
        %v1507 = vpop.xlane.xlu0 %1506
        %1508 = vadd.xlane.f32.xlu0 %v1445
        %v1509 = vpop.xlane.xlu0 %1508
        %1510 = vadd.xlane.f32.xlu0 %v1447
        %v1511 = vpop.xlane.xlu0 %1510
        %1512 = vadd.xlane.f32.xlu0 %v1449
        %v1513 = vpop.xlane.xlu0 %1512
        %1514 = vadd.xlane.f32.xlu0 %v1451
        %v1515 = vpop.xlane.xlu0 %1514
        %1516 = vadd.xlane.f32.xlu0 %v1453
        %v1517 = vpop.xlane.xlu0 %1516
        %1518 = vadd.xlane.f32.xlu0 %v1455
        %v1519 = vpop.xlane.xlu0 %1518
        %v1520 = vadd.f32 %v1472, %v1489
        %v1521 = vadd.f32 %v1473, %v1491
        %v1522 = vadd.f32 %v1474, %v1493
        %v1523 = vadd.f32 %v1475, %v1495
        %v1524 = vadd.f32 %v1476, %v1497
        %v1525 = vadd.f32 %v1477, %v1499
        %v1526 = vadd.f32 %v1478, %v1501
        %v1527 = vadd.f32 %v1479, %v1503
        %v1528 = vadd.f32 %v1480, %v1505
        %v1529 = vadd.f32 %v1481, %v1507
        %v1530 = vadd.f32 %v1482, %v1509
        %v1531 = vadd.f32 %v1483, %v1511
        %v1532 = vadd.f32 %v1484, %v1513
        %v1533 = vadd.f32 %v1485, %v1515
        %v1534 = vadd.f32 %v1486, %v1517
        %v1535 = vadd.f32 %v1487, %v1519
        %vm1536 = vcmask 7168
        %1537 = vst.msk [vmem:[#allocation4] sm:$0xff] %vm1536, %v1520
        %1538 = vst.msk [vmem:[#allocation4 + $0x8] sm:$0xff] %vm1536, %v1521
        %1539 = vst.msk [vmem:[#allocation4 + $0x10] sm:$0xff] %vm1536, %v1522
        %1540 = vst.msk [vmem:[#allocation4 + $0x18] sm:$0xff] %vm1536, %v1523
        %1541 = vst.msk [vmem:[#allocation4 + $0x20] sm:$0xff] %vm1536, %v1524
        %1542 = vst.msk [vmem:[#allocation4 + $0x28] sm:$0xff] %vm1536, %v1525
        %1543 = vst.msk [vmem:[#allocation4 + $0x30] sm:$0xff] %vm1536, %v1526
        %1544 = vst.msk [vmem:[#allocation4 + $0x38] sm:$0xff] %vm1536, %v1527
        %1545 = vst.msk [vmem:[#allocation4 + $0x40] sm:$0xff] %vm1536, %v1528
        %1546 = vst.msk [vmem:[#allocation4 + $0x48] sm:$0xff] %vm1536, %v1529
        %1547 = vst.msk [vmem:[#allocation4 + $0x50] sm:$0xff] %vm1536, %v1530
        %1548 = vst.msk [vmem:[#allocation4 + $0x58] sm:$0xff] %vm1536, %v1531
        %1549 = vst.msk [vmem:[#allocation4 + $0x60] sm:$0xff] %vm1536, %v1532
        %1550 = vst.msk [vmem:[#allocation4 + $0x68] sm:$0xff] %vm1536, %v1533
        %1551 = vst.msk [vmem:[#allocation4 + $0x70] sm:$0xff] %vm1536, %v1534
        %1552 = vst.msk [vmem:[#allocation4 + $0x78] sm:$0xff] %vm1536, %v1535
        %v1553 = vpack.c.bf16 %v1427, %v1425
        %v1554 = vpack.c.bf16 %v1431, %v1429
        %v1555 = vpack.c.bf16 %v1435, %v1433
        %v1556 = vpack.c.bf16 %v1439, %v1437
        %v1557 = vpack.c.bf16 %v1443, %v1441
        %v1558 = vpack.c.bf16 %v1447, %v1445
        %v1559 = vpack.c.bf16 %v1451, %v1449
        %v1560 = vpack.c.bf16 %v1455, %v1453
        %1561 = vmatprep.subr.bf16.mxu0 0
        %1562 = vmatpush1.bf16.xpose.msra.mxu0 0
        %1563 = vmatprep.subr.bf16.mxu0 0
        %1564 = vmatpush1.bf16.xpose.msra.mxu0 0
        %1565 = vmatprep.subr.bf16.mxu0 0
        %1566 = vmatpush1.bf16.xpose.msra.mxu0 0
        %1567 = vmatprep.subr.bf16.mxu0 0
        %1568 = vmatpush1.bf16.xpose.msra.mxu0 0
        %1569 = vmatprep.subr.bf16.mxu0 0
        %1570 = vmatpush1.bf16.xpose.msra.mxu0 %v856
        %1571 = vmatprep.subr.bf16.mxu0 0
        %1572 = vmatpush1.bf16.xpose.msra.mxu0 %v855
        %1573 = vmatprep.subr.bf16.mxu0 0
        %1574 = vmatpush1.bf16.xpose.msra.mxu0 %v854
        %1575 = vmatprep.subr.bf16.mxu0 0
        %1576 = vmatpush1.bf16.xpose.msra.mxu0 %v853
        %1577 = vmatprep.subr.bf16.mxu0 0
        %1578 = vmatpush2.bf16.xpose.msra.mxu0 0
        %1579 = vmatprep.subr.bf16.mxu0 0
        %1580 = vmatpush2.bf16.xpose.msra.mxu0 0
        %1581 = vmatprep.subr.bf16.mxu0 0
        %1582 = vmatpush2.bf16.xpose.msra.mxu0 0
        %1583 = vmatprep.subr.bf16.mxu0 0
        %1584 = vmatpush2.bf16.xpose.msra.mxu0 0
        %1585 = vmatprep.subr.bf16.mxu0 0
        %1586 = vmatpush2.bf16.xpose.msra.mxu0 0
        %1587 = vmatprep.subr.bf16.mxu0 0
        %1588 = vmatpush2.bf16.xpose.msra.mxu0 0
        %1589 = vmatprep.subr.bf16.mxu0 0
        %1590 = vmatpush2.bf16.xpose.msra.mxu0 0
        %1591 = vmatprep.subr.bf16.mxu0 0
        %1592 = vmatpush2.bf16.xpose.msra.mxu0 0
        %1593 = vmatprep.mubr.bf16.mxu0 0
        %1594 = vmatmul.mubr.bf16.gmra.mxu0 %v1553
        %v1595 = vpop.f32.mrf.mxu0
        %v1596 = vadd.f32 0.0, %v1595
        %v1597 = vpop.f32.mrf.mxu0
        %v1598 = vpop.f32.mrf.mxu0
        %v1599 = vadd.f32 0.0, %v1598
        %v1600 = vpop.f32.mrf.mxu0
        %1601 = vmatprep.mubr.bf16.mxu0 0
        %1602 = vmatmul.mubr.bf16.gmra.mxu0 %v1554
        %v1603 = vpop.f32.mrf.mxu0
        %v1604 = vadd.f32 0.0, %v1603
        %v1605 = vpop.f32.mrf.mxu0
        %v1606 = vpop.f32.mrf.mxu0
        %v1607 = vadd.f32 0.0, %v1606
        %v1608 = vpop.f32.mrf.mxu0
        %1609 = vmatprep.mubr.bf16.mxu0 0
        %1610 = vmatmul.mubr.bf16.gmra.mxu0 %v1555
        %v1611 = vpop.f32.mrf.mxu0
        %v1612 = vadd.f32 0.0, %v1611
        %v1613 = vpop.f32.mrf.mxu0
        %v1614 = vpop.f32.mrf.mxu0
        %v1615 = vadd.f32 0.0, %v1614
        %v1616 = vpop.f32.mrf.mxu0
        %1617 = vmatprep.mubr.bf16.mxu0 0
        %1618 = vmatmul.mubr.bf16.gmra.mxu0 %v1556
        %v1619 = vpop.f32.mrf.mxu0
        %v1620 = vadd.f32 0.0, %v1619
        %v1621 = vpop.f32.mrf.mxu0
        %v1622 = vpop.f32.mrf.mxu0
        %v1623 = vadd.f32 0.0, %v1622
        %v1624 = vpop.f32.mrf.mxu0
        %1625 = vmatprep.mubr.bf16.mxu0 0
        %1626 = vmatmul.mubr.bf16.gmra.mxu0 %v1557
        %v1627 = vpop.f32.mrf.mxu0
        %v1628 = vadd.f32 0.0, %v1627
        %v1629 = vpop.f32.mrf.mxu0
        %v1630 = vpop.f32.mrf.mxu0
        %v1631 = vadd.f32 0.0, %v1630
        %v1632 = vpop.f32.mrf.mxu0
        %1633 = vmatprep.mubr.bf16.mxu0 0
        %1634 = vmatmul.mubr.bf16.gmra.mxu0 %v1558
        %v1635 = vpop.f32.mrf.mxu0
        %v1636 = vadd.f32 0.0, %v1635
        %v1637 = vpop.f32.mrf.mxu0
        %v1638 = vpop.f32.mrf.mxu0
        %v1639 = vadd.f32 0.0, %v1638
        %v1640 = vpop.f32.mrf.mxu0
        %1641 = vmatprep.mubr.bf16.mxu0 0
        %1642 = vmatmul.mubr.bf16.gmra.mxu0 %v1559
        %v1643 = vpop.f32.mrf.mxu0
        %v1644 = vadd.f32 0.0, %v1643
        %v1645 = vpop.f32.mrf.mxu0
        %v1646 = vpop.f32.mrf.mxu0
        %v1647 = vadd.f32 0.0, %v1646
        %v1648 = vpop.f32.mrf.mxu0
        %1649 = vmatprep.mubr.bf16.mxu0 0
        %1650 = vmatmul.mubr.bf16.gmra.mxu0 %v1560
        %v1651 = vpop.f32.mrf.mxu0
        %v1652 = vadd.f32 0.0, %v1651
        %v1653 = vpop.f32.mrf.mxu0
        %v1654 = vpop.f32.mrf.mxu0
        %v1655 = vadd.f32 0.0, %v1654
        %v1656 = vpop.f32.mrf.mxu0
        %1657 = vdwg.mxu0
        %v1658 = vld [vmem:[#allocation5] sm:$0xff]
        %v1659 = vld [vmem:[#allocation5 + $0x8] sm:$0xff]
        %v1660 = vld [vmem:[#allocation5 + $0x10] sm:$0xff]
        %v1661 = vld [vmem:[#allocation5 + $0x18] sm:$0xff]
        %v1662 = vld [vmem:[#allocation5 + $0x20] sm:$0xff]
        %v1663 = vld [vmem:[#allocation5 + $0x28] sm:$0xff]
        %v1664 = vld [vmem:[#allocation5 + $0x30] sm:$0xff]
        %v1665 = vld [vmem:[#allocation5 + $0x38] sm:$0xff]
        %v1666 = vld [vmem:[#allocation5 + $0x40] sm:$0xff]
        %v1667 = vld [vmem:[#allocation5 + $0x48] sm:$0xff]
        %v1668 = vld [vmem:[#allocation5 + $0x50] sm:$0xff]
        %v1669 = vld [vmem:[#allocation5 + $0x58] sm:$0xff]
        %v1670 = vld [vmem:[#allocation5 + $0x60] sm:$0xff]
        %v1671 = vld [vmem:[#allocation5 + $0x68] sm:$0xff]
        %v1672 = vld [vmem:[#allocation5 + $0x70] sm:$0xff]
        %v1673 = vld [vmem:[#allocation5 + $0x78] sm:$0xff]
        %1675 = vset.pattern.permute.xlu0 0
        %1676 = vperm.xlu0 %1675, %v1297
        %v1677 = vpop.permute.xlu0 %1676
        %1680 = vset.pattern.permute.xlu0 0
        %1681 = vperm.xlu0 %1680, %v1299
        %v1682 = vpop.permute.xlu0 %1681
        %1685 = vset.pattern.permute.xlu0 0
        %1686 = vperm.xlu0 %1685, %v1301
        %v1687 = vpop.permute.xlu0 %1686
        %1690 = vset.pattern.permute.xlu0 0
        %1691 = vperm.xlu0 %1690, %v1303
        %v1692 = vpop.permute.xlu0 %1691
        %1695 = vset.pattern.permute.xlu0 0
        %1696 = vperm.xlu0 %1695, %v1305
        %v1697 = vpop.permute.xlu0 %1696
        %1700 = vset.pattern.permute.xlu0 0
        %1701 = vperm.xlu0 %1700, %v1307
        %v1702 = vpop.permute.xlu0 %1701
        %1705 = vset.pattern.permute.xlu0 0
        %1706 = vperm.xlu0 %1705, %v1309
        %v1707 = vpop.permute.xlu0 %1706
        %1710 = vset.pattern.permute.xlu0 0
        %1711 = vperm.xlu0 %1710, %v1311
        %v1712 = vpop.permute.xlu0 %1711
        %1715 = vset.pattern.permute.xlu0 0
        %1716 = vperm.xlu0 %1715, %v1313
        %v1717 = vpop.permute.xlu0 %1716
        %1720 = vset.pattern.permute.xlu0 0
        %1721 = vperm.xlu0 %1720, %v1315
        %v1722 = vpop.permute.xlu0 %1721
        %1725 = vset.pattern.permute.xlu0 0
        %1726 = vperm.xlu0 %1725, %v1317
        %v1727 = vpop.permute.xlu0 %1726
        %1730 = vset.pattern.permute.xlu0 0
        %1731 = vperm.xlu0 %1730, %v1319
        %v1732 = vpop.permute.xlu0 %1731
        %1735 = vset.pattern.permute.xlu0 0
        %1736 = vperm.xlu0 %1735, %v1321
        %v1737 = vpop.permute.xlu0 %1736
        %1740 = vset.pattern.permute.xlu0 0
        %1741 = vperm.xlu0 %1740, %v1323
        %v1742 = vpop.permute.xlu0 %1741
        %1745 = vset.pattern.permute.xlu0 0
        %1746 = vperm.xlu0 %1745, %v1325
        %v1747 = vpop.permute.xlu0 %1746
        %1750 = vset.pattern.permute.xlu0 0
        %1751 = vperm.xlu0 %1750, %v1327
        %v1752 = vpop.permute.xlu0 %1751
        %v1754 = vmul.f32 %v1677, %v1658
        %v1755 = vmul.f32 %v1682, %v1659
        %v1756 = vmul.f32 %v1687, %v1660
        %v1757 = vmul.f32 %v1692, %v1661
        %v1758 = vmul.f32 %v1697, %v1662
        %v1759 = vmul.f32 %v1702, %v1663
        %v1760 = vmul.f32 %v1707, %v1664
        %v1761 = vmul.f32 %v1712, %v1665
        %v1762 = vmul.f32 %v1717, %v1666
        %v1763 = vmul.f32 %v1722, %v1667
        %v1764 = vmul.f32 %v1727, %v1668
        %v1765 = vmul.f32 %v1732, %v1669
        %v1766 = vmul.f32 %v1737, %v1670
        %v1767 = vmul.f32 %v1742, %v1671
        %v1768 = vmul.f32 %v1747, %v1672
        %v1769 = vmul.f32 %v1752, %v1673
        %v1770 = vadd.f32 %v1754, %v1596
        %v1771 = vadd.f32 %v1755, %v1599
        %v1772 = vadd.f32 %v1756, %v1604
        %v1773 = vadd.f32 %v1757, %v1607
        %v1774 = vadd.f32 %v1758, %v1612
        %v1775 = vadd.f32 %v1759, %v1615
        %v1776 = vadd.f32 %v1760, %v1620
        %v1777 = vadd.f32 %v1761, %v1623
        %v1778 = vadd.f32 %v1762, %v1628
        %v1779 = vadd.f32 %v1763, %v1631
        %v1780 = vadd.f32 %v1764, %v1636
        %v1781 = vadd.f32 %v1765, %v1639
        %v1782 = vadd.f32 %v1766, %v1644
        %v1783 = vadd.f32 %v1767, %v1647
        %v1784 = vadd.f32 %v1768, %v1652
        %v1785 = vadd.f32 %v1769, %v1655
        %1786 = vst.msk [vmem:[#allocation5] sm:$0xff] %vm933, %v1770
        %1787 = vst.msk [vmem:[#allocation5 + $0x8] sm:$0xff] %vm933, %v1771
        %1788 = vst.msk [vmem:[#allocation5 + $0x10] sm:$0xff] %vm933, %v1772
        %1789 = vst.msk [vmem:[#allocation5 + $0x18] sm:$0xff] %vm933, %v1773
        %1790 = vst.msk [vmem:[#allocation5 + $0x20] sm:$0xff] %vm933, %v1774
        %1791 = vst.msk [vmem:[#allocation5 + $0x28] sm:$0xff] %vm933, %v1775
        %1792 = vst.msk [vmem:[#allocation5 + $0x30] sm:$0xff] %vm933, %v1776
        %1793 = vst.msk [vmem:[#allocation5 + $0x38] sm:$0xff] %vm933, %v1777
        %1794 = vst.msk [vmem:[#allocation5 + $0x40] sm:$0xff] %vm933, %v1778
        %1795 = vst.msk [vmem:[#allocation5 + $0x48] sm:$0xff] %vm933, %v1779
        %1796 = vst.msk [vmem:[#allocation5 + $0x50] sm:$0xff] %vm933, %v1780
        %1797 = vst.msk [vmem:[#allocation5 + $0x58] sm:$0xff] %vm933, %v1781
        %1798 = vst.msk [vmem:[#allocation5 + $0x60] sm:$0xff] %vm933, %v1782
        %1799 = vst.msk [vmem:[#allocation5 + $0x68] sm:$0xff] %vm933, %v1783
        %1800 = vst.msk [vmem:[#allocation5 + $0x70] sm:$0xff] %vm933, %v1784
        %1801 = vst.msk [vmem:[#allocation5 + $0x78] sm:$0xff] %vm933, %v1785
        %1802 = vst.msk [vmem:[#allocation3] sm:$0xff] %vm1536, %v1264
        %1803 = vst.msk [vmem:[#allocation3 + $0x8] sm:$0xff] %vm1536, %v1265
        %1804 = vst.msk [vmem:[#allocation3 + $0x10] sm:$0xff] %vm1536, %v1266
        %1805 = vst.msk [vmem:[#allocation3 + $0x18] sm:$0xff] %vm1536, %v1267
        %1806 = vst.msk [vmem:[#allocation3 + $0x20] sm:$0xff] %vm1536, %v1268
        %1807 = vst.msk [vmem:[#allocation3 + $0x28] sm:$0xff] %vm1536, %v1269
        %1808 = vst.msk [vmem:[#allocation3 + $0x30] sm:$0xff] %vm1536, %v1270
        %1809 = vst.msk [vmem:[#allocation3 + $0x38] sm:$0xff] %vm1536, %v1271
        %1810 = vst.msk [vmem:[#allocation3 + $0x40] sm:$0xff] %vm1536, %v1272
        %1811 = vst.msk [vmem:[#allocation3 + $0x48] sm:$0xff] %vm1536, %v1273
        %1812 = vst.msk [vmem:[#allocation3 + $0x50] sm:$0xff] %vm1536, %v1274
        %1813 = vst.msk [vmem:[#allocation3 + $0x58] sm:$0xff] %vm1536, %v1275
        %1814 = vst.msk [vmem:[#allocation3 + $0x60] sm:$0xff] %vm1536, %v1276
        %1815 = vst.msk [vmem:[#allocation3 + $0x68] sm:$0xff] %vm1536, %v1277
        %1816 = vst.msk [vmem:[#allocation3 + $0x70] sm:$0xff] %vm1536, %v1278
        %1817 = vst.msk [vmem:[#allocation3 + $0x78] sm:$0xff] %vm1536, %v1279
        %p1818 = scmp.eq.s32.totalorder %s27, 4
        // Predicated region
        $region125: #{cross_feature_affinity_pooling.2} parent=111 // pred_check
          %p1819 = pneg %p1818
        $region126: #{cross_feature_affinity_pooling.2} parent=111 // pred_check_branch
          %1821 = sbr.rel (%p1819) target = $region128
        $region127: #{cross_feature_affinity_pooling.2} parent=111 // pred_region
          %v1822 = vld [vmem:[#allocation5] sm:$0xff]
          %v1823 = vld [vmem:[#allocation5 + $0x8] sm:$0xff]
          %v1824 = vld [vmem:[#allocation5 + $0x10] sm:$0xff]
          %v1825 = vld [vmem:[#allocation5 + $0x18] sm:$0xff]
          %v1826 = vld [vmem:[#allocation5 + $0x20] sm:$0xff]
          %v1827 = vld [vmem:[#allocation5 + $0x28] sm:$0xff]
          %v1828 = vld [vmem:[#allocation5 + $0x30] sm:$0xff]
          %v1829 = vld [vmem:[#allocation5 + $0x38] sm:$0xff]
          %v1830 = vld [vmem:[#allocation5 + $0x40] sm:$0xff]
          %v1831 = vld [vmem:[#allocation5 + $0x48] sm:$0xff]
          %v1832 = vld [vmem:[#allocation5 + $0x50] sm:$0xff]
          %v1833 = vld [vmem:[#allocation5 + $0x58] sm:$0xff]
          %v1834 = vld [vmem:[#allocation5 + $0x60] sm:$0xff]
          %v1835 = vld [vmem:[#allocation5 + $0x68] sm:$0xff]
          %v1836 = vld [vmem:[#allocation5 + $0x70] sm:$0xff]
          %v1837 = vld [vmem:[#allocation5 + $0x78] sm:$0xff]
          %v1838 = vld [vmem:[#allocation4] sm:$0xff]
          %v1839 = vld [vmem:[#allocation4 + $0x8] sm:$0xff]
          %v1840 = vld [vmem:[#allocation4 + $0x10] sm:$0xff]
          %v1841 = vld [vmem:[#allocation4 + $0x18] sm:$0xff]
          %v1842 = vld [vmem:[#allocation4 + $0x20] sm:$0xff]
          %v1843 = vld [vmem:[#allocation4 + $0x28] sm:$0xff]
          %v1844 = vld [vmem:[#allocation4 + $0x30] sm:$0xff]
          %v1845 = vld [vmem:[#allocation4 + $0x38] sm:$0xff]
          %v1846 = vld [vmem:[#allocation4 + $0x40] sm:$0xff]
          %v1847 = vld [vmem:[#allocation4 + $0x48] sm:$0xff]
          %v1848 = vld [vmem:[#allocation4 + $0x50] sm:$0xff]
          %v1849 = vld [vmem:[#allocation4 + $0x58] sm:$0xff]
          %v1850 = vld [vmem:[#allocation4 + $0x60] sm:$0xff]
          %v1851 = vld [vmem:[#allocation4 + $0x68] sm:$0xff]
          %v1852 = vld [vmem:[#allocation4 + $0x70] sm:$0xff]
          %v1853 = vld [vmem:[#allocation4 + $0x78] sm:$0xff]
          %v1854 = vrcp.pop %v1838
          %v1855 = vrcp.pop %v1839
          %v1856 = vrcp.pop %v1840
          %v1857 = vrcp.pop %v1841
          %v1858 = vrcp.pop %v1842
          %v1859 = vrcp.pop %v1843
          %v1860 = vrcp.pop %v1844
          %v1861 = vrcp.pop %v1845
          %v1862 = vrcp.pop %v1846
          %v1863 = vrcp.pop %v1847
          %v1864 = vrcp.pop %v1848
          %v1865 = vrcp.pop %v1849
          %v1866 = vrcp.pop %v1850
          %v1867 = vrcp.pop %v1851
          %v1868 = vrcp.pop %v1852
          %v1869 = vrcp.pop %v1853
          %1871 = vset.pattern.permute.xlu0 0
          %1872 = vperm.xlu0 %1871, %v1854
          %v1873 = vpop.permute.xlu0 %1872
          %1876 = vset.pattern.permute.xlu0 0
          %1877 = vperm.xlu0 %1876, %v1855
          %v1878 = vpop.permute.xlu0 %1877
          %1881 = vset.pattern.permute.xlu0 0
          %1882 = vperm.xlu0 %1881, %v1856
          %v1883 = vpop.permute.xlu0 %1882
          %1886 = vset.pattern.permute.xlu0 0
          %1887 = vperm.xlu0 %1886, %v1857
          %v1888 = vpop.permute.xlu0 %1887
          %1891 = vset.pattern.permute.xlu0 0
          %1892 = vperm.xlu0 %1891, %v1858
          %v1893 = vpop.permute.xlu0 %1892
          %1896 = vset.pattern.permute.xlu0 0
          %1897 = vperm.xlu0 %1896, %v1859
          %v1898 = vpop.permute.xlu0 %1897
          %1901 = vset.pattern.permute.xlu0 0
          %1902 = vperm.xlu0 %1901, %v1860
          %v1903 = vpop.permute.xlu0 %1902
          %1906 = vset.pattern.permute.xlu0 0
          %1907 = vperm.xlu0 %1906, %v1861
          %v1908 = vpop.permute.xlu0 %1907
          %1911 = vset.pattern.permute.xlu0 0
          %1912 = vperm.xlu0 %1911, %v1862
          %v1913 = vpop.permute.xlu0 %1912
          %1916 = vset.pattern.permute.xlu0 0
          %1917 = vperm.xlu0 %1916, %v1863
          %v1918 = vpop.permute.xlu0 %1917
          %1921 = vset.pattern.permute.xlu0 0
          %1922 = vperm.xlu0 %1921, %v1864
          %v1923 = vpop.permute.xlu0 %1922
          %1926 = vset.pattern.permute.xlu0 0
          %1927 = vperm.xlu0 %1926, %v1865
          %v1928 = vpop.permute.xlu0 %1927
          %1931 = vset.pattern.permute.xlu0 0
          %1932 = vperm.xlu0 %1931, %v1866
          %v1933 = vpop.permute.xlu0 %1932
          %1936 = vset.pattern.permute.xlu0 0
          %1937 = vperm.xlu0 %1936, %v1867
          %v1938 = vpop.permute.xlu0 %1937
          %1941 = vset.pattern.permute.xlu0 0
          %1942 = vperm.xlu0 %1941, %v1868
          %v1943 = vpop.permute.xlu0 %1942
          %1946 = vset.pattern.permute.xlu0 0
          %1947 = vperm.xlu0 %1946, %v1869
          %v1948 = vpop.permute.xlu0 %1947
          %v1950 = vmul.f32 %v1822, %v1873
          %v1951 = vmul.f32 %v1823, %v1878
          %v1952 = vmul.f32 %v1824, %v1883
          %v1953 = vmul.f32 %v1825, %v1888
          %v1954 = vmul.f32 %v1826, %v1893
          %v1955 = vmul.f32 %v1827, %v1898
          %v1956 = vmul.f32 %v1828, %v1903
          %v1957 = vmul.f32 %v1829, %v1908
          %v1958 = vmul.f32 %v1830, %v1913
          %v1959 = vmul.f32 %v1831, %v1918
          %v1960 = vmul.f32 %v1832, %v1923
          %v1961 = vmul.f32 %v1833, %v1928
          %v1962 = vmul.f32 %v1834, %v1933
          %v1963 = vmul.f32 %v1835, %v1938
          %v1964 = vmul.f32 %v1836, %v1943
          %v1965 = vmul.f32 %v1837, %v1948
          %s1966 = smul.u32 %s26, 128
          %v1967 = vlaneseq
          %v1968 = vshrl.u32 %v1967, 7
          %v1969 = vadd.s32 %v1968, 8
          %v1970 = vadd.s32 %v1968, 16
          %v1971 = vadd.s32 %v1968, 24
          %v1972 = vadd.s32 %v1968, 32
          %v1973 = vadd.s32 %v1968, 40
          %v1974 = vadd.s32 %v1968, 48
          %v1975 = vadd.s32 %v1968, 56
          %v1976 = vadd.s32 %v1968, 64
          %v1977 = vadd.s32 %v1968, 72
          %v1978 = vadd.s32 %v1968, 80
          %v1979 = vadd.s32 %v1968, 88
          %v1980 = vadd.s32 %v1968, 96
          %v1981 = vadd.s32 %v1968, 104
          %v1982 = vadd.s32 %v1968, 112
          %v1983 = vadd.s32 %v1968, 120
          %v1984 = vstv %s1966
          %v1985 = vadd.s32 %v1984, %v1968
          %v1986 = vadd.s32 %v1984, %v1969
          %v1987 = vadd.s32 %v1984, %v1970
          %v1988 = vadd.s32 %v1984, %v1971
          %v1989 = vadd.s32 %v1984, %v1972
          %v1990 = vadd.s32 %v1984, %v1973
          %v1991 = vadd.s32 %v1984, %v1974
          %v1992 = vadd.s32 %v1984, %v1975
          %v1993 = vadd.s32 %v1984, %v1976
          %v1994 = vadd.s32 %v1984, %v1977
          %v1995 = vadd.s32 %v1984, %v1978
          %v1996 = vadd.s32 %v1984, %v1979
          %v1997 = vadd.s32 %v1984, %v1980
          %v1998 = vadd.s32 %v1984, %v1981
          %v1999 = vadd.s32 %v1984, %v1982
          %v2000 = vadd.s32 %v1984, %v1983
          %vm2001 = vcmp.lt.s32.totalorder %v1985, 576
          %vm2002 = vcmp.lt.s32.totalorder %v1986, 576
          %vm2003 = vcmp.lt.s32.totalorder %v1987, 576
          %vm2004 = vcmp.lt.s32.totalorder %v1988, 576
          %vm2005 = vcmp.lt.s32.totalorder %v1989, 576
          %vm2006 = vcmp.lt.s32.totalorder %v1990, 576
          %vm2007 = vcmp.lt.s32.totalorder %v1991, 576
          %vm2008 = vcmp.lt.s32.totalorder %v1992, 576
          %vm2009 = vcmp.lt.s32.totalorder %v1993, 576
          %vm2010 = vcmp.lt.s32.totalorder %v1994, 576
          %vm2011 = vcmp.lt.s32.totalorder %v1995, 576
          %vm2012 = vcmp.lt.s32.totalorder %v1996, 576
          %vm2013 = vcmp.lt.s32.totalorder %v1997, 576
          %vm2014 = vcmp.lt.s32.totalorder %v1998, 576
          %vm2015 = vcmp.lt.s32.totalorder %v1999, 576
          %vm2016 = vcmp.lt.s32.totalorder %v2000, 576
          %v2017 = vsel %vm2001, 1, 0
          %v2018 = vsel %vm2002, 1, 0
          %v2019 = vsel %vm2003, 1, 0
          %v2020 = vsel %vm2004, 1, 0
          %v2021 = vsel %vm2005, 1, 0
          %v2022 = vsel %vm2006, 1, 0
          %v2023 = vsel %vm2007, 1, 0
          %v2024 = vsel %vm2008, 1, 0
          %v2025 = vsel %vm2009, 1, 0
          %v2026 = vsel %vm2010, 1, 0
          %v2027 = vsel %vm2011, 1, 0
          %v2028 = vsel %vm2012, 1, 0
          %v2029 = vsel %vm2013, 1, 0
          %v2030 = vsel %vm2014, 1, 0
          %v2031 = vsel %vm2015, 1, 0
          %v2032 = vsel %vm2016, 1, 0
          %vm2033 = vcmp.eq.s32.totalorder %v2017, 1
          %vm2034 = vcmp.eq.s32.totalorder %v2018, 1
          %vm2035 = vcmp.eq.s32.totalorder %v2019, 1
          %vm2036 = vcmp.eq.s32.totalorder %v2020, 1
          %vm2037 = vcmp.eq.s32.totalorder %v2021, 1
          %vm2038 = vcmp.eq.s32.totalorder %v2022, 1
          %vm2039 = vcmp.eq.s32.totalorder %v2023, 1
          %vm2040 = vcmp.eq.s32.totalorder %v2024, 1
          %vm2041 = vcmp.eq.s32.totalorder %v2025, 1
          %vm2042 = vcmp.eq.s32.totalorder %v2026, 1
          %vm2043 = vcmp.eq.s32.totalorder %v2027, 1
          %vm2044 = vcmp.eq.s32.totalorder %v2028, 1
          %vm2045 = vcmp.eq.s32.totalorder %v2029, 1
          %vm2046 = vcmp.eq.s32.totalorder %v2030, 1
          %vm2047 = vcmp.eq.s32.totalorder %v2031, 1
          %vm2048 = vcmp.eq.s32.totalorder %v2032, 1
          %v2049 = vsel %vm2033, %v1950, 0.0
          %v2050 = vsel %vm2034, %v1951, 0.0
          %v2051 = vsel %vm2035, %v1952, 0.0
          %v2052 = vsel %vm2036, %v1953, 0.0
          %v2053 = vsel %vm2037, %v1954, 0.0
          %v2054 = vsel %vm2038, %v1955, 0.0
          %v2055 = vsel %vm2039, %v1956, 0.0
          %v2056 = vsel %vm2040, %v1957, 0.0
          %v2057 = vsel %vm2041, %v1958, 0.0
          %v2058 = vsel %vm2042, %v1959, 0.0
          %v2059 = vsel %vm2043, %v1960, 0.0
          %v2060 = vsel %vm2044, %v1961, 0.0
          %v2061 = vsel %vm2045, %v1962, 0.0
          %v2062 = vsel %vm2046, %v1963, 0.0
          %v2063 = vsel %vm2047, %v1964, 0.0
          %v2064 = vsel %vm2048, %v1965, 0.0
          %v2065 = vsel %vm933, %v2049, 0.0
          %v2066 = vsel %vm933, %v2050, 0.0
          %v2067 = vadd.f32 %v2065, %v2066
          %v2068 = vsel %vm933, %v2051, 0.0
          %v2069 = vadd.f32 %v2067, %v2068
          %v2070 = vsel %vm933, %v2052, 0.0
          %v2071 = vadd.f32 %v2069, %v2070
          %v2072 = vsel %vm933, %v2053, 0.0
          %v2073 = vadd.f32 %v2071, %v2072
          %v2074 = vsel %vm933, %v2054, 0.0
          %v2075 = vadd.f32 %v2073, %v2074
          %v2076 = vsel %vm933, %v2055, 0.0
          %v2077 = vadd.f32 %v2075, %v2076
          %v2078 = vsel %vm933, %v2056, 0.0
          %v2079 = vadd.f32 %v2077, %v2078
          %v2080 = vsel %vm933, %v2057, 0.0
          %v2081 = vadd.f32 %v2079, %v2080
          %v2082 = vsel %vm933, %v2058, 0.0
          %v2083 = vadd.f32 %v2081, %v2082
          %v2084 = vsel %vm933, %v2059, 0.0
          %v2085 = vadd.f32 %v2083, %v2084
          %v2086 = vsel %vm933, %v2060, 0.0
          %v2087 = vadd.f32 %v2085, %v2086
          %v2088 = vsel %vm933, %v2061, 0.0
          %v2089 = vadd.f32 %v2087, %v2088
          %v2090 = vsel %vm933, %v2062, 0.0
          %v2091 = vadd.f32 %v2089, %v2090
          %v2092 = vsel %vm933, %v2063, 0.0
          %v2093 = vadd.f32 %v2091, %v2092
          %v2094 = vsel %vm933, %v2064, 0.0
          %v2095 = vadd.f32 %v2093, %v2094
          %v2096 = vrot.slane %v2095, 4
          %v2097 = vadd.f32 %v2095, %v2096
          %v2098 = vrot.slane %v2097, 2
          %v2099 = vadd.f32 %v2097, %v2098
          %v2100 = vrot.slane %v2099, 1
          %v2101 = vadd.f32 %v2099, %v2100
          %vm2102 = vcmask 516096
          %2103 = vst.msk [vmem:[%s504] sm:$0x1] %vm2102, %v2101
          %v2104 = vmul.f32 %v2049, %v2049
          %v2105 = vmul.f32 %v2050, %v2050
          %v2106 = vmul.f32 %v2051, %v2051
          %v2107 = vmul.f32 %v2052, %v2052
          %v2108 = vmul.f32 %v2053, %v2053
          %v2109 = vmul.f32 %v2054, %v2054
          %v2110 = vmul.f32 %v2055, %v2055
          %v2111 = vmul.f32 %v2056, %v2056
          %v2112 = vmul.f32 %v2057, %v2057
          %v2113 = vmul.f32 %v2058, %v2058
          %v2114 = vmul.f32 %v2059, %v2059
          %v2115 = vmul.f32 %v2060, %v2060
          %v2116 = vmul.f32 %v2061, %v2061
          %v2117 = vmul.f32 %v2062, %v2062
          %v2118 = vmul.f32 %v2063, %v2063
          %v2119 = vmul.f32 %v2064, %v2064
          %v2120 = vsel %vm933, %v2104, 0.0
          %v2121 = vsel %vm933, %v2105, 0.0
          %v2122 = vadd.f32 %v2120, %v2121
          %v2123 = vsel %vm933, %v2106, 0.0
          %v2124 = vadd.f32 %v2122, %v2123
          %v2125 = vsel %vm933, %v2107, 0.0
          %v2126 = vadd.f32 %v2124, %v2125
          %v2127 = vsel %vm933, %v2108, 0.0
          %v2128 = vadd.f32 %v2126, %v2127
          %v2129 = vsel %vm933, %v2109, 0.0
          %v2130 = vadd.f32 %v2128, %v2129
          %v2131 = vsel %vm933, %v2110, 0.0
          %v2132 = vadd.f32 %v2130, %v2131
          %v2133 = vsel %vm933, %v2111, 0.0
          %v2134 = vadd.f32 %v2132, %v2133
          %v2135 = vsel %vm933, %v2112, 0.0
          %v2136 = vadd.f32 %v2134, %v2135
          %v2137 = vsel %vm933, %v2113, 0.0
          %v2138 = vadd.f32 %v2136, %v2137
          %v2139 = vsel %vm933, %v2114, 0.0
          %v2140 = vadd.f32 %v2138, %v2139
          %v2141 = vsel %vm933, %v2115, 0.0
          %v2142 = vadd.f32 %v2140, %v2141
          %v2143 = vsel %vm933, %v2116, 0.0
          %v2144 = vadd.f32 %v2142, %v2143
          %v2145 = vsel %vm933, %v2117, 0.0
          %v2146 = vadd.f32 %v2144, %v2145
          %v2147 = vsel %vm933, %v2118, 0.0
          %v2148 = vadd.f32 %v2146, %v2147
          %v2149 = vsel %vm933, %v2119, 0.0
          %v2150 = vadd.f32 %v2148, %v2149
          %v2151 = vrot.slane %v2150, 4
          %v2152 = vadd.f32 %v2150, %v2151
          %v2153 = vrot.slane %v2152, 2
          %v2154 = vadd.f32 %v2152, %v2153
          %v2155 = vrot.slane %v2154, 1
          %v2156 = vadd.f32 %v2154, %v2155
          %2157 = vst.msk [vmem:[%s511] sm:$0x1] %vm2102, %v2156
          %2158 = vxpose.xlu0.b32.start [1/16] %v2049, 128
          %2159 = vxpose.xlu0.b32.cont [2/16] %v2050, 128
          %2160 = vxpose.xlu0.b32.cont [3/16] %v2051, 128
          %2161 = vxpose.xlu0.b32.cont [4/16] %v2052, 128
          %2162 = vxpose.xlu0.b32.cont [5/16] %v2053, 128
          %2163 = vxpose.xlu0.b32.cont [6/16] %v2054, 128
          %2164 = vxpose.xlu0.b32.cont [7/16] %v2055, 128
          %2165 = vxpose.xlu0.b32.cont [8/16] %v2056, 128
          %2166 = vxpose.xlu0.b32.cont [9/16] %v2057, 128
          %2167 = vxpose.xlu0.b32.cont [10/16] %v2058, 128
          %2168 = vxpose.xlu0.b32.cont [11/16] %v2059, 128
          %2169 = vxpose.xlu0.b32.cont [12/16] %v2060, 128
          %2170 = vxpose.xlu0.b32.cont [13/16] %v2061, 128
          %2171 = vxpose.xlu0.b32.cont [14/16] %v2062, 128
          %2172 = vxpose.xlu0.b32.cont [15/16] %v2063, 128
          %2173 = vxpose.xlu0.b32.end [16/16] %v2064, 128
          %v2174 = vpop.trf.xlu0
          %v2175 = vpop.trf.xlu0
          %v2176 = vpop.trf.xlu0
          %v2177 = vpop.trf.xlu0
          %v2178 = vpop.trf.xlu0
          %v2179 = vpop.trf.xlu0
          %v2180 = vpop.trf.xlu0
          %v2181 = vpop.trf.xlu0
          %v2182 = vpop.trf.xlu0
          %v2183 = vpop.trf.xlu0
          %v2184 = vpop.trf.xlu0
          %v2185 = vpop.trf.xlu0
          %v2186 = vpop.trf.xlu0
          %v2187 = vpop.trf.xlu0
          %v2188 = vpop.trf.xlu0
          %v2189 = vpop.trf.xlu0
          %2190 = vst [vmem:[%s479] sm:$0xff] %v2174
          %2191 = vst [vmem:[%s479 + $0x8] sm:$0xff] %v2175
          %2192 = vst [vmem:[%s479 + $0x10] sm:$0xff] %v2176
          %2193 = vst [vmem:[%s479 + $0x18] sm:$0xff] %v2177
          %2194 = vst [vmem:[%s479 + $0x20] sm:$0xff] %v2178
          %2195 = vst [vmem:[%s479 + $0x28] sm:$0xff] %v2179
          %2196 = vst [vmem:[%s479 + $0x30] sm:$0xff] %v2180
          %2197 = vst [vmem:[%s479 + $0x38] sm:$0xff] %v2181
        $region128: #{cross_feature_affinity_pooling.2} parent=111 // pred_fallthru
          _
        %s2198 = sand.u32 %s189, 1
        %s2199 = sand.u32 %s189, 1
        %s2200 = smul.addr %s2199, 64
        %s2201 = scalar_lea.vmem [#allocation8], %s2200
        %p2202 = scmp.lt.s32.totalorder %s25, 1
        %s2203 = scalar_select %p2202, %s25, 1
        %p2204 = scmp.lt.s32.totalorder %s26, 4
        %s2205 = scalar_select %p2204, %s26, 4
        %s2206 = smul.addr %s2203, 5
        %s2207 = sadd.s32 %s2205, %s2206
        %s2208 = scalar_lea.vmem %s7, %s2207
        %p2209 = scmp.lt.s32.totalorder %s25, 1
        %s2210 = scalar_select %p2209, %s25, 1
        %p2211 = scmp.lt.s32.totalorder %s26, 4
        %s2212 = scalar_select %p2211, %s26, 4
        %s2213 = smul.addr %s2210, 5
        %s2214 = sadd.s32 %s2212, %s2213
        %s2215 = scalar_lea.vmem %s8, %s2214
        // Predicated region
        $region129: #{cross_feature_affinity_pooling.2} parent=111 // pred_check
          %p2216 = pneg %p199
        $region130: #{cross_feature_affinity_pooling.2} parent=111 // pred_check_branch
          %2218 = sbr.rel (%p2216) target = $region132
        $region131: #{cross_feature_affinity_pooling.2} parent=111 // pred_region
          %s2219 = smul.addr %s25, 40
          %s2220 = sadd.s32 %s26, %s2219
          %s2221 = smul.addr %s2220, 8
          %s2222 = scalar_lea.vmem %s6, %s2221
          // Predicated region
          $region133: #{cross_feature_affinity_pooling.2} parent=131 // pred_check
            _
          $region134: #{cross_feature_affinity_pooling.2} parent=131 // pred_check_branch
            %2224 = sbr.rel (0) target = $region136
          $region135: #{cross_feature_affinity_pooling.2} parent=131 // pred_region
            // Predicated region
            $region137: #{cross_feature_affinity_pooling.2} parent=135 // pred_check
              _
            $region138: #{cross_feature_affinity_pooling.2} parent=135 // pred_check_branch
              %2226 = sbr.rel (0) target = $region140
            $region139: #{cross_feature_affinity_pooling.2} parent=135 // pred_region
              // Predicated region
              $region152: #{cross_feature_affinity_pooling.2} parent=139 // pred_check
                _
              $region153: #{cross_feature_affinity_pooling.2} parent=139 // pred_check_branch
                %2256 = sbr.rel (0) target = $region155
              $region154: #{cross_feature_affinity_pooling.2} parent=139 // pred_region
                loop: start=0, step=1, limit=1
                $region156: #{cross_feature_affinity_pooling.2} parent=154 // loop_pre_header
                  _
                $region157: #{cross_feature_affinity_pooling.2} parent=154 // loop_header
                  %s2258 = sphi 0, %s2262
                  %p2259 = scmp.ge.s32.totalorder %s2258, 1
                  %s2263 = sphi %s2201, %s2201
                  %s2264 = sphi %s2222, %s2222
                $region158: #{cross_feature_affinity_pooling.2} parent=154 // loop_header_branch
                  %2261 = sbr.rel (%p2259) target = $region162
                $region159: #{cross_feature_affinity_pooling.2} parent=154 // loop_body
                  %v2265 = vld [vmem:[%s2263] sm:$0xff]
                  %2266 = vst [vmem:[%s2264] sm:$0xff] %v2265
                  %v2267 = vld [vmem:[%s2263 + $0x8] sm:$0xff]
                  %2268 = vst [vmem:[%s2264 + $0x28] sm:$0xff] %v2267
                  %v2269 = vld [vmem:[%s2263 + $0x10] sm:$0xff]
                  %2270 = vst [vmem:[%s2264 + $0x50] sm:$0xff] %v2269
                  %v2271 = vld [vmem:[%s2263 + $0x18] sm:$0xff]
                  %2272 = vst [vmem:[%s2264 + $0x78] sm:$0xff] %v2271
                  %v2273 = vld [vmem:[%s2263 + $0x20] sm:$0xff]
                  %2274 = vst [vmem:[%s2264 + $0xa0] sm:$0xff] %v2273
                  %v2275 = vld [vmem:[%s2263 + $0x28] sm:$0xff]
                  %2276 = vst [vmem:[%s2264 + $0xc8] sm:$0xff] %v2275
                  %v2277 = vld [vmem:[%s2263 + $0x30] sm:$0xff]
                  %2278 = vst [vmem:[%s2264 + $0xf0] sm:$0xff] %v2277
                  %v2279 = vld [vmem:[%s2263 + $0x38] sm:$0xff]
                  %2280 = vst [vmem:[%s2264 + $0x118] sm:$0xff] %v2279
                $region160: #{cross_feature_affinity_pooling.2} parent=154 // loop_footer
                  %s2262 = sadd.s32 1, %s2258
                $region161: #{cross_feature_affinity_pooling.2} parent=154 // loop_footer_branch
                  %2257 = sbr.rel target = $region157
                $region162: #{cross_feature_affinity_pooling.2} parent=154 // loop_exit
                  _
              $region155: #{cross_feature_affinity_pooling.2} parent=139 // pred_fallthru
                _
              // Predicated region
              $region163: #{cross_feature_affinity_pooling.2} parent=139 // pred_check
                _
              $region164: #{cross_feature_affinity_pooling.2} parent=139 // pred_check_branch
                %2282 = sbr.rel target = $region166
              $region165: #{cross_feature_affinity_pooling.2} parent=139 // pred_region
                _
              $region166: #{cross_feature_affinity_pooling.2} parent=139 // pred_fallthru
                _
            $region140: #{cross_feature_affinity_pooling.2} parent=135 // pred_fallthru
              _
            // Predicated region
            $region141: #{cross_feature_affinity_pooling.2} parent=135 // pred_check
              _
            $region142: #{cross_feature_affinity_pooling.2} parent=135 // pred_check_branch
              %2228 = sbr.rel target = $region144
            $region143: #{cross_feature_affinity_pooling.2} parent=135 // pred_region
              %s2230 = ssub.s32 256, 1
              loop: start=0, step=1, limit=1
              $region145: #{cross_feature_affinity_pooling.2} parent=143 // loop_pre_header
                _
              $region146: #{cross_feature_affinity_pooling.2} parent=143 // loop_header
                %s2232 = sphi 0, %s2236
                %p2233 = scmp.ge.s32.totalorder %s2232, 1
                %s2237 = sphi %s2201, %s2201
                %s2238 = sphi %s2222, %s2222
              $region147: #{cross_feature_affinity_pooling.2} parent=143 // loop_header_branch
                %2235 = sbr.rel (%p2233) target = $region151
              $region148: #{cross_feature_affinity_pooling.2} parent=143 // loop_body
                %v2239 = vld [vmem:[%s2237] sm:%s2230]
                %2240 = vst [vmem:[%s2238] sm:%s2230] %v2239
                %v2241 = vld [vmem:[%s2237 + $0x8] sm:%s2230]
                %2242 = vst [vmem:[%s2238 + $0x28] sm:%s2230] %v2241
                %v2243 = vld [vmem:[%s2237 + $0x10] sm:%s2230]
                %2244 = vst [vmem:[%s2238 + $0x50] sm:%s2230] %v2243
                %v2245 = vld [vmem:[%s2237 + $0x18] sm:%s2230]
                %2246 = vst [vmem:[%s2238 + $0x78] sm:%s2230] %v2245
                %v2247 = vld [vmem:[%s2237 + $0x20] sm:%s2230]
                %2248 = vst [vmem:[%s2238 + $0xa0] sm:%s2230] %v2247
                %v2249 = vld [vmem:[%s2237 + $0x28] sm:%s2230]
                %2250 = vst [vmem:[%s2238 + $0xc8] sm:%s2230] %v2249
                %v2251 = vld [vmem:[%s2237 + $0x30] sm:%s2230]
                %2252 = vst [vmem:[%s2238 + $0xf0] sm:%s2230] %v2251
                %v2253 = vld [vmem:[%s2237 + $0x38] sm:%s2230]
                %2254 = vst [vmem:[%s2238 + $0x118] sm:%s2230] %v2253
              $region149: #{cross_feature_affinity_pooling.2} parent=143 // loop_footer
                %s2236 = sadd.s32 1, %s2232
              $region150: #{cross_feature_affinity_pooling.2} parent=143 // loop_footer_branch
                %2231 = sbr.rel target = $region146
              $region151: #{cross_feature_affinity_pooling.2} parent=143 // loop_exit
                _
            $region144: #{cross_feature_affinity_pooling.2} parent=135 // pred_fallthru
              _
          $region136: #{cross_feature_affinity_pooling.2} parent=131 // pred_fallthru
            _
          %2283 = vnop
        $region132: #{cross_feature_affinity_pooling.2} parent=111 // pred_fallthru
          _
        // Predicated region
        $region167: #{cross_feature_affinity_pooling.2} parent=111 // pred_check
          %p2284 = pneg %p227
        $region168: #{cross_feature_affinity_pooling.2} parent=111 // pred_check_branch
          %2286 = sbr.rel (%p2284) target = $region170
        $region169: #{cross_feature_affinity_pooling.2} parent=111 // pred_region
          _
        $region170: #{cross_feature_affinity_pooling.2} parent=111 // pred_fallthru
          _
        // Predicated region
        $region171: #{cross_feature_affinity_pooling.2} parent=111 // pred_check
          %p2287 = pneg %p255
        $region172: #{cross_feature_affinity_pooling.2} parent=111 // pred_check_branch
          %2289 = sbr.rel (%p2287) target = $region174
        $region173: #{cross_feature_affinity_pooling.2} parent=111 // pred_region
          _
        $region174: #{cross_feature_affinity_pooling.2} parent=111 // pred_fallthru
          _
      $region112: #{cross_feature_affinity_pooling.2} parent=5 // pred_fallthru
        _
      %p2290 = scmp.le.s32.totalorder 2, %s15
      // Predicated region
      $region175: #{cross_feature_affinity_pooling.2} parent=5 // pred_check
        %p2291 = pneg %p2290
      $region176: #{cross_feature_affinity_pooling.2} parent=5 // pred_check_branch
        %2293 = sbr.rel (%p2291) target = $region178
      $region177: #{cross_feature_affinity_pooling.2} parent=5 // pred_region
        %s2294 = ssub.s32 %s15, 2
        // Predicated region
        $region179: #{cross_feature_affinity_pooling.2} parent=177 // pred_check
          %p2295 = pneg %p205
        $region180: #{cross_feature_affinity_pooling.2} parent=177 // pred_check_branch
          %2297 = sbr.rel (%p2295) target = $region182
        $region181: #{cross_feature_affinity_pooling.2} parent=177 // pred_region
          %s2298 = sand.u32 %s190, 1
          %s2299 = sand.u32 %s190, 1
          %s2300 = smul.addr %s2299, 64
          %s2301 = scalar_lea.vmem [#allocation8], %s2300
        $region182: #{cross_feature_affinity_pooling.2} parent=177 // pred_fallthru
          _
        // Predicated region
        $region183: #{cross_feature_affinity_pooling.2} parent=177 // pred_check
          %p2302 = pneg %p233
        $region184: #{cross_feature_affinity_pooling.2} parent=177 // pred_check_branch
          %2304 = sbr.rel (%p2302) target = $region186
        $region185: #{cross_feature_affinity_pooling.2} parent=177 // pred_region
          %p2305 = scmp.lt.s32.totalorder %s28, 1
          %s2306 = scalar_select %p2305, %s28, 1
          %p2307 = scmp.lt.s32.totalorder %s29, 4
          %s2308 = scalar_select %p2307, %s29, 4
          %s2309 = smul.addr %s2306, 5
          %s2310 = sadd.s32 %s2308, %s2309
          %s2311 = scalar_lea.vmem %s7, %s2310
        $region186: #{cross_feature_affinity_pooling.2} parent=177 // pred_fallthru
          _
        // Predicated region
        $region187: #{cross_feature_affinity_pooling.2} parent=177 // pred_check
          %p2312 = pneg %p261
        $region188: #{cross_feature_affinity_pooling.2} parent=177 // pred_check_branch
          %2314 = sbr.rel (%p2312) target = $region190
        $region189: #{cross_feature_affinity_pooling.2} parent=177 // pred_region
          %p2315 = scmp.lt.s32.totalorder %s28, 1
          %s2316 = scalar_select %p2315, %s28, 1
          %p2317 = scmp.lt.s32.totalorder %s29, 4
          %s2318 = scalar_select %p2317, %s29, 4
          %s2319 = smul.addr %s2316, 5
          %s2320 = sadd.s32 %s2318, %s2319
          %s2321 = scalar_lea.vmem %s8, %s2320
        $region190: #{cross_feature_affinity_pooling.2} parent=177 // pred_fallthru
          _
      $region178: #{cross_feature_affinity_pooling.2} parent=5 // pred_fallthru
        _
    $region6: #{cross_feature_affinity_pooling.2} parent=1 // loop_footer
      %s19 = sadd.s32 1, %s15
    $region7: #{cross_feature_affinity_pooling.2} parent=1 // loop_footer_branch
      %14 = sbr.rel target = $region3
    $region8: #{cross_feature_affinity_pooling.2} parent=1 // loop_exit
      _

</llo_original>
